<compile_context>
chip_gen: v7x
topology: tpu7x:2x2x1
jax: 0.10.0
libtpu: 0.0.40
codegen_flags: <defaults>
</compile_context>

<pallas_src>
import jax
import jax.numpy as jnp
from jax import lax
from jax.experimental import pallas as pl
from jax.experimental.pallas import tpu as pltpu  # noqa: F401  (kept for TPU-specific tuning hooks)

# ---- mini-BERT config (stand-in for 'kykim/bert-kor-base') ----
VOCAB = 128
MAX_POS = 32
HIDDEN = 32
HEADS = 4
HEAD_DIM = HIDDEN // HEADS          # 8
LAYERS = 2
INTERMEDIATE = 64
N_CLASSES = 3
OUT_PAD = 128                       # lane-dense classifier output; sliced outside
LN_EPS = 1e-12
LANES = 128

# ---- packed bf16 weight blob layout: (W_ROWS, 128), row offsets are 16-aligned ----
W_QKV_OFF = 0                                   # wqkv_t[l]  (3H, H)
W_O_OFF = 3 * HIDDEN                            # wo[l]      (H, H)
W_I_OFF = W_O_OFF + HIDDEN                      # wi[l]      (H, I)
W_OUT_OFF = W_I_OFF + HIDDEN                    # wout[l]    (I, H)
W_LAYER_ROWS = W_OUT_OFF + INTERMEDIATE         # 224 rows per layer
W_POOL_ROW = LAYERS * W_LAYER_ROWS              # pool_w     (H, H)
W_OUT_ROW = W_POOL_ROW + HIDDEN                 # out_w_pad  (H, OUT_PAD)
W_ROWS = W_OUT_ROW + HIDDEN                     # 512

# ---- packed f32 bias / LayerNorm blob layout: (P_ROWS, 128) ----
PB_EMB_G = 0
PB_EMB_B = 1
PB_LAYER = 2                                    # per layer: ln1_g, ln1_b, ln2_g, ln2_b, bo, bi, bout
PB_PER_LAYER = 7
PB_POOL_B = PB_LAYER + LAYERS * PB_PER_LAYER    # 16
PB_OUT_B = PB_POOL_B + 1                        # 17
PB_QKV_B = 24                                   # rows 24..24+3H-1; column l = layer-l fused QKV bias
P_ROWS = PB_QKV_B + 3 * HIDDEN                  # 120


# ---------------------------------------------------------------------------
# In-kernel helpers
# ---------------------------------------------------------------------------
def _bf16_dot(a, b):
    """MXU matmul: bf16 operands, f32 accumulation."""
    return jnp.dot(a.astype(jnp.bfloat16), b.astype(jnp.bfloat16),
                   preferred_element_type=jnp.float32)


def _ln(x, g, b):
    """LayerNorm over the last (hidden) axis, f32 statistics."""
    mean = jnp.mean(x, axis=-1, keepdims=True)
    var = jnp.mean((x - mean) ** 2, axis=-1, keepdims=True)
    return (x - mean) * lax.rsqrt(var + LN_EPS) * g + b


def _gelu(x):
    # TODO(synk): HuggingFace BERT uses exact erf-GELU; tanh approximation used here.
    return 0.5 * x * (1.0 + jnp.tanh(0.7978845608028654 * (x + 0.044715 * x * x * x)))


# ---------------------------------------------------------------------------
# Single fused forward kernel: whole batch, no grid, everything VMEM-resident.
#   x_ref    : (B*S, HIDDEN) f32  -- embedding sum (gather done in the wrapper)
#   mask_ref : (B*S, B*S)    f32  -- block-diagonal + key-padding additive mask
#   w_ref    : (W_ROWS, 128) bf16 -- packed matmul weights
#   p_ref    : (P_ROWS, 128) f32  -- packed biases / LayerNorm params
#   o_ref    : (B*S, OUT_PAD) f32 -- classifier logits for every row (CLS rows used)
# ---------------------------------------------------------------------------
def _fused_forward_kernel(x_ref, mask_ref, w_ref, p_ref, o_ref):
    add_mask = mask_ref[...]                        # loaded once, reused by every head
    x = x_ref[...]

    def prow(row, width):                           # (1, width) f32, static slice
        return p_ref[row:row + 1, 0:width]

    # Embedding LayerNorm (no residual).
    h = _ln(x, prow(PB_EMB_G, HIDDEN), prow(PB_EMB_B, HIDDEN))

    for l in range(LAYERS):                         # static unroll, LAYERS = 2
        wb = l * W_LAYER_ROWS
        pb = PB_LAYER + l * PB_PER_LAYER

        wqkv_t = w_ref[wb + W_QKV_OFF:wb + W_QKV_OFF + 3 * HIDDEN, 0:HIDDEN]        # (3H, H)
        wo = w_ref[wb + W_O_OFF:wb + W_O_OFF + HIDDEN, 0:HIDDEN]                    # (H, H)
        wi = w_ref[wb + W_I_OFF:wb + W_I_OFF + HIDDEN, 0:INTERMEDIATE]              # (H, I)
        wout = w_ref[wb + W_OUT_OFF:wb + W_OUT_OFF + INTERMEDIATE, 0:HIDDEN]        # (I, H)

        # Fused QKV projection directly in feature-major layout:
        #   qkv^T = Wqkv^T @ h^T  ==  dot(wqkv_t, h) contracting the hidden axes (MXU trans_b).
        qkv_t = lax.dot_general(wqkv_t, h.astype(jnp.bfloat16),
                                (((1,), (1,)), ((), ())),
                                preferred_element_type=jnp.float32)                 # (3H, R)
        qkv_t = qkv_t + p_ref[PB_QKV_B:PB_QKV_B + 3 * HIDDEN, l:l + 1]              # bias (3H,1)

        # ---- self-attention: per-head slices are 8-sublane aligned (no lane relayouts)
        ctx_t = []
        for hh in range(HEADS):                     # static unroll
            lo = hh * HEAD_DIM
            q_t = qkv_t[lo:lo + HEAD_DIM, :]                                        # (Dh, R)
            k_t = qkv_t[HIDDEN + lo:HIDDEN + lo + HEAD_DIM, :]
            v_t = qkv_t[2 * HIDDEN + lo:2 * HIDDEN + lo + HEAD_DIM, :]

            # scores = q @ k^T (1/sqrt(Dh) folded into W_q), contract Dh -> (R, R)
            s = lax.dot_general(q_t.astype(jnp.bfloat16), k_t.astype(jnp.bfloat16),
                                (((0,), (0,)), ((), ())),
                                preferred_element_type=jnp.float32)
            s = s + add_mask
            s = s - jnp.max(s, axis=-1, keepdims=True)                              # stable softmax
            p = jnp.exp(s)
            p = p * pl.reciprocal(jnp.sum(p, axis=-1, keepdims=True), approx=True)

            # ctx_h^T = v_h^T @ p^T -> (Dh, R); heads concatenate along sublanes (free)
            ctx_t.append(lax.dot_general(v_t.astype(jnp.bfloat16), p.astype(jnp.bfloat16),
                                         (((1,), (1,)), ((), ())),
                                         preferred_element_type=jnp.float32))
        ctx_t = jnp.concatenate(ctx_t, axis=0)                                      # (H, R)

        # attn = ctx @ W_o, single fused matmul (MXU trans_a)
        attn = lax.dot_general(ctx_t.astype(jnp.bfloat16), wo,
                               (((0,), (0,)), ((), ())),
                               preferred_element_type=jnp.float32)                  # (R, H)
        attn = attn + prow(pb + 4, HIDDEN)
        h = _ln(attn + h, prow(pb + 0, HIDDEN), prow(pb + 1, HIDDEN))

        # ---- feed-forward block ------------------------------------------
        ffn = _gelu(_bf16_dot(h, wi) + prow(pb + 5, INTERMEDIATE))
        ffn = _bf16_dot(ffn, wout) + prow(pb + 6, HIDDEN)
        h = _ln(ffn + h, prow(pb + 2, HIDDEN), prow(pb + 3, HIDDEN))

    # Pooler + classifier head, computed for every row (trivial at this size);
    # the wrapper selects the [CLS] rows.  Dropout(p=0.1) is identity at eval.
    w_pool = w_ref[W_POOL_ROW:W_POOL_ROW + HIDDEN, 0:HIDDEN]
    w_out = w_ref[W_OUT_ROW:W_OUT_ROW + HIDDEN, 0:OUT_PAD]
    pooled = jnp.tanh(_bf16_dot(h, w_pool) + prow(PB_POOL_B, HIDDEN))
    o_ref[...] = _bf16_dot(pooled, w_out) + prow(PB_OUT_B, OUT_PAD)                 # (R, OUT_PAD)


# ---------------------------------------------------------------------------
# Deterministic parameter construction (synthetic, no checkpoint loading)
# ---------------------------------------------------------------------------
def init_params(key):
    def normal(k, shape):
        return 0.02 * jax.random.normal(k, shape, jnp.float32)

    keys = iter(jax.random.split(key, 64))
    scale = 1.0 / float(HEAD_DIM) ** 0.5
    p = {
        "word_emb": normal(next(keys), (VOCAB, HIDDEN)),
        "pos_emb": normal(next(keys), (MAX_POS, HIDDEN)),
        "type_emb": normal(next(keys), (2, HIDDEN)),
        "emb_ln_g": jnp.ones((HIDDEN,), jnp.float32),
        "emb_ln_b": jnp.zeros((HIDDEN,), jnp.float32),
    }
    wqkv_t, wo, wi, wout = [], [], [], []
    for _ in range(LAYERS):
        # Attention scale 1/sqrt(head_dim) folded into W_q (and would be folded into the
        # q-part of bqkv if it were non-zero), so the kernel never multiplies scores.
        wq = normal(next(keys), (HIDDEN, HIDDEN)) * scale
        wk = normal(next(keys), (HIDDEN, HIDDEN))
        wv = normal(next(keys), (HIDDEN, HIDDEN))
        wqkv_t.append(jnp.concatenate([wq, wk, wv], axis=1).T)   # (3H, H) feature-major
        wo.append(normal(next(keys), (HIDDEN, HIDDEN)))
        wi.append(normal(next(keys), (HIDDEN, INTERMEDIATE)))
        wout.append(normal(next(keys), (INTERMEDIATE, HIDDEN)))
    p["wqkv_t"] = jnp.stack(wqkv_t).astype(jnp.bfloat16)         # (L, 3H, H)
    p["bqkv"] = jnp.zeros((LAYERS, 3 * HIDDEN), jnp.float32)
    p["wo"] = jnp.stack(wo).astype(jnp.bfloat16)                 # (L, H, H)
    p["bo"] = jnp.zeros((LAYERS, HIDDEN), jnp.float32)
    p["ln1_g"] = jnp.ones((LAYERS, HIDDEN), jnp.float32)
    p["ln1_b"] = jnp.zeros((LAYERS, HIDDEN), jnp.float32)
    p["wi"] = jnp.stack(wi).astype(jnp.bfloat16)                 # (L, H, I)
    p["bi"] = jnp.zeros((LAYERS, INTERMEDIATE), jnp.float32)
    p["wout"] = jnp.stack(wout).astype(jnp.bfloat16)             # (L, I, H)
    p["bout"] = jnp.zeros((LAYERS, HIDDEN), jnp.float32)
    p["ln2_g"] = jnp.ones((LAYERS, HIDDEN), jnp.float32)
    p["ln2_b"] = jnp.zeros((LAYERS, HIDDEN), jnp.float32)
    p["pool_w"] = normal(next(keys), (HIDDEN, HIDDEN)).astype(jnp.bfloat16)
    p["pool_b"] = jnp.zeros((HIDDEN,), jnp.float32)
    out_w = normal(next(keys), (HIDDEN, N_CLASSES))              # self.out = Linear(hidden, n_classes)
    p["out_w_pad"] = (jnp.zeros((HIDDEN, OUT_PAD), jnp.float32)
                      .at[:, :N_CLASSES].set(out_w).astype(jnp.bfloat16))
    p["out_b_pad"] = jnp.zeros((OUT_PAD,), jnp.float32)
    return p


def pack_params(p):
    """Pack all matmul weights into one bf16 blob and all biases/LN params into one f32 blob."""
    w = jnp.zeros((W_ROWS, LANES), jnp.bfloat16)
    for l in range(LAYERS):
        base = l * W_LAYER_ROWS
        w = w.at[base + W_QKV_OFF:base + W_QKV_OFF + 3 * HIDDEN, :HIDDEN].set(p["wqkv_t"][l])
        w = w.at[base + W_O_OFF:base + W_O_OFF + HIDDEN, :HIDDEN].set(p["wo"][l])
        w = w.at[base + W_I_OFF:base + W_I_OFF + HIDDEN, :INTERMEDIATE].set(p["wi"][l])
        w = w.at[base + W_OUT_OFF:base + W_OUT_OFF + INTERMEDIATE, :HIDDEN].set(p["wout"][l])
    w = w.at[W_POOL_ROW:W_POOL_ROW + HIDDEN, :HIDDEN].set(p["pool_w"])
    w = w.at[W_OUT_ROW:W_OUT_ROW + HIDDEN, :OUT_PAD].set(p["out_w_pad"])

    pb = jnp.zeros((P_ROWS, LANES), jnp.float32)
    pb = pb.at[PB_EMB_G, :HIDDEN].set(p["emb_ln_g"])
    pb = pb.at[PB_EMB_B, :HIDDEN].set(p["emb_ln_b"])
    for l in range(LAYERS):
        r = PB_LAYER + l * PB_PER_LAYER
        pb = pb.at[r + 0, :HIDDEN].set(p["ln1_g"][l])
        pb = pb.at[r + 1, :HIDDEN].set(p["ln1_b"][l])
        pb = pb.at[r + 2, :HIDDEN].set(p["ln2_g"][l])
        pb = pb.at[r + 3, :HIDDEN].set(p["ln2_b"][l])
        pb = pb.at[r + 4, :HIDDEN].set(p["bo"][l])
        pb = pb.at[r + 5, :INTERMEDIATE].set(p["bi"][l])
        pb = pb.at[r + 6, :HIDDEN].set(p["bout"][l])
        pb = pb.at[PB_QKV_B:PB_QKV_B + 3 * HIDDEN, l].set(p["bqkv"][l])   # column l = layer-l bias
    pb = pb.at[PB_POOL_B, :HIDDEN].set(p["pool_b"])
    pb = pb.at[PB_OUT_B, :OUT_PAD].set(p["out_b_pad"])
    return w, pb


# ---------------------------------------------------------------------------
# Forward pass:  _, pooled = bert(ids, mask); out = Linear(drop(pooled))
# ---------------------------------------------------------------------------
def make_forward(params, wblob, pblob):
    @jax.jit
    def forward(input_ids, attention_mask):
        B, S = input_ids.shape
        # TODO(synk): embedding gather could be fused into the kernel via scalar prefetch
        # of input_ids + VMEM-resident tables; kept as plain-JAX glue (tiny) for robustness.
        x_emb = (params["word_emb"][input_ids]
                 + params["pos_emb"][:S][None, :, :]
                 + params["type_emb"][0][None, None, :]).astype(jnp.float32).reshape(B * S, HIDDEN)

        # Block-diagonal + key-padding additive mask over the folded batch:
        # 0 where query & key are in the same batch element and the key is unmasked, else -1e4.
        bid = jnp.repeat(jnp.arange(B), S)
        key_ok = attention_mask.reshape(B * S) > 0
        allowed = (bid[:, None] == bid[None, :]) & key_ok[None, :]
        add_mask = jnp.where(allowed, 0.0, -10000.0).astype(jnp.float32)   # (B*S, B*S)

        logits_all = pl.pallas_call(
            _fused_forward_kernel,
            out_shape=jax.ShapeDtypeStruct((B * S, OUT_PAD), jnp.float32),
        )(x_emb, add_mask, wblob, pblob)

        # [CLS] row of every batch element, first n_classes columns.
        return logits_all.reshape(B, S, OUT_PAD)[:, 0, :N_CLASSES]

    return forward


# ---------------------------------------------------------------------------
# Pure-JAX reference (per-batch attention, same bf16 weights / folded scale)
# ---------------------------------------------------------------------------
def reference_forward(params, input_ids, attention_mask):
    B, S = input_ids.shape

    def bdot(a, b):
        return jnp.dot(a.astype(jnp.bfloat16), b.astype(jnp.bfloat16),
                       preferred_element_type=jnp.float32)

    def ln(x, g, b):
        m = jnp.mean(x, -1, keepdims=True)
        v = jnp.mean((x - m) ** 2, -1, keepdims=True)
        return (x - m) / jnp.sqrt(v + LN_EPS) * g + b

    x = (params["word_emb"][input_ids]
         + params["pos_emb"][:S][None, :, :]
         + params["type_emb"][0][None, None, :]).astype(jnp.float32)
    add_mask = ((1.0 - attention_mask.astype(jnp.float32)) * -10000.0)[:, None, None, :]
    h = ln(x.reshape(B * S, HIDDEN), params["emb_ln_g"][None, :], params["emb_ln_b"][None, :])

    for l in range(LAYERS):
        wqkv = jnp.swapaxes(params["wqkv_t"][l], 0, 1)          # (H, 3H), q cols pre-scaled
        qkv = (bdot(h, wqkv) + params["bqkv"][l][None, :]).reshape(B, S, 3 * HIDDEN)
        q, k, v = qkv[..., :HIDDEN], qkv[..., HIDDEN:2 * HIDDEN], qkv[..., 2 * HIDDEN:]

        def heads(t):
            return t.reshape(B, S, HEADS, HEAD_DIM).transpose(0, 2, 1, 3)

        qh, kh, vh = heads(q), heads(k), heads(v)
        s = jnp.einsum("bhqd,bhkd->bhqk", qh.astype(jnp.bfloat16), kh.astype(jnp.bfloat16),
                       preferred_element_type=jnp.float32) + add_mask     # scale folded into W_q
        p = jax.nn.softmax(s, axis=-1)
        ctx = jnp.einsum("bhqk,bhkd->bhqd", p.astype(jnp.bfloat16), vh.astype(jnp.bfloat16),
                         preferred_element_type=jnp.float32)
        ctx = ctx.transpose(0, 2, 1, 3).reshape(B * S, HIDDEN)
        attn = bdot(ctx, params["wo"][l]) + params["bo"][l][None, :]
        h = ln(attn + h, params["ln1_g"][l][None, :], params["ln1_b"][l][None, :])

        ffn = bdot(h, params["wi"][l]) + params["bi"][l][None, :]
        ffn = 0.5 * ffn * (1.0 + jnp.tanh(0.7978845608028654 * (ffn + 0.044715 * ffn ** 3)))
        ffn = bdot(ffn, params["wout"][l]) + params["bout"][l][None, :]
        h = ln(ffn + h, params["ln2_g"][l][None, :], params["ln2_b"][l][None, :])

    cls_tok = h.reshape(B, S, HIDDEN)[:, 0, :]
    pooled = jnp.tanh(bdot(cls_tok, params["pool_w"]) + params["pool_b"][None, :])
    logits = bdot(pooled, params["out_w_pad"]) + params["out_b_pad"][None, :]
    return logits[:, :N_CLASSES]


if __name__ == "__main__":
    key = jax.random.PRNGKey(0)
    pkey, ikey = jax.random.split(key)
    params = init_params(pkey)
    wblob, pblob = pack_params(params)

    B, S = 2, 8
    input_ids = jax.random.randint(ikey, (B, S), 0, VOCAB, dtype=jnp.int32)
    attention_mask = jnp.ones((B, S), jnp.int32).at[1, 6:].set(0)

    fwd = make_forward(params, wblob, pblob)
    logits = fwd(input_ids, attention_mask)
    jax.block_until_ready(logits)

    assert logits.shape == (B, N_CLASSES), logits.shape
    assert bool(jnp.all(jnp.isfinite(logits)))

    ref = reference_forward(params, input_ids, attention_mask)
    assert bool(jnp.allclose(logits, ref, rtol=5e-2, atol=1e-3)), (logits, ref)

    print("KERNEL_OK")
</pallas_src>

<mosaic_0001>
module attributes {stable_mosaic.version = 11 : i64} {
  func.func @_fused_forward_kernel(%arg0: memref<16x32xf32, #tpu.memory_space<vmem>>, %arg1: memref<16x16xf32, #tpu.memory_space<vmem>>, %arg2: memref<512x128xbf16, #tpu.memory_space<vmem>>, %arg3: memref<120x128xf32, #tpu.memory_space<vmem>>, %arg4: memref<16x128xf32, #tpu.memory_space<vmem>>) attributes {dimension_semantics = [], scalar_prefetch = 0 : i64, scratch_operands = 0 : i64, tpu.core_type = #tpu.core_type<tc>} {
    %c0 = arith.constant 0 : index
    %c0_0 = arith.constant 0 : index
    %0 = vector.load %arg1[%c0, %c0_0] : memref<16x16xf32, #tpu.memory_space<vmem>>, vector<16x16xf32>
    %c0_1 = arith.constant 0 : index
    %c0_2 = arith.constant 0 : index
    %1 = vector.load %arg0[%c0_1, %c0_2] : memref<16x32xf32, #tpu.memory_space<vmem>>, vector<16x32xf32>
    %c0_3 = arith.constant 0 : index
    %c0_4 = arith.constant 0 : index
    %2 = vector.load %arg3[%c0_3, %c0_4] : memref<120x128xf32, #tpu.memory_space<vmem>>, vector<1x32xf32>
    %c1 = arith.constant 1 : index
    %c0_5 = arith.constant 0 : index
    %3 = vector.load %arg3[%c1, %c0_5] : memref<120x128xf32, #tpu.memory_space<vmem>>, vector<1x32xf32>
    %cst = arith.constant dense<0.000000e+00> : vector<16xf32>
    %4 = vector.multi_reduction <add>, %1, %cst [1] : vector<16x32xf32> to vector<16xf32>
    %5 = vector.shape_cast %4 : vector<16xf32> to vector<16x1xf32>
    %cst_6 = arith.constant 3.200000e+01 : f32
    %6 = vector.broadcast %cst_6 : f32 to vector<16x1xf32>
    %7 = arith.divf %5, %6 : vector<16x1xf32>
    %8 = vector.broadcast %7 : vector<16x1xf32> to vector<16x32xf32>
    %9 = arith.subf %1, %8 : vector<16x32xf32>
    %10 = arith.mulf %9, %9 : vector<16x32xf32>
    %cst_7 = arith.constant dense<0.000000e+00> : vector<16xf32>
    %11 = vector.multi_reduction <add>, %10, %cst_7 [1] : vector<16x32xf32> to vector<16xf32>
    %12 = vector.shape_cast %11 : vector<16xf32> to vector<16x1xf32>
    %cst_8 = arith.constant 3.200000e+01 : f32
    %13 = vector.broadcast %cst_8 : f32 to vector<16x1xf32>
    %14 = arith.divf %12, %13 : vector<16x1xf32>
    %15 = vector.broadcast %7 : vector<16x1xf32> to vector<16x32xf32>
    %16 = arith.subf %1, %15 : vector<16x32xf32>
    %cst_9 = arith.constant 9.99999996E-13 : f32
    %17 = vector.broadcast %cst_9 : f32 to vector<16x1xf32>
    %18 = arith.addf %14, %17 : vector<16x1xf32>
    %19 = math.rsqrt %18 : vector<16x1xf32>
    %20 = vector.broadcast %19 : vector<16x1xf32> to vector<16x32xf32>
    %21 = arith.mulf %16, %20 : vector<16x32xf32>
    %22 = vector.broadcast %2 : vector<1x32xf32> to vector<16x32xf32>
    %23 = arith.mulf %21, %22 : vector<16x32xf32>
    %24 = vector.broadcast %3 : vector<1x32xf32> to vector<16x32xf32>
    %25 = arith.addf %23, %24 : vector<16x32xf32>
    %c0_10 = arith.constant 0 : index
    %c0_11 = arith.constant 0 : index
    %26 = vector.load %arg2[%c0_10, %c0_11] : memref<512x128xbf16, #tpu.memory_space<vmem>>, vector<96x32xbf16>
    %c96 = arith.constant 96 : index
    %c0_12 = arith.constant 0 : index
    %27 = vector.load %arg2[%c96, %c0_12] : memref<512x128xbf16, #tpu.memory_space<vmem>>, vector<32x32xbf16>
    %c128 = arith.constant 128 : index
    %c0_13 = arith.constant 0 : index
    %28 = vector.load %arg2[%c128, %c0_13] : memref<512x128xbf16, #tpu.memory_space<vmem>>, vector<32x64xbf16>
    %c160 = arith.constant 160 : index
    %c0_14 = arith.constant 0 : index
    %29 = vector.load %arg2[%c160, %c0_14] : memref<512x128xbf16, #tpu.memory_space<vmem>>, vector<64x32xbf16>
    %30 = arith.truncf %25 : vector<16x32xf32> to vector<16x32xbf16>
    %cst_15 = arith.constant dense<0.000000e+00> : vector<96x16xf32>
    %31 = tpu.matmul %26, %30, %cst_15 {dimension_numbers = #tpu.dot_dimension_numbers<[1], [1], [0], [0], [0, 0, 1, 0], [], []>} : vector<96x32xbf16>, vector<16x32xbf16>, vector<96x16xf32> -> vector<96x16xf32>
    %c24 = arith.constant 24 : index
    %c0_16 = arith.constant 0 : index
    %32 = vector.load %arg3[%c24, %c0_16] : memref<120x128xf32, #tpu.memory_space<vmem>>, vector<96x1xf32>
    %33 = vector.broadcast %32 : vector<96x1xf32> to vector<96x16xf32>
    %34 = arith.addf %31, %33 : vector<96x16xf32>
    %35 = vector.extract_strided_slice %34 {offsets = [0, 0], sizes = [8, 16], strides = [1, 1]} : vector<96x16xf32> to vector<8x16xf32>
    %36 = vector.extract_strided_slice %34 {offsets = [32, 0], sizes = [8, 16], strides = [1, 1]} : vector<96x16xf32> to vector<8x16xf32>
    %37 = vector.extract_strided_slice %34 {offsets = [64, 0], sizes = [8, 16], strides = [1, 1]} : vector<96x16xf32> to vector<8x16xf32>
    %38 = arith.truncf %35 : vector<8x16xf32> to vector<8x16xbf16>
    %39 = arith.truncf %36 : vector<8x16xf32> to vector<8x16xbf16>
    %cst_17 = arith.constant dense<0.000000e+00> : vector<16x16xf32>
    %40 = tpu.matmul %38, %39, %cst_17 {dimension_numbers = #tpu.dot_dimension_numbers<[0], [0], [1], [1], [0, 1, 1, 1], [], []>} : vector<8x16xbf16>, vector<8x16xbf16>, vector<16x16xf32> -> vector<16x16xf32>
    %41 = arith.addf %40, %0 : vector<16x16xf32>
    %cst_18 = arith.constant dense<0xFF800000> : vector<16xf32>
    %42 = vector.multi_reduction <maximumf>, %41, %cst_18 [1] : vector<16x16xf32> to vector<16xf32>
    %43 = vector.shape_cast %42 : vector<16xf32> to vector<16x1xf32>
    %44 = vector.broadcast %43 : vector<16x1xf32> to vector<16x16xf32>
    %45 = arith.subf %41, %44 : vector<16x16xf32>
    %46 = math.exp %45 : vector<16x16xf32>
    %cst_19 = arith.constant dense<0.000000e+00> : vector<16xf32>
    %47 = vector.multi_reduction <add>, %46, %cst_19 [1] : vector<16x16xf32> to vector<16xf32>
    %48 = vector.shape_cast %47 : vector<16xf32> to vector<16x1xf32>
    %49 = tpu.reciprocal %48 {approx = true} : vector<16x1xf32> -> vector<16x1xf32>
    %50 = vector.broadcast %49 : vector<16x1xf32> to vector<16x16xf32>
    %51 = arith.mulf %46, %50 : vector<16x16xf32>
    %52 = arith.truncf %37 : vector<8x16xf32> to vector<8x16xbf16>
    %53 = arith.truncf %51 : vector<16x16xf32> to vector<16x16xbf16>
    %cst_20 = arith.constant dense<0.000000e+00> : vector<8x16xf32>
    %54 = tpu.matmul %52, %53, %cst_20 {dimension_numbers = #tpu.dot_dimension_numbers<[1], [1], [0], [0], [0, 0, 1, 0], [], []>} : vector<8x16xbf16>, vector<16x16xbf16>, vector<8x16xf32> -> vector<8x16xf32>
    %55 = vector.extract_strided_slice %34 {offsets = [8, 0], sizes = [8, 16], strides = [1, 1]} : vector<96x16xf32> to vector<8x16xf32>
    %56 = vector.extract_strided_slice %34 {offsets = [40, 0], sizes = [8, 16], strides = [1, 1]} : vector<96x16xf32> to vector<8x16xf32>
    %57 = vector.extract_strided_slice %34 {offsets = [72, 0], sizes = [8, 16], strides = [1, 1]} : vector<96x16xf32> to vector<8x16xf32>
    %58 = arith.truncf %55 : vector<8x16xf32> to vector<8x16xbf16>
    %59 = arith.truncf %56 : vector<8x16xf32> to vector<8x16xbf16>
    %cst_21 = arith.constant dense<0.000000e+00> : vector<16x16xf32>
    %60 = tpu.matmul %58, %59, %cst_21 {dimension_numbers = #tpu.dot_dimension_numbers<[0], [0], [1], [1], [0, 1, 1, 1], [], []>} : vector<8x16xbf16>, vector<8x16xbf16>, vector<16x16xf32> -> vector<16x16xf32>
    %61 = arith.addf %60, %0 : vector<16x16xf32>
    %cst_22 = arith.constant dense<0xFF800000> : vector<16xf32>
    %62 = vector.multi_reduction <maximumf>, %61, %cst_22 [1] : vector<16x16xf32> to vector<16xf32>
    %63 = vector.shape_cast %62 : vector<16xf32> to vector<16x1xf32>
    %64 = vector.broadcast %63 : vector<16x1xf32> to vector<16x16xf32>
    %65 = arith.subf %61, %64 : vector<16x16xf32>
    %66 = math.exp %65 : vector<16x16xf32>
    %cst_23 = arith.constant dense<0.000000e+00> : vector<16xf32>
    %67 = vector.multi_reduction <add>, %66, %cst_23 [1] : vector<16x16xf32> to vector<16xf32>
    %68 = vector.shape_cast %67 : vector<16xf32> to vector<16x1xf32>
    %69 = tpu.reciprocal %68 {approx = true} : vector<16x1xf32> -> vector<16x1xf32>
    %70 = vector.broadcast %69 : vector<16x1xf32> to vector<16x16xf32>
    %71 = arith.mulf %66, %70 : vector<16x16xf32>
    %72 = arith.truncf %57 : vector<8x16xf32> to vector<8x16xbf16>
    %73 = arith.truncf %71 : vector<16x16xf32> to vector<16x16xbf16>
    %cst_24 = arith.constant dense<0.000000e+00> : vector<8x16xf32>
    %74 = tpu.matmul %72, %73, %cst_24 {dimension_numbers = #tpu.dot_dimension_numbers<[1], [1], [0], [0], [0, 0, 1, 0], [], []>} : vector<8x16xbf16>, vector<16x16xbf16>, vector<8x16xf32> -> vector<8x16xf32>
    %75 = vector.extract_strided_slice %34 {offsets = [16, 0], sizes = [8, 16], strides = [1, 1]} : vector<96x16xf32> to vector<8x16xf32>
    %76 = vector.extract_strided_slice %34 {offsets = [48, 0], sizes = [8, 16], strides = [1, 1]} : vector<96x16xf32> to vector<8x16xf32>
    %77 = vector.extract_strided_slice %34 {offsets = [80, 0], sizes = [8, 16], strides = [1, 1]} : vector<96x16xf32> to vector<8x16xf32>
    %78 = arith.truncf %75 : vector<8x16xf32> to vector<8x16xbf16>
    %79 = arith.truncf %76 : vector<8x16xf32> to vector<8x16xbf16>
    %cst_25 = arith.constant dense<0.000000e+00> : vector<16x16xf32>
    %80 = tpu.matmul %78, %79, %cst_25 {dimension_numbers = #tpu.dot_dimension_numbers<[0], [0], [1], [1], [0, 1, 1, 1], [], []>} : vector<8x16xbf16>, vector<8x16xbf16>, vector<16x16xf32> -> vector<16x16xf32>
    %81 = arith.addf %80, %0 : vector<16x16xf32>
    %cst_26 = arith.constant dense<0xFF800000> : vector<16xf32>
    %82 = vector.multi_reduction <maximumf>, %81, %cst_26 [1] : vector<16x16xf32> to vector<16xf32>
    %83 = vector.shape_cast %82 : vector<16xf32> to vector<16x1xf32>
    %84 = vector.broadcast %83 : vector<16x1xf32> to vector<16x16xf32>
    %85 = arith.subf %81, %84 : vector<16x16xf32>
    %86 = math.exp %85 : vector<16x16xf32>
    %cst_27 = arith.constant dense<0.000000e+00> : vector<16xf32>
    %87 = vector.multi_reduction <add>, %86, %cst_27 [1] : vector<16x16xf32> to vector<16xf32>
    %88 = vector.shape_cast %87 : vector<16xf32> to vector<16x1xf32>
    %89 = tpu.reciprocal %88 {approx = true} : vector<16x1xf32> -> vector<16x1xf32>
    %90 = vector.broadcast %89 : vector<16x1xf32> to vector<16x16xf32>
    %91 = arith.mulf %86, %90 : vector<16x16xf32>
    %92 = arith.truncf %77 : vector<8x16xf32> to vector<8x16xbf16>
    %93 = arith.truncf %91 : vector<16x16xf32> to vector<16x16xbf16>
    %cst_28 = arith.constant dense<0.000000e+00> : vector<8x16xf32>
    %94 = tpu.matmul %92, %93, %cst_28 {dimension_numbers = #tpu.dot_dimension_numbers<[1], [1], [0], [0], [0, 0, 1, 0], [], []>} : vector<8x16xbf16>, vector<16x16xbf16>, vector<8x16xf32> -> vector<8x16xf32>
    %95 = vector.extract_strided_slice %34 {offsets = [24, 0], sizes = [8, 16], strides = [1, 1]} : vector<96x16xf32> to vector<8x16xf32>
    %96 = vector.extract_strided_slice %34 {offsets = [56, 0], sizes = [8, 16], strides = [1, 1]} : vector<96x16xf32> to vector<8x16xf32>
    %97 = vector.extract_strided_slice %34 {offsets = [88, 0], sizes = [8, 16], strides = [1, 1]} : vector<96x16xf32> to vector<8x16xf32>
    %98 = arith.truncf %95 : vector<8x16xf32> to vector<8x16xbf16>
    %99 = arith.truncf %96 : vector<8x16xf32> to vector<8x16xbf16>
    %cst_29 = arith.constant dense<0.000000e+00> : vector<16x16xf32>
    %100 = tpu.matmul %98, %99, %cst_29 {dimension_numbers = #tpu.dot_dimension_numbers<[0], [0], [1], [1], [0, 1, 1, 1], [], []>} : vector<8x16xbf16>, vector<8x16xbf16>, vector<16x16xf32> -> vector<16x16xf32>
    %101 = arith.addf %100, %0 : vector<16x16xf32>
    %cst_30 = arith.constant dense<0xFF800000> : vector<16xf32>
    %102 = vector.multi_reduction <maximumf>, %101, %cst_30 [1] : vector<16x16xf32> to vector<16xf32>
    %103 = vector.shape_cast %102 : vector<16xf32> to vector<16x1xf32>
    %104 = vector.broadcast %103 : vector<16x1xf32> to vector<16x16xf32>
    %105 = arith.subf %101, %104 : vector<16x16xf32>
    %106 = math.exp %105 : vector<16x16xf32>
    %cst_31 = arith.constant dense<0.000000e+00> : vector<16xf32>
    %107 = vector.multi_reduction <add>, %106, %cst_31 [1] : vector<16x16xf32> to vector<16xf32>
    %108 = vector.shape_cast %107 : vector<16xf32> to vector<16x1xf32>
    %109 = tpu.reciprocal %108 {approx = true} : vector<16x1xf32> -> vector<16x1xf32>
    %110 = vector.broadcast %109 : vector<16x1xf32> to vector<16x16xf32>
    %111 = arith.mulf %106, %110 : vector<16x16xf32>
    %112 = arith.truncf %97 : vector<8x16xf32> to vector<8x16xbf16>
    %113 = arith.truncf %111 : vector<16x16xf32> to vector<16x16xbf16>
    %cst_32 = arith.constant dense<0.000000e+00> : vector<8x16xf32>
    %114 = tpu.matmul %112, %113, %cst_32 {dimension_numbers = #tpu.dot_dimension_numbers<[1], [1], [0], [0], [0, 0, 1, 0], [], []>} : vector<8x16xbf16>, vector<16x16xbf16>, vector<8x16xf32> -> vector<8x16xf32>
    %115 = tpu.concatenate %54, %74, %94, %114 in 0 : vector<8x16xf32>, vector<8x16xf32>, vector<8x16xf32>, vector<8x16xf32> -> vector<32x16xf32>
    %116 = arith.truncf %115 : vector<32x16xf32> to vector<32x16xbf16>
    %cst_33 = arith.constant dense<0.000000e+00> : vector<16x32xf32>
    %117 = tpu.matmul %116, %27, %cst_33 {dimension_numbers = #tpu.dot_dimension_numbers<[0], [0], [1], [1], [0, 1, 1, 1], [], []>} : vector<32x16xbf16>, vector<32x32xbf16>, vector<16x32xf32> -> vector<16x32xf32>
    %c6 = arith.constant 6 : index
    %c0_34 = arith.constant 0 : index
    %118 = vector.load %arg3[%c6, %c0_34] : memref<120x128xf32, #tpu.memory_space<vmem>>, vector<1x32xf32>
    %119 = vector.broadcast %118 : vector<1x32xf32> to vector<16x32xf32>
    %120 = arith.addf %117, %119 : vector<16x32xf32>
    %121 = arith.addf %120, %25 : vector<16x32xf32>
    %c2 = arith.constant 2 : index
    %c0_35 = arith.constant 0 : index
    %122 = vector.load %arg3[%c2, %c0_35] : memref<120x128xf32, #tpu.memory_space<vmem>>, vector<1x32xf32>
    %c3 = arith.constant 3 : index
    %c0_36 = arith.constant 0 : index
    %123 = vector.load %arg3[%c3, %c0_36] : memref<120x128xf32, #tpu.memory_space<vmem>>, vector<1x32xf32>
    %cst_37 = arith.constant dense<0.000000e+00> : vector<16xf32>
    %124 = vector.multi_reduction <add>, %121, %cst_37 [1] : vector<16x32xf32> to vector<16xf32>
    %125 = vector.shape_cast %124 : vector<16xf32> to vector<16x1xf32>
    %cst_38 = arith.constant 3.200000e+01 : f32
    %126 = vector.broadcast %cst_38 : f32 to vector<16x1xf32>
    %127 = arith.divf %125, %126 : vector<16x1xf32>
    %128 = vector.broadcast %127 : vector<16x1xf32> to vector<16x32xf32>
    %129 = arith.subf %121, %128 : vector<16x32xf32>
    %130 = arith.mulf %129, %129 : vector<16x32xf32>
    %cst_39 = arith.constant dense<0.000000e+00> : vector<16xf32>
    %131 = vector.multi_reduction <add>, %130, %cst_39 [1] : vector<16x32xf32> to vector<16xf32>
    %132 = vector.shape_cast %131 : vector<16xf32> to vector<16x1xf32>
    %cst_40 = arith.constant 3.200000e+01 : f32
    %133 = vector.broadcast %cst_40 : f32 to vector<16x1xf32>
    %134 = arith.divf %132, %133 : vector<16x1xf32>
    %135 = vector.broadcast %127 : vector<16x1xf32> to vector<16x32xf32>
    %136 = arith.subf %121, %135 : vector<16x32xf32>
    %cst_41 = arith.constant 9.99999996E-13 : f32
    %137 = vector.broadcast %cst_41 : f32 to vector<16x1xf32>
    %138 = arith.addf %134, %137 : vector<16x1xf32>
    %139 = math.rsqrt %138 : vector<16x1xf32>
    %140 = vector.broadcast %139 : vector<16x1xf32> to vector<16x32xf32>
    %141 = arith.mulf %136, %140 : vector<16x32xf32>
    %142 = vector.broadcast %122 : vector<1x32xf32> to vector<16x32xf32>
    %143 = arith.mulf %141, %142 : vector<16x32xf32>
    %144 = vector.broadcast %123 : vector<1x32xf32> to vector<16x32xf32>
    %145 = arith.addf %143, %144 : vector<16x32xf32>
    %146 = arith.truncf %145 : vector<16x32xf32> to vector<16x32xbf16>
    %cst_42 = arith.constant dense<0.000000e+00> : vector<16x64xf32>
    %147 = tpu.matmul %146, %28, %cst_42 {dimension_numbers = #tpu.dot_dimension_numbers<[1], [0], [0], [1], [0, 0, 1, 1], [], []>} : vector<16x32xbf16>, vector<32x64xbf16>, vector<16x64xf32> -> vector<16x64xf32>
    %c7 = arith.constant 7 : index
    %c0_43 = arith.constant 0 : index
    %148 = vector.load %arg3[%c7, %c0_43] : memref<120x128xf32, #tpu.memory_space<vmem>>, vector<1x64xf32>
    %149 = vector.broadcast %148 : vector<1x64xf32> to vector<16x64xf32>
    %150 = arith.addf %147, %149 : vector<16x64xf32>
    %cst_44 = arith.constant 5.000000e-01 : f32
    %151 = vector.broadcast %cst_44 : f32 to vector<16x64xf32>
    %152 = arith.mulf %151, %150 : vector<16x64xf32>
    %cst_45 = arith.constant 4.471500e-02 : f32
    %153 = vector.broadcast %cst_45 : f32 to vector<16x64xf32>
    %154 = arith.mulf %153, %150 : vector<16x64xf32>
    %155 = arith.mulf %154, %150 : vector<16x64xf32>
    %156 = arith.mulf %155, %150 : vector<16x64xf32>
    %157 = arith.addf %150, %156 : vector<16x64xf32>
    %cst_46 = arith.constant 0.797884583 : f32
    %158 = vector.broadcast %cst_46 : f32 to vector<16x64xf32>
    %159 = arith.mulf %158, %157 : vector<16x64xf32>
    %160 = math.tanh %159 : vector<16x64xf32>
    %cst_47 = arith.constant 1.000000e+00 : f32
    %161 = vector.broadcast %cst_47 : f32 to vector<16x64xf32>
    %162 = arith.addf %161, %160 : vector<16x64xf32>
    %163 = arith.mulf %152, %162 : vector<16x64xf32>
    %164 = arith.truncf %163 : vector<16x64xf32> to vector<16x64xbf16>
    %cst_48 = arith.constant dense<0.000000e+00> : vector<16x32xf32>
    %165 = tpu.matmul %164, %29, %cst_48 {dimension_numbers = #tpu.dot_dimension_numbers<[1], [0], [0], [1], [0, 0, 1, 1], [], []>} : vector<16x64xbf16>, vector<64x32xbf16>, vector<16x32xf32> -> vector<16x32xf32>
    %c8 = arith.constant 8 : index
    %c0_49 = arith.constant 0 : index
    %166 = vector.load %arg3[%c8, %c0_49] : memref<120x128xf32, #tpu.memory_space<vmem>>, vector<1x32xf32>
    %167 = vector.broadcast %166 : vector<1x32xf32> to vector<16x32xf32>
    %168 = arith.addf %165, %167 : vector<16x32xf32>
    %169 = arith.addf %168, %145 : vector<16x32xf32>
    %c4 = arith.constant 4 : index
    %c0_50 = arith.constant 0 : index
    %170 = vector.load %arg3[%c4, %c0_50] : memref<120x128xf32, #tpu.memory_space<vmem>>, vector<1x32xf32>
    %c5 = arith.constant 5 : index
    %c0_51 = arith.constant 0 : index
    %171 = vector.load %arg3[%c5, %c0_51] : memref<120x128xf32, #tpu.memory_space<vmem>>, vector<1x32xf32>
    %cst_52 = arith.constant dense<0.000000e+00> : vector<16xf32>
    %172 = vector.multi_reduction <add>, %169, %cst_52 [1] : vector<16x32xf32> to vector<16xf32>
    %173 = vector.shape_cast %172 : vector<16xf32> to vector<16x1xf32>
    %cst_53 = arith.constant 3.200000e+01 : f32
    %174 = vector.broadcast %cst_53 : f32 to vector<16x1xf32>
    %175 = arith.divf %173, %174 : vector<16x1xf32>
    %176 = vector.broadcast %175 : vector<16x1xf32> to vector<16x32xf32>
    %177 = arith.subf %169, %176 : vector<16x32xf32>
    %178 = arith.mulf %177, %177 : vector<16x32xf32>
    %cst_54 = arith.constant dense<0.000000e+00> : vector<16xf32>
    %179 = vector.multi_reduction <add>, %178, %cst_54 [1] : vector<16x32xf32> to vector<16xf32>
    %180 = vector.shape_cast %179 : vector<16xf32> to vector<16x1xf32>
    %cst_55 = arith.constant 3.200000e+01 : f32
    %181 = vector.broadcast %cst_55 : f32 to vector<16x1xf32>
    %182 = arith.divf %180, %181 : vector<16x1xf32>
    %183 = vector.broadcast %175 : vector<16x1xf32> to vector<16x32xf32>
    %184 = arith.subf %169, %183 : vector<16x32xf32>
    %cst_56 = arith.constant 9.99999996E-13 : f32
    %185 = vector.broadcast %cst_56 : f32 to vector<16x1xf32>
    %186 = arith.addf %182, %185 : vector<16x1xf32>
    %187 = math.rsqrt %186 : vector<16x1xf32>
    %188 = vector.broadcast %187 : vector<16x1xf32> to vector<16x32xf32>
    %189 = arith.mulf %184, %188 : vector<16x32xf32>
    %190 = vector.broadcast %170 : vector<1x32xf32> to vector<16x32xf32>
    %191 = arith.mulf %189, %190 : vector<16x32xf32>
    %192 = vector.broadcast %171 : vector<1x32xf32> to vector<16x32xf32>
    %193 = arith.addf %191, %192 : vector<16x32xf32>
    %c224 = arith.constant 224 : index
    %c0_57 = arith.constant 0 : index
    %194 = vector.load %arg2[%c224, %c0_57] : memref<512x128xbf16, #tpu.memory_space<vmem>>, vector<96x32xbf16>
    %c320 = arith.constant 320 : index
    %c0_58 = arith.constant 0 : index
    %195 = vector.load %arg2[%c320, %c0_58] : memref<512x128xbf16, #tpu.memory_space<vmem>>, vector<32x32xbf16>
    %c352 = arith.constant 352 : index
    %c0_59 = arith.constant 0 : index
    %196 = vector.load %arg2[%c352, %c0_59] : memref<512x128xbf16, #tpu.memory_space<vmem>>, vector<32x64xbf16>
    %c384 = arith.constant 384 : index
    %c0_60 = arith.constant 0 : index
    %197 = vector.load %arg2[%c384, %c0_60] : memref<512x128xbf16, #tpu.memory_space<vmem>>, vector<64x32xbf16>
    %198 = arith.truncf %193 : vector<16x32xf32> to vector<16x32xbf16>
    %cst_61 = arith.constant dense<0.000000e+00> : vector<96x16xf32>
    %199 = tpu.matmul %194, %198, %cst_61 {dimension_numbers = #tpu.dot_dimension_numbers<[1], [1], [0], [0], [0, 0, 1, 0], [], []>} : vector<96x32xbf16>, vector<16x32xbf16>, vector<96x16xf32> -> vector<96x16xf32>
    %c24_62 = arith.constant 24 : index
    %c1_63 = arith.constant 1 : index
    %200 = vector.load %arg3[%c24_62, %c1_63] : memref<120x128xf32, #tpu.memory_space<vmem>>, vector<96x1xf32>
    %201 = vector.broadcast %200 : vector<96x1xf32> to vector<96x16xf32>
    %202 = arith.addf %199, %201 : vector<96x16xf32>
    %203 = vector.extract_strided_slice %202 {offsets = [0, 0], sizes = [8, 16], strides = [1, 1]} : vector<96x16xf32> to vector<8x16xf32>
    %204 = vector.extract_strided_slice %202 {offsets = [32, 0], sizes = [8, 16], strides = [1, 1]} : vector<96x16xf32> to vector<8x16xf32>
    %205 = vector.extract_strided_slice %202 {offsets = [64, 0], sizes = [8, 16], strides = [1, 1]} : vector<96x16xf32> to vector<8x16xf32>
    %206 = arith.truncf %203 : vector<8x16xf32> to vector<8x16xbf16>
    %207 = arith.truncf %204 : vector<8x16xf32> to vector<8x16xbf16>
    %cst_64 = arith.constant dense<0.000000e+00> : vector<16x16xf32>
    %208 = tpu.matmul %206, %207, %cst_64 {dimension_numbers = #tpu.dot_dimension_numbers<[0], [0], [1], [1], [0, 1, 1, 1], [], []>} : vector<8x16xbf16>, vector<8x16xbf16>, vector<16x16xf32> -> vector<16x16xf32>
    %209 = arith.addf %208, %0 : vector<16x16xf32>
    %cst_65 = arith.constant dense<0xFF800000> : vector<16xf32>
    %210 = vector.multi_reduction <maximumf>, %209, %cst_65 [1] : vector<16x16xf32> to vector<16xf32>
    %211 = vector.shape_cast %210 : vector<16xf32> to vector<16x1xf32>
    %212 = vector.broadcast %211 : vector<16x1xf32> to vector<16x16xf32>
    %213 = arith.subf %209, %212 : vector<16x16xf32>
    %214 = math.exp %213 : vector<16x16xf32>
    %cst_66 = arith.constant dense<0.000000e+00> : vector<16xf32>
    %215 = vector.multi_reduction <add>, %214, %cst_66 [1] : vector<16x16xf32> to vector<16xf32>
    %216 = vector.shape_cast %215 : vector<16xf32> to vector<16x1xf32>
    %217 = tpu.reciprocal %216 {approx = true} : vector<16x1xf32> -> vector<16x1xf32>
    %218 = vector.broadcast %217 : vector<16x1xf32> to vector<16x16xf32>
    %219 = arith.mulf %214, %218 : vector<16x16xf32>
    %220 = arith.truncf %205 : vector<8x16xf32> to vector<8x16xbf16>
    %221 = arith.truncf %219 : vector<16x16xf32> to vector<16x16xbf16>
    %cst_67 = arith.constant dense<0.000000e+00> : vector<8x16xf32>
    %222 = tpu.matmul %220, %221, %cst_67 {dimension_numbers = #tpu.dot_dimension_numbers<[1], [1], [0], [0], [0, 0, 1, 0], [], []>} : vector<8x16xbf16>, vector<16x16xbf16>, vector<8x16xf32> -> vector<8x16xf32>
    %223 = vector.extract_strided_slice %202 {offsets = [8, 0], sizes = [8, 16], strides = [1, 1]} : vector<96x16xf32> to vector<8x16xf32>
    %224 = vector.extract_strided_slice %202 {offsets = [40, 0], sizes = [8, 16], strides = [1, 1]} : vector<96x16xf32> to vector<8x16xf32>
    %225 = vector.extract_strided_slice %202 {offsets = [72, 0], sizes = [8, 16], strides = [1, 1]} : vector<96x16xf32> to vector<8x16xf32>
    %226 = arith.truncf %223 : vector<8x16xf32> to vector<8x16xbf16>
    %227 = arith.truncf %224 : vector<8x16xf32> to vector<8x16xbf16>
    %cst_68 = arith.constant dense<0.000000e+00> : vector<16x16xf32>
    %228 = tpu.matmul %226, %227, %cst_68 {dimension_numbers = #tpu.dot_dimension_numbers<[0], [0], [1], [1], [0, 1, 1, 1], [], []>} : vector<8x16xbf16>, vector<8x16xbf16>, vector<16x16xf32> -> vector<16x16xf32>
    %229 = arith.addf %228, %0 : vector<16x16xf32>
    %cst_69 = arith.constant dense<0xFF800000> : vector<16xf32>
    %230 = vector.multi_reduction <maximumf>, %229, %cst_69 [1] : vector<16x16xf32> to vector<16xf32>
    %231 = vector.shape_cast %230 : vector<16xf32> to vector<16x1xf32>
    %232 = vector.broadcast %231 : vector<16x1xf32> to vector<16x16xf32>
    %233 = arith.subf %229, %232 : vector<16x16xf32>
    %234 = math.exp %233 : vector<16x16xf32>
    %cst_70 = arith.constant dense<0.000000e+00> : vector<16xf32>
    %235 = vector.multi_reduction <add>, %234, %cst_70 [1] : vector<16x16xf32> to vector<16xf32>
    %236 = vector.shape_cast %235 : vector<16xf32> to vector<16x1xf32>
    %237 = tpu.reciprocal %236 {approx = true} : vector<16x1xf32> -> vector<16x1xf32>
    %238 = vector.broadcast %237 : vector<16x1xf32> to vector<16x16xf32>
    %239 = arith.mulf %234, %238 : vector<16x16xf32>
    %240 = arith.truncf %225 : vector<8x16xf32> to vector<8x16xbf16>
    %241 = arith.truncf %239 : vector<16x16xf32> to vector<16x16xbf16>
    %cst_71 = arith.constant dense<0.000000e+00> : vector<8x16xf32>
    %242 = tpu.matmul %240, %241, %cst_71 {dimension_numbers = #tpu.dot_dimension_numbers<[1], [1], [0], [0], [0, 0, 1, 0], [], []>} : vector<8x16xbf16>, vector<16x16xbf16>, vector<8x16xf32> -> vector<8x16xf32>
    %243 = vector.extract_strided_slice %202 {offsets = [16, 0], sizes = [8, 16], strides = [1, 1]} : vector<96x16xf32> to vector<8x16xf32>
    %244 = vector.extract_strided_slice %202 {offsets = [48, 0], sizes = [8, 16], strides = [1, 1]} : vector<96x16xf32> to vector<8x16xf32>
    %245 = vector.extract_strided_slice %202 {offsets = [80, 0], sizes = [8, 16], strides = [1, 1]} : vector<96x16xf32> to vector<8x16xf32>
    %246 = arith.truncf %243 : vector<8x16xf32> to vector<8x16xbf16>
    %247 = arith.truncf %244 : vector<8x16xf32> to vector<8x16xbf16>
    %cst_72 = arith.constant dense<0.000000e+00> : vector<16x16xf32>
    %248 = tpu.matmul %246, %247, %cst_72 {dimension_numbers = #tpu.dot_dimension_numbers<[0], [0], [1], [1], [0, 1, 1, 1], [], []>} : vector<8x16xbf16>, vector<8x16xbf16>, vector<16x16xf32> -> vector<16x16xf32>
    %249 = arith.addf %248, %0 : vector<16x16xf32>
    %cst_73 = arith.constant dense<0xFF800000> : vector<16xf32>
    %250 = vector.multi_reduction <maximumf>, %249, %cst_73 [1] : vector<16x16xf32> to vector<16xf32>
    %251 = vector.shape_cast %250 : vector<16xf32> to vector<16x1xf32>
    %252 = vector.broadcast %251 : vector<16x1xf32> to vector<16x16xf32>
    %253 = arith.subf %249, %252 : vector<16x16xf32>
    %254 = math.exp %253 : vector<16x16xf32>
    %cst_74 = arith.constant dense<0.000000e+00> : vector<16xf32>
    %255 = vector.multi_reduction <add>, %254, %cst_74 [1] : vector<16x16xf32> to vector<16xf32>
    %256 = vector.shape_cast %255 : vector<16xf32> to vector<16x1xf32>
    %257 = tpu.reciprocal %256 {approx = true} : vector<16x1xf32> -> vector<16x1xf32>
    %258 = vector.broadcast %257 : vector<16x1xf32> to vector<16x16xf32>
    %259 = arith.mulf %254, %258 : vector<16x16xf32>
    %260 = arith.truncf %245 : vector<8x16xf32> to vector<8x16xbf16>
    %261 = arith.truncf %259 : vector<16x16xf32> to vector<16x16xbf16>
    %cst_75 = arith.constant dense<0.000000e+00> : vector<8x16xf32>
    %262 = tpu.matmul %260, %261, %cst_75 {dimension_numbers = #tpu.dot_dimension_numbers<[1], [1], [0], [0], [0, 0, 1, 0], [], []>} : vector<8x16xbf16>, vector<16x16xbf16>, vector<8x16xf32> -> vector<8x16xf32>
    %263 = vector.extract_strided_slice %202 {offsets = [24, 0], sizes = [8, 16], strides = [1, 1]} : vector<96x16xf32> to vector<8x16xf32>
    %264 = vector.extract_strided_slice %202 {offsets = [56, 0], sizes = [8, 16], strides = [1, 1]} : vector<96x16xf32> to vector<8x16xf32>
    %265 = vector.extract_strided_slice %202 {offsets = [88, 0], sizes = [8, 16], strides = [1, 1]} : vector<96x16xf32> to vector<8x16xf32>
    %266 = arith.truncf %263 : vector<8x16xf32> to vector<8x16xbf16>
    %267 = arith.truncf %264 : vector<8x16xf32> to vector<8x16xbf16>
    %cst_76 = arith.constant dense<0.000000e+00> : vector<16x16xf32>
    %268 = tpu.matmul %266, %267, %cst_76 {dimension_numbers = #tpu.dot_dimension_numbers<[0], [0], [1], [1], [0, 1, 1, 1], [], []>} : vector<8x16xbf16>, vector<8x16xbf16>, vector<16x16xf32> -> vector<16x16xf32>
    %269 = arith.addf %268, %0 : vector<16x16xf32>
    %cst_77 = arith.constant dense<0xFF800000> : vector<16xf32>
    %270 = vector.multi_reduction <maximumf>, %269, %cst_77 [1] : vector<16x16xf32> to vector<16xf32>
    %271 = vector.shape_cast %270 : vector<16xf32> to vector<16x1xf32>
    %272 = vector.broadcast %271 : vector<16x1xf32> to vector<16x16xf32>
    %273 = arith.subf %269, %272 : vector<16x16xf32>
    %274 = math.exp %273 : vector<16x16xf32>
    %cst_78 = arith.constant dense<0.000000e+00> : vector<16xf32>
    %275 = vector.multi_reduction <add>, %274, %cst_78 [1] : vector<16x16xf32> to vector<16xf32>
    %276 = vector.shape_cast %275 : vector<16xf32> to vector<16x1xf32>
    %277 = tpu.reciprocal %276 {approx = true} : vector<16x1xf32> -> vector<16x1xf32>
    %278 = vector.broadcast %277 : vector<16x1xf32> to vector<16x16xf32>
    %279 = arith.mulf %274, %278 : vector<16x16xf32>
    %280 = arith.truncf %265 : vector<8x16xf32> to vector<8x16xbf16>
    %281 = arith.truncf %279 : vector<16x16xf32> to vector<16x16xbf16>
    %cst_79 = arith.constant dense<0.000000e+00> : vector<8x16xf32>
    %282 = tpu.matmul %280, %281, %cst_79 {dimension_numbers = #tpu.dot_dimension_numbers<[1], [1], [0], [0], [0, 0, 1, 0], [], []>} : vector<8x16xbf16>, vector<16x16xbf16>, vector<8x16xf32> -> vector<8x16xf32>
    %283 = tpu.concatenate %222, %242, %262, %282 in 0 : vector<8x16xf32>, vector<8x16xf32>, vector<8x16xf32>, vector<8x16xf32> -> vector<32x16xf32>
    %284 = arith.truncf %283 : vector<32x16xf32> to vector<32x16xbf16>
    %cst_80 = arith.constant dense<0.000000e+00> : vector<16x32xf32>
    %285 = tpu.matmul %284, %195, %cst_80 {dimension_numbers = #tpu.dot_dimension_numbers<[0], [0], [1], [1], [0, 1, 1, 1], [], []>} : vector<32x16xbf16>, vector<32x32xbf16>, vector<16x32xf32> -> vector<16x32xf32>
    %c13 = arith.constant 13 : index
    %c0_81 = arith.constant 0 : index
    %286 = vector.load %arg3[%c13, %c0_81] : memref<120x128xf32, #tpu.memory_space<vmem>>, vector<1x32xf32>
    %287 = vector.broadcast %286 : vector<1x32xf32> to vector<16x32xf32>
    %288 = arith.addf %285, %287 : vector<16x32xf32>
    %289 = arith.addf %288, %193 : vector<16x32xf32>
    %c9 = arith.constant 9 : index
    %c0_82 = arith.constant 0 : index
    %290 = vector.load %arg3[%c9, %c0_82] : memref<120x128xf32, #tpu.memory_space<vmem>>, vector<1x32xf32>
    %c10 = arith.constant 10 : index
    %c0_83 = arith.constant 0 : index
    %291 = vector.load %arg3[%c10, %c0_83] : memref<120x128xf32, #tpu.memory_space<vmem>>, vector<1x32xf32>
    %cst_84 = arith.constant dense<0.000000e+00> : vector<16xf32>
    %292 = vector.multi_reduction <add>, %289, %cst_84 [1] : vector<16x32xf32> to vector<16xf32>
    %293 = vector.shape_cast %292 : vector<16xf32> to vector<16x1xf32>
    %cst_85 = arith.constant 3.200000e+01 : f32
    %294 = vector.broadcast %cst_85 : f32 to vector<16x1xf32>
    %295 = arith.divf %293, %294 : vector<16x1xf32>
    %296 = vector.broadcast %295 : vector<16x1xf32> to vector<16x32xf32>
    %297 = arith.subf %289, %296 : vector<16x32xf32>
    %298 = arith.mulf %297, %297 : vector<16x32xf32>
    %cst_86 = arith.constant dense<0.000000e+00> : vector<16xf32>
    %299 = vector.multi_reduction <add>, %298, %cst_86 [1] : vector<16x32xf32> to vector<16xf32>
    %300 = vector.shape_cast %299 : vector<16xf32> to vector<16x1xf32>
    %cst_87 = arith.constant 3.200000e+01 : f32
    %301 = vector.broadcast %cst_87 : f32 to vector<16x1xf32>
    %302 = arith.divf %300, %301 : vector<16x1xf32>
    %303 = vector.broadcast %295 : vector<16x1xf32> to vector<16x32xf32>
    %304 = arith.subf %289, %303 : vector<16x32xf32>
    %cst_88 = arith.constant 9.99999996E-13 : f32
    %305 = vector.broadcast %cst_88 : f32 to vector<16x1xf32>
    %306 = arith.addf %302, %305 : vector<16x1xf32>
    %307 = math.rsqrt %306 : vector<16x1xf32>
    %308 = vector.broadcast %307 : vector<16x1xf32> to vector<16x32xf32>
    %309 = arith.mulf %304, %308 : vector<16x32xf32>
    %310 = vector.broadcast %290 : vector<1x32xf32> to vector<16x32xf32>
    %311 = arith.mulf %309, %310 : vector<16x32xf32>
    %312 = vector.broadcast %291 : vector<1x32xf32> to vector<16x32xf32>
    %313 = arith.addf %311, %312 : vector<16x32xf32>
    %314 = arith.truncf %313 : vector<16x32xf32> to vector<16x32xbf16>
    %cst_89 = arith.constant dense<0.000000e+00> : vector<16x64xf32>
    %315 = tpu.matmul %314, %196, %cst_89 {dimension_numbers = #tpu.dot_dimension_numbers<[1], [0], [0], [1], [0, 0, 1, 1], [], []>} : vector<16x32xbf16>, vector<32x64xbf16>, vector<16x64xf32> -> vector<16x64xf32>
    %c14 = arith.constant 14 : index
    %c0_90 = arith.constant 0 : index
    %316 = vector.load %arg3[%c14, %c0_90] : memref<120x128xf32, #tpu.memory_space<vmem>>, vector<1x64xf32>
    %317 = vector.broadcast %316 : vector<1x64xf32> to vector<16x64xf32>
    %318 = arith.addf %315, %317 : vector<16x64xf32>
    %cst_91 = arith.constant 5.000000e-01 : f32
    %319 = vector.broadcast %cst_91 : f32 to vector<16x64xf32>
    %320 = arith.mulf %319, %318 : vector<16x64xf32>
    %cst_92 = arith.constant 4.471500e-02 : f32
    %321 = vector.broadcast %cst_92 : f32 to vector<16x64xf32>
    %322 = arith.mulf %321, %318 : vector<16x64xf32>
    %323 = arith.mulf %322, %318 : vector<16x64xf32>
    %324 = arith.mulf %323, %318 : vector<16x64xf32>
    %325 = arith.addf %318, %324 : vector<16x64xf32>
    %cst_93 = arith.constant 0.797884583 : f32
    %326 = vector.broadcast %cst_93 : f32 to vector<16x64xf32>
    %327 = arith.mulf %326, %325 : vector<16x64xf32>
    %328 = math.tanh %327 : vector<16x64xf32>
    %cst_94 = arith.constant 1.000000e+00 : f32
    %329 = vector.broadcast %cst_94 : f32 to vector<16x64xf32>
    %330 = arith.addf %329, %328 : vector<16x64xf32>
    %331 = arith.mulf %320, %330 : vector<16x64xf32>
    %332 = arith.truncf %331 : vector<16x64xf32> to vector<16x64xbf16>
    %cst_95 = arith.constant dense<0.000000e+00> : vector<16x32xf32>
    %333 = tpu.matmul %332, %197, %cst_95 {dimension_numbers = #tpu.dot_dimension_numbers<[1], [0], [0], [1], [0, 0, 1, 1], [], []>} : vector<16x64xbf16>, vector<64x32xbf16>, vector<16x32xf32> -> vector<16x32xf32>
    %c15 = arith.constant 15 : index
    %c0_96 = arith.constant 0 : index
    %334 = vector.load %arg3[%c15, %c0_96] : memref<120x128xf32, #tpu.memory_space<vmem>>, vector<1x32xf32>
    %335 = vector.broadcast %334 : vector<1x32xf32> to vector<16x32xf32>
    %336 = arith.addf %333, %335 : vector<16x32xf32>
    %337 = arith.addf %336, %313 : vector<16x32xf32>
    %c11 = arith.constant 11 : index
    %c0_97 = arith.constant 0 : index
    %338 = vector.load %arg3[%c11, %c0_97] : memref<120x128xf32, #tpu.memory_space<vmem>>, vector<1x32xf32>
    %c12 = arith.constant 12 : index
    %c0_98 = arith.constant 0 : index
    %339 = vector.load %arg3[%c12, %c0_98] : memref<120x128xf32, #tpu.memory_space<vmem>>, vector<1x32xf32>
    %cst_99 = arith.constant dense<0.000000e+00> : vector<16xf32>
    %340 = vector.multi_reduction <add>, %337, %cst_99 [1] : vector<16x32xf32> to vector<16xf32>
    %341 = vector.shape_cast %340 : vector<16xf32> to vector<16x1xf32>
    %cst_100 = arith.constant 3.200000e+01 : f32
    %342 = vector.broadcast %cst_100 : f32 to vector<16x1xf32>
    %343 = arith.divf %341, %342 : vector<16x1xf32>
    %344 = vector.broadcast %343 : vector<16x1xf32> to vector<16x32xf32>
    %345 = arith.subf %337, %344 : vector<16x32xf32>
    %346 = arith.mulf %345, %345 : vector<16x32xf32>
    %cst_101 = arith.constant dense<0.000000e+00> : vector<16xf32>
    %347 = vector.multi_reduction <add>, %346, %cst_101 [1] : vector<16x32xf32> to vector<16xf32>
    %348 = vector.shape_cast %347 : vector<16xf32> to vector<16x1xf32>
    %cst_102 = arith.constant 3.200000e+01 : f32
    %349 = vector.broadcast %cst_102 : f32 to vector<16x1xf32>
    %350 = arith.divf %348, %349 : vector<16x1xf32>
    %351 = vector.broadcast %343 : vector<16x1xf32> to vector<16x32xf32>
    %352 = arith.subf %337, %351 : vector<16x32xf32>
    %cst_103 = arith.constant 9.99999996E-13 : f32
    %353 = vector.broadcast %cst_103 : f32 to vector<16x1xf32>
    %354 = arith.addf %350, %353 : vector<16x1xf32>
    %355 = math.rsqrt %354 : vector<16x1xf32>
    %356 = vector.broadcast %355 : vector<16x1xf32> to vector<16x32xf32>
    %357 = arith.mulf %352, %356 : vector<16x32xf32>
    %358 = vector.broadcast %338 : vector<1x32xf32> to vector<16x32xf32>
    %359 = arith.mulf %357, %358 : vector<16x32xf32>
    %360 = vector.broadcast %339 : vector<1x32xf32> to vector<16x32xf32>
    %361 = arith.addf %359, %360 : vector<16x32xf32>
    %c448 = arith.constant 448 : index
    %c0_104 = arith.constant 0 : index
    %362 = vector.load %arg2[%c448, %c0_104] : memref<512x128xbf16, #tpu.memory_space<vmem>>, vector<32x32xbf16>
    %c480 = arith.constant 480 : index
    %c0_105 = arith.constant 0 : index
    %363 = vector.load %arg2[%c480, %c0_105] : memref<512x128xbf16, #tpu.memory_space<vmem>>, vector<32x128xbf16>
    %364 = arith.truncf %361 : vector<16x32xf32> to vector<16x32xbf16>
    %cst_106 = arith.constant dense<0.000000e+00> : vector<16x32xf32>
    %365 = tpu.matmul %364, %362, %cst_106 {dimension_numbers = #tpu.dot_dimension_numbers<[1], [0], [0], [1], [0, 0, 1, 1], [], []>} : vector<16x32xbf16>, vector<32x32xbf16>, vector<16x32xf32> -> vector<16x32xf32>
    %c16 = arith.constant 16 : index
    %c0_107 = arith.constant 0 : index
    %366 = vector.load %arg3[%c16, %c0_107] : memref<120x128xf32, #tpu.memory_space<vmem>>, vector<1x32xf32>
    %367 = vector.broadcast %366 : vector<1x32xf32> to vector<16x32xf32>
    %368 = arith.addf %365, %367 : vector<16x32xf32>
    %369 = math.tanh %368 : vector<16x32xf32>
    %370 = arith.truncf %369 : vector<16x32xf32> to vector<16x32xbf16>
    %cst_108 = arith.constant dense<0.000000e+00> : vector<16x128xf32>
    %371 = tpu.matmul %370, %363, %cst_108 {dimension_numbers = #tpu.dot_dimension_numbers<[1], [0], [0], [1], [0, 0, 1, 1], [], []>} : vector<16x32xbf16>, vector<32x128xbf16>, vector<16x128xf32> -> vector<16x128xf32>
    %c17 = arith.constant 17 : index
    %c0_109 = arith.constant 0 : index
    %372 = vector.load %arg3[%c17, %c0_109] : memref<120x128xf32, #tpu.memory_space<vmem>>, vector<1x128xf32>
    %373 = vector.broadcast %372 : vector<1x128xf32> to vector<16x128xf32>
    %374 = arith.addf %371, %373 : vector<16x128xf32>
    %c0_110 = arith.constant 0 : index
    %c0_111 = arith.constant 0 : index
    %375 = vector.load %arg4[%c0_110, %c0_111] : memref<16x128xf32, #tpu.memory_space<vmem>>, vector<16x128xf32>
    tpu.vector_store %arg4[%c0_110, %c0_111], %374 {strides = array<i32>} : memref<16x128xf32, #tpu.memory_space<vmem>>, vector<16x128xf32>,
    return
  }
}

</mosaic_0001>

<llo_original>
// kernel: forward.1
$region0: #{forward.1}
  #allocation0 [shape = 'u32[]', space=smem, size = 0x4, offset = 0x4, fixed_abs, tag = 'smem constant byte address 0x4 - core index']
  #allocation1 [shape = 'u32[144,128]{1,0:T(1,128)}', space=vmem, size = 0x12000, scoped, tag = 'internal scratch']
  %s0 = inlined_call_operand.vmem [shape: f32[16,32], index: 0, kind: input, shape index: {}]
  %s1 = inlined_call_operand.vmem [shape: f32[16,16], index: 1, kind: input, shape index: {}]
  %s2 = inlined_call_operand.vmem [shape: bf16[512,128], index: 2, kind: input, shape index: {}]
  %s3 = inlined_call_operand.hbm [shape: f32[120,128], index: 3, kind: input, shape index: {}]
  %s4 = inlined_call_operand.vmem [shape: f32[16,128], index: 4, kind: output, shape index: {}]
  %s5 = sld [smem:[#allocation0]]
  $region30: #{forward.1} parent=0
    _
  %s7 = ssub.s32 1, %s5
  %s8 = scalar_select 0, %s7, %s5
  $region1: #{forward.1} parent=0
    #allocation2 [shape = 'u8[61440]{0}', space=vmem, size = 0xf000, scoped, tag = 'input window, operand 3, single buffered']
    #allocation3 [shape = 's32[1]{0}', space=sflag, size = 0x4, scoped, tag = 'scoped memory for forward.1']
    %9 = vsyncpa [#allocation3], 0
    // Predicated region
    $region2: #{forward.1} parent=1 // pred_check
      _
    $region3: #{forward.1} parent=1 // pred_check_branch
      %11 = sbr.rel (0) target = $region5
    $region4: #{forward.1} parent=1 // pred_region
      _
    $region5: #{forward.1} parent=1 // pred_fallthru
      _
    // Predicated region
    $region6: #{forward.1} parent=1 // pred_check
      _
    $region7: #{forward.1} parent=1 // pred_check_branch
      %13 = sbr.rel (0) target = $region9
    $region8: #{forward.1} parent=1 // pred_region
      _
    $region9: #{forward.1} parent=1 // pred_fallthru
      _
    // Predicated region
    $region10: #{forward.1} parent=1 // pred_check
      _
    $region11: #{forward.1} parent=1 // pred_check_branch
      %15 = sbr.rel (0) target = $region13
    $region12: #{forward.1} parent=1 // pred_region
      _
    $region13: #{forward.1} parent=1 // pred_fallthru
      _
    // Predicated region
    $region14: #{forward.1} parent=1 // pred_check
      _
    $region15: #{forward.1} parent=1 // pred_check_branch
      %17 = sbr.rel (0) target = $region17
    $region16: #{forward.1} parent=1 // pred_region
      %s19 = ssub.s32 1920, 1920
      %20 = vsyncadd [#allocation3], %s19
      %s21 = sshll.u32 [#allocation2], 4
      %s22 = int_to_ptr.vmem [resolvable:$true] %s21
      %27 = dma.hbm_to_vmem [thread:$0]  %s3, 1920, %s22, [#allocation3], 128, 128, 8
    $region17: #{forward.1} parent=1 // pred_fallthru
      _
    // Predicated region
    $region18: #{forward.1} parent=1 // pred_check
      _
    $region19: #{forward.1} parent=1 // pred_check_branch
      %29 = sbr.rel (0) target = $region21
    $region20: #{forward.1} parent=1 // pred_region
      %30 = dma.done [#allocation3], 1920
    $region21: #{forward.1} parent=1 // pred_fallthru
      _
    %v32 = vld [vmem:[%s1] sm:$0xff]
    %v33 = vld [vmem:[%s1 + $0x8] sm:$0xff]
    %v34 = vld [vmem:[%s0] sm:$0xff]
    %v35 = vld [vmem:[%s0 + $0x8] sm:$0xff]
    %v36 = vld [vmem:[#allocation2] sm:$0x1]
    %v37 = vld [vmem:[#allocation2 + $0x1] sm:$0x1]
    %vm38 = vcmask 261120
    %v39 = vsel %vm38, %v34, 0.0
    %40 = vadd.xlane.f32.xlu0 %v39
    %v41 = vpop.xlane.xlu0 %40
    %v42 = vsel %vm38, %v35, 0.0
    %43 = vadd.xlane.f32.xlu0 %v42
    %v44 = vpop.xlane.xlu0 %43
    %v45 = vrcp.pop 32.0
    %v46 = vmul.f32 %v41, %v45
    %v47 = vmul.f32 %v44, %v45
    %v48 = vsub.f32 %v34, %v46
    %v49 = vsub.f32 %v35, %v47
    %v50 = vmul.f32 %v48, %v48
    %v51 = vmul.f32 %v49, %v49
    %v52 = vsel %vm38, %v50, 0.0
    %53 = vadd.xlane.f32.xlu0 %v52
    %v54 = vpop.xlane.xlu0 %53
    %v55 = vsel %vm38, %v51, 0.0
    %56 = vadd.xlane.f32.xlu0 %v55
    %v57 = vpop.xlane.xlu0 %56
    %v58 = vmul.f32 %v54, %v45
    %v59 = vmul.f32 %v57, %v45
    %v60 = vadd.f32 %v58, 1e-12
    %v61 = vadd.f32 %v59, 1e-12
    %v62 = vrsqrt.pop %v60
    %v63 = vrsqrt.pop %v61
    %v64 = vmul.f32 %v48, %v62
    %v65 = vmul.f32 %v49, %v63
    %v66 = vlaneseq
    %v67 = vshrl.u32 %v66, 7
    %v68 = vsub.s32 0, %v67
    %v69 = vrot.slane %v36, %v68
    %v70 = vmul.f32 %v64, %v69
    %v71 = vmul.f32 %v65, %v69
    %v72 = vlaneseq
    %v73 = vshrl.u32 %v72, 7
    %v74 = vsub.s32 0, %v73
    %v75 = vrot.slane %v37, %v74
    %v76 = vadd.f32 %v70, %v75
    %v77 = vadd.f32 %v71, %v75
    %v78 = vld [vmem:[%s2] sm:$0xf]
    %v79 = vld [vmem:[%s2 + $0x4] sm:$0xf]
    %v80 = vld [vmem:[%s2 + $0x8] sm:$0xf]
    %v81 = vld [vmem:[%s2 + $0xc] sm:$0xf]
    %v82 = vld [vmem:[%s2 + $0x10] sm:$0xf]
    %v83 = vld [vmem:[%s2 + $0x14] sm:$0xf]
    %v84 = vld [vmem:[%s2 + $0x18] sm:$0xf]
    %v85 = vld [vmem:[%s2 + $0x1c] sm:$0xf]
    %v86 = vld [vmem:[%s2 + $0x20] sm:$0xf]
    %v87 = vld [vmem:[%s2 + $0x24] sm:$0xf]
    %v88 = vld [vmem:[%s2 + $0x28] sm:$0xf]
    %v89 = vld [vmem:[%s2 + $0x2c] sm:$0xf]
    %v90 = vld [vmem:[%s2 + $0x30] sm:$0xf]
    %v91 = vld [vmem:[%s2 + $0x34] sm:$0xf]
    %v92 = vld [vmem:[%s2 + $0x38] sm:$0xf]
    %v93 = vld [vmem:[%s2 + $0x3c] sm:$0xf]
    %v94 = vld [vmem:[%s2 + $0x40] sm:$0xf]
    %v95 = vld [vmem:[%s2 + $0x44] sm:$0xf]
    %v96 = vld [vmem:[%s2 + $0x48] sm:$0xf]
    %v97 = vld [vmem:[%s2 + $0x4c] sm:$0xf]
    %v98 = vld [vmem:[%s2 + $0x50] sm:$0xf]
    %v99 = vld [vmem:[%s2 + $0x54] sm:$0xf]
    %v100 = vld [vmem:[%s2 + $0x58] sm:$0xf]
    %v101 = vld [vmem:[%s2 + $0x5c] sm:$0xf]
    %v102 = vld [vmem:[%s2 + $0x60] sm:$0xf]
    %v103 = vld [vmem:[%s2 + $0x64] sm:$0xf]
    %v104 = vld [vmem:[%s2 + $0x68] sm:$0xf]
    %v105 = vld [vmem:[%s2 + $0x6c] sm:$0xf]
    %v106 = vpack.c.bf16 %v77, %v76
    %v107 = vld [vmem:[#allocation2 + $0x18] sm:$0xff]
    %v108 = vld [vmem:[#allocation2 + $0x20] sm:$0xff]
    %v109 = vld [vmem:[#allocation2 + $0x28] sm:$0xff]
    %v110 = vld [vmem:[#allocation2 + $0x30] sm:$0xff]
    %v111 = vld [vmem:[#allocation2 + $0x38] sm:$0xff]
    %v112 = vld [vmem:[#allocation2 + $0x40] sm:$0xff]
    %v113 = vld [vmem:[#allocation2 + $0x48] sm:$0xff]
    %v114 = vld [vmem:[#allocation2 + $0x50] sm:$0xff]
    %v115 = vld [vmem:[#allocation2 + $0x58] sm:$0xff]
    %v116 = vld [vmem:[#allocation2 + $0x60] sm:$0xff]
    %v117 = vld [vmem:[#allocation2 + $0x68] sm:$0xff]
    %v118 = vld [vmem:[#allocation2 + $0x70] sm:$0xff]
    %120 = vset.pattern.permute.xlu0 0
    %121 = vperm.xlu0 %120, %v107
    %v122 = vpop.permute.xlu0 %121
    %125 = vset.pattern.permute.xlu0 0
    %126 = vperm.xlu0 %125, %v108
    %v127 = vpop.permute.xlu0 %126
    %130 = vset.pattern.permute.xlu0 0
    %131 = vperm.xlu0 %130, %v109
    %v132 = vpop.permute.xlu0 %131
    %135 = vset.pattern.permute.xlu0 0
    %136 = vperm.xlu0 %135, %v110
    %v137 = vpop.permute.xlu0 %136
    %140 = vset.pattern.permute.xlu0 0
    %141 = vperm.xlu0 %140, %v111
    %v142 = vpop.permute.xlu0 %141
    %145 = vset.pattern.permute.xlu0 0
    %146 = vperm.xlu0 %145, %v112
    %v147 = vpop.permute.xlu0 %146
    %150 = vset.pattern.permute.xlu0 0
    %151 = vperm.xlu0 %150, %v113
    %v152 = vpop.permute.xlu0 %151
    %155 = vset.pattern.permute.xlu0 0
    %156 = vperm.xlu0 %155, %v114
    %v157 = vpop.permute.xlu0 %156
    %160 = vset.pattern.permute.xlu0 0
    %161 = vperm.xlu0 %160, %v115
    %v162 = vpop.permute.xlu0 %161
    %165 = vset.pattern.permute.xlu0 0
    %166 = vperm.xlu0 %165, %v116
    %v167 = vpop.permute.xlu0 %166
    %170 = vset.pattern.permute.xlu0 0
    %171 = vperm.xlu0 %170, %v117
    %v172 = vpop.permute.xlu0 %171
    %175 = vset.pattern.permute.xlu0 0
    %176 = vperm.xlu0 %175, %v118
    %v177 = vpop.permute.xlu0 %176
    %v191 = vunpack.c.l.b16 %v78
    %v192 = vunpack.c.l.b16 %v79
    %v193 = vunpack.c.l.b16 %v80
    %v194 = vunpack.c.l.b16 %v81
    %v195 = vunpack.c.l.b16 %v82
    %v196 = vunpack.c.l.b16 %v83
    %v197 = vunpack.c.l.b16 %v84
    %v198 = vunpack.c.l.b16 %v85
    %v199 = vunpack.c.l.b16 %v86
    %v200 = vunpack.c.l.b16 %v87
    %v201 = vunpack.c.l.b16 %v88
    %v202 = vunpack.c.l.b16 %v89
    %v203 = vpack.c.b16 %v192, %v191
    %v204 = vpack.c.b16 %v194, %v193
    %v205 = vpack.c.b16 %v196, %v195
    %v206 = vpack.c.b16 %v198, %v197
    %v207 = vpack.c.b16 %v200, %v199
    %v208 = vpack.c.b16 %v202, %v201
    %v210 = vsel %vm38, %v203, 0
    %v213 = vsel %vm38, %v204, 0
    %v216 = vsel %vm38, %v205, 0
    %v219 = vsel %vm38, %v206, 0
    %v222 = vsel %vm38, %v207, 0
    %v225 = vsel %vm38, %v208, 0
    %v228 = vsel %vm38, %v106, 0
    %230 = vmatprep.subr.bf16.mxu0 0
    %231 = vmatpush1.bf16.xpose.msra.mxu0 %v228
    %232 = vmatprep.subr.bf16.mxu0 0
    %233 = vmatpush1.bf16.xpose.msra.mxu0 0
    %234 = vmatprep.subr.bf16.mxu0 0
    %235 = vmatpush1.bf16.xpose.msra.mxu0 0
    %236 = vmatprep.subr.bf16.mxu0 0
    %237 = vmatpush1.bf16.xpose.msra.mxu0 0
    %238 = vmatprep.subr.bf16.mxu0 0
    %239 = vmatpush1.bf16.xpose.msra.mxu0 0
    %240 = vmatprep.subr.bf16.mxu0 0
    %241 = vmatpush1.bf16.xpose.msra.mxu0 0
    %242 = vmatprep.subr.bf16.mxu0 0
    %243 = vmatpush1.bf16.xpose.msra.mxu0 0
    %244 = vmatprep.subr.bf16.mxu0 0
    %245 = vmatpush1.bf16.xpose.msra.mxu0 0
    %246 = vmatprep.subr.bf16.mxu0 0
    %247 = vmatpush1.bf16.xpose.msra.mxu0 0
    %248 = vmatprep.subr.bf16.mxu0 0
    %249 = vmatpush1.bf16.xpose.msra.mxu0 0
    %250 = vmatprep.subr.bf16.mxu0 0
    %251 = vmatpush1.bf16.xpose.msra.mxu0 0
    %252 = vmatprep.subr.bf16.mxu0 0
    %253 = vmatpush1.bf16.xpose.msra.mxu0 0
    %254 = vmatprep.subr.bf16.mxu0 0
    %255 = vmatpush1.bf16.xpose.msra.mxu0 0
    %256 = vmatprep.subr.bf16.mxu0 0
    %257 = vmatpush1.bf16.xpose.msra.mxu0 0
    %258 = vmatprep.subr.bf16.mxu0 0
    %259 = vmatpush1.bf16.xpose.msra.mxu0 0
    %260 = vmatprep.subr.bf16.mxu0 0
    %261 = vmatpush1.bf16.xpose.msra.mxu0 0
    %262 = vmatprep.mubr.bf16.mxu0 0
    %263 = vmatmul.mubr.bf16.gmra.mrb[0].mxu0 %v210
    %v264 = vpop.f32.mrb[0].mxu0
    %v265 = vadd.f32 %v122, %v264
    %v266 = vpop.f32.mrb[0].mxu0
    %v267 = vpop.f32.mrb[0].mxu0
    %v268 = vadd.f32 %v127, %v267
    %v269 = vpop.f32.mrb[0].mxu0
    %270 = vmatprep.mubr.bf16.mxu0 0
    %271 = vmatmul.mubr.bf16.gmra.mrb[0].mxu0 %v213
    %v272 = vpop.f32.mrb[0].mxu0
    %v273 = vadd.f32 %v132, %v272
    %v274 = vpop.f32.mrb[0].mxu0
    %v275 = vpop.f32.mrb[0].mxu0
    %v276 = vadd.f32 %v137, %v275
    %v277 = vpop.f32.mrb[0].mxu0
    %278 = vmatprep.mubr.bf16.mxu0 0
    %279 = vmatmul.mubr.bf16.gmra.mrb[0].mxu0 %v216
    %v280 = vpop.f32.mrb[0].mxu0
    %v281 = vadd.f32 %v142, %v280
    %v282 = vpop.f32.mrb[0].mxu0
    %v283 = vpop.f32.mrb[0].mxu0
    %v284 = vadd.f32 %v147, %v283
    %v285 = vpop.f32.mrb[0].mxu0
    %286 = vmatprep.mubr.bf16.mxu0 0
    %287 = vmatmul.mubr.bf16.gmra.mrb[0].mxu0 %v219
    %v288 = vpop.f32.mrb[0].mxu0
    %v289 = vadd.f32 %v152, %v288
    %v290 = vpop.f32.mrb[0].mxu0
    %v291 = vpop.f32.mrb[0].mxu0
    %v292 = vadd.f32 %v157, %v291
    %v293 = vpop.f32.mrb[0].mxu0
    %294 = vmatprep.mubr.bf16.mxu0 0
    %295 = vmatmul.mubr.bf16.gmra.mrb[0].mxu0 %v222
    %v296 = vpop.f32.mrb[0].mxu0
    %v297 = vadd.f32 %v162, %v296
    %v298 = vpop.f32.mrb[0].mxu0
    %v299 = vpop.f32.mrb[0].mxu0
    %v300 = vadd.f32 %v167, %v299
    %v301 = vpop.f32.mrb[0].mxu0
    %302 = vmatprep.mubr.bf16.mxu0 0
    %303 = vmatmul.mubr.bf16.gmra.mrb[0].mxu0 %v225
    %v304 = vpop.f32.mrb[0].mxu0
    %v305 = vadd.f32 %v172, %v304
    %v306 = vpop.f32.mrb[0].mxu0
    %v307 = vpop.f32.mrb[0].mxu0
    %v308 = vadd.f32 %v177, %v307
    %v309 = vpop.f32.mrb[0].mxu0
    %310 = vdwg.mxu0
    %v311 = vpack.c.bf16 %v265, %v265
    %v312 = vpack.c.bf16 %v281, %v281
    %313 = vxpose.xlu0.c.b16.start [1/8] %v311, 128
    %314 = vxpose.xlu0.c.b16.cont [2/8] 0, 128
    %315 = vxpose.xlu0.c.b16.cont [3/8] 0, 128
    %316 = vxpose.xlu0.c.b16.cont [4/8] 0, 128
    %317 = vxpose.xlu0.c.b16.cont [5/8] 0, 128
    %318 = vxpose.xlu0.c.b16.cont [6/8] 0, 128
    %319 = vxpose.xlu0.c.b16.cont [7/8] 0, 128
    %320 = vxpose.xlu0.c.b16.end [8/8] 0, 128
    %v321 = vpop.trf.xlu0
    %v322 = vpop.trf.xlu0
    %v323 = vpop.trf.xlu0
    %v324 = vpop.trf.xlu0
    %v325 = vpop.trf.xlu0
    %v326 = vpop.trf.xlu0
    %v327 = vpop.trf.xlu0
    %v328 = vpop.trf.xlu0
    %vm329 = vcmask 64512
    %v331 = vsel %vm329, %v321, 0
    %vm333 = vcmask 1043456
    %v335 = vsel %vm333, %v312, 0
    %337 = vmatprep.subr.bf16.mxu0 0
    %338 = vmatpush1.bf16.msra.mxu0 %v335
    %339 = vmatprep.subr.bf16.mxu0 0
    %340 = vmatpush1.bf16.msra.mxu0 0
    %341 = vmatprep.subr.bf16.mxu0 0
    %342 = vmatpush1.bf16.msra.mxu0 0
    %343 = vmatprep.subr.bf16.mxu0 0
    %344 = vmatpush1.bf16.msra.mxu0 0
    %345 = vmatprep.subr.bf16.mxu0 0
    %346 = vmatpush1.bf16.msra.mxu0 0
    %347 = vmatprep.subr.bf16.mxu0 0
    %348 = vmatpush1.bf16.msra.mxu0 0
    %349 = vmatprep.subr.bf16.mxu0 0
    %350 = vmatpush1.bf16.msra.mxu0 0
    %351 = vmatprep.subr.bf16.mxu0 0
    %352 = vmatpush1.bf16.msra.mxu0 0
    %353 = vmatprep.subr.bf16.mxu0 0
    %354 = vmatpush1.bf16.msra.mxu0 0
    %355 = vmatprep.subr.bf16.mxu0 0
    %356 = vmatpush1.bf16.msra.mxu0 0
    %357 = vmatprep.subr.bf16.mxu0 0
    %358 = vmatpush1.bf16.msra.mxu0 0
    %359 = vmatprep.subr.bf16.mxu0 0
    %360 = vmatpush1.bf16.msra.mxu0 0
    %361 = vmatprep.subr.bf16.mxu0 0
    %362 = vmatpush1.bf16.msra.mxu0 0
    %363 = vmatprep.subr.bf16.mxu0 0
    %364 = vmatpush1.bf16.msra.mxu0 0
    %365 = vmatprep.subr.bf16.mxu0 0
    %366 = vmatpush1.bf16.msra.mxu0 0
    %367 = vmatprep.subr.bf16.mxu0 0
    %368 = vmatpush1.bf16.msra.mxu0 0
    %369 = vmatprep.mubr.bf16.mxu0 0
    %370 = vmatmul.mubr.bf16.gmra.mrb[0].mxu0 %v331
    %v371 = vpop.f32.mrb[0].mxu0
    %v372 = vadd.f32 %v32, %v371
    %v373 = vpop.f32.mrb[0].mxu0
    %v374 = vpop.f32.mrb[0].mxu0
    %v375 = vadd.f32 %v33, %v374
    %v376 = vpop.f32.mrb[0].mxu0
    %377 = vdwg.mxu0
    %vm378 = vcmask 130048
    %v379 = vsel %vm378, %v372, -inf
    %380 = vmax.xlane.f32.xlu0 %v379
    %v381 = vpop.xlane.xlu0 %380
    %v382 = vsel %vm378, %v375, -inf
    %383 = vmax.xlane.f32.xlu0 %v382
    %v384 = vpop.xlane.xlu0 %383
    %v385 = vsub.f32 %v372, %v381
    %v386 = vsub.f32 %v375, %v384
    %v387 = vmul.f32 %v385, 1.442695
    %v388 = vpow.pop %v387
    %v389 = vmul.f32 %v386, 1.442695
    %v390 = vpow.pop %v389
    %v391 = vsel %vm378, %v388, 0.0
    %392 = vadd.xlane.f32.xlu0 %v391
    %v393 = vpop.xlane.xlu0 %392
    %v394 = vsel %vm378, %v390, 0.0
    %395 = vadd.xlane.f32.xlu0 %v394
    %v396 = vpop.xlane.xlu0 %395
    %v397 = vrcp.pop %v393
    %v398 = vrcp.pop %v396
    %v399 = vmul.f32 %v388, %v397
    %v400 = vmul.f32 %v390, %v398
    %v401 = vpack.c.bf16 %v297, %v297
    %v402 = vpack.c.bf16 %v400, %v399
    %v404 = vsel %vm378, %v401, 0
    %v407 = vsel %vm378, %v402, 0
    %409 = vmatprep.subr.bf16.mxu0 0
    %410 = vmatpush1.bf16.xpose.msra.mxu0 %v407
    %411 = vmatprep.subr.bf16.mxu0 0
    %412 = vmatpush1.bf16.xpose.msra.mxu0 0
    %413 = vmatprep.subr.bf16.mxu0 0
    %414 = vmatpush1.bf16.xpose.msra.mxu0 0
    %415 = vmatprep.subr.bf16.mxu0 0
    %416 = vmatpush1.bf16.xpose.msra.mxu0 0
    %417 = vmatprep.subr.bf16.mxu0 0
    %418 = vmatpush1.bf16.xpose.msra.mxu0 0
    %419 = vmatprep.subr.bf16.mxu0 0
    %420 = vmatpush1.bf16.xpose.msra.mxu0 0
    %421 = vmatprep.subr.bf16.mxu0 0
    %422 = vmatpush1.bf16.xpose.msra.mxu0 0
    %423 = vmatprep.subr.bf16.mxu0 0
    %424 = vmatpush1.bf16.xpose.msra.mxu0 0
    %425 = vmatprep.subr.bf16.mxu0 0
    %426 = vmatpush1.bf16.xpose.msra.mxu0 0
    %427 = vmatprep.subr.bf16.mxu0 0
    %428 = vmatpush1.bf16.xpose.msra.mxu0 0
    %429 = vmatprep.subr.bf16.mxu0 0
    %430 = vmatpush1.bf16.xpose.msra.mxu0 0
    %431 = vmatprep.subr.bf16.mxu0 0
    %432 = vmatpush1.bf16.xpose.msra.mxu0 0
    %433 = vmatprep.subr.bf16.mxu0 0
    %434 = vmatpush1.bf16.xpose.msra.mxu0 0
    %435 = vmatprep.subr.bf16.mxu0 0
    %436 = vmatpush1.bf16.xpose.msra.mxu0 0
    %437 = vmatprep.subr.bf16.mxu0 0
    %438 = vmatpush1.bf16.xpose.msra.mxu0 0
    %439 = vmatprep.subr.bf16.mxu0 0
    %440 = vmatpush1.bf16.xpose.msra.mxu0 0
    %441 = vmatprep.mubr.bf16.mxu0 0
    %442 = vmatmul.mubr.bf16.gmra.mrb[0].mxu0 %v404
    %v443 = vpop.f32.mrb[0].mxu0
    %v444 = vadd.f32 0.0, %v443
    %v445 = vpop.f32.mrb[0].mxu0
    %v446 = vpop.f32.mrb[0].mxu0
    %v447 = vpop.f32.mrb[0].mxu0
    %448 = vdwg.mxu0
    %v449 = vpack.c.bf16 %v268, %v268
    %v450 = vpack.c.bf16 %v284, %v284
    %451 = vxpose.xlu0.c.b16.start [1/8] %v449, 128
    %452 = vxpose.xlu0.c.b16.cont [2/8] 0, 128
    %453 = vxpose.xlu0.c.b16.cont [3/8] 0, 128
    %454 = vxpose.xlu0.c.b16.cont [4/8] 0, 128
    %455 = vxpose.xlu0.c.b16.cont [5/8] 0, 128
    %456 = vxpose.xlu0.c.b16.cont [6/8] 0, 128
    %457 = vxpose.xlu0.c.b16.cont [7/8] 0, 128
    %458 = vxpose.xlu0.c.b16.end [8/8] 0, 128
    %v459 = vpop.trf.xlu0
    %v460 = vpop.trf.xlu0
    %v461 = vpop.trf.xlu0
    %v462 = vpop.trf.xlu0
    %v463 = vpop.trf.xlu0
    %v464 = vpop.trf.xlu0
    %v465 = vpop.trf.xlu0
    %v466 = vpop.trf.xlu0
    %v468 = vsel %vm329, %v459, 0
    %v471 = vsel %vm333, %v450, 0
    %473 = vmatprep.subr.bf16.mxu0 0
    %474 = vmatpush1.bf16.msra.mxu0 %v471
    %475 = vmatprep.subr.bf16.mxu0 0
    %476 = vmatpush1.bf16.msra.mxu0 0
    %477 = vmatprep.subr.bf16.mxu0 0
    %478 = vmatpush1.bf16.msra.mxu0 0
    %479 = vmatprep.subr.bf16.mxu0 0
    %480 = vmatpush1.bf16.msra.mxu0 0
    %481 = vmatprep.subr.bf16.mxu0 0
    %482 = vmatpush1.bf16.msra.mxu0 0
    %483 = vmatprep.subr.bf16.mxu0 0
    %484 = vmatpush1.bf16.msra.mxu0 0
    %485 = vmatprep.subr.bf16.mxu0 0
    %486 = vmatpush1.bf16.msra.mxu0 0
    %487 = vmatprep.subr.bf16.mxu0 0
    %488 = vmatpush1.bf16.msra.mxu0 0
    %489 = vmatprep.subr.bf16.mxu0 0
    %490 = vmatpush1.bf16.msra.mxu0 0
    %491 = vmatprep.subr.bf16.mxu0 0
    %492 = vmatpush1.bf16.msra.mxu0 0
    %493 = vmatprep.subr.bf16.mxu0 0
    %494 = vmatpush1.bf16.msra.mxu0 0
    %495 = vmatprep.subr.bf16.mxu0 0
    %496 = vmatpush1.bf16.msra.mxu0 0
    %497 = vmatprep.subr.bf16.mxu0 0
    %498 = vmatpush1.bf16.msra.mxu0 0
    %499 = vmatprep.subr.bf16.mxu0 0
    %500 = vmatpush1.bf16.msra.mxu0 0
    %501 = vmatprep.subr.bf16.mxu0 0
    %502 = vmatpush1.bf16.msra.mxu0 0
    %503 = vmatprep.subr.bf16.mxu0 0
    %504 = vmatpush1.bf16.msra.mxu0 0
    %505 = vmatprep.mubr.bf16.mxu0 0
    %506 = vmatmul.mubr.bf16.gmra.mrb[0].mxu0 %v468
    %v507 = vpop.f32.mrb[0].mxu0
    %v508 = vadd.f32 %v32, %v507
    %v509 = vpop.f32.mrb[0].mxu0
    %v510 = vpop.f32.mrb[0].mxu0
    %v511 = vadd.f32 %v33, %v510
    %v512 = vpop.f32.mrb[0].mxu0
    %513 = vdwg.mxu0
    %v514 = vsel %vm378, %v508, -inf
    %515 = vmax.xlane.f32.xlu0 %v514
    %v516 = vpop.xlane.xlu0 %515
    %v517 = vsel %vm378, %v511, -inf
    %518 = vmax.xlane.f32.xlu0 %v517
    %v519 = vpop.xlane.xlu0 %518
    %v520 = vsub.f32 %v508, %v516
    %v521 = vsub.f32 %v511, %v519
    %v522 = vmul.f32 %v520, 1.442695
    %v523 = vpow.pop %v522
    %v524 = vmul.f32 %v521, 1.442695
    %v525 = vpow.pop %v524
    %v526 = vsel %vm378, %v523, 0.0
    %527 = vadd.xlane.f32.xlu0 %v526
    %v528 = vpop.xlane.xlu0 %527
    %v529 = vsel %vm378, %v525, 0.0
    %530 = vadd.xlane.f32.xlu0 %v529
    %v531 = vpop.xlane.xlu0 %530
    %v532 = vrcp.pop %v528
    %v533 = vrcp.pop %v531
    %v534 = vmul.f32 %v523, %v532
    %v535 = vmul.f32 %v525, %v533
    %v536 = vpack.c.bf16 %v300, %v300
    %v537 = vpack.c.bf16 %v535, %v534
    %v539 = vsel %vm378, %v536, 0
    %v542 = vsel %vm378, %v537, 0
    %544 = vmatprep.subr.bf16.mxu0 0
    %545 = vmatpush1.bf16.xpose.msra.mxu0 %v542
    %546 = vmatprep.subr.bf16.mxu0 0
    %547 = vmatpush1.bf16.xpose.msra.mxu0 0
    %548 = vmatprep.subr.bf16.mxu0 0
    %549 = vmatpush1.bf16.xpose.msra.mxu0 0
    %550 = vmatprep.subr.bf16.mxu0 0
    %551 = vmatpush1.bf16.xpose.msra.mxu0 0
    %552 = vmatprep.subr.bf16.mxu0 0
    %553 = vmatpush1.bf16.xpose.msra.mxu0 0
    %554 = vmatprep.subr.bf16.mxu0 0
    %555 = vmatpush1.bf16.xpose.msra.mxu0 0
    %556 = vmatprep.subr.bf16.mxu0 0
    %557 = vmatpush1.bf16.xpose.msra.mxu0 0
    %558 = vmatprep.subr.bf16.mxu0 0
    %559 = vmatpush1.bf16.xpose.msra.mxu0 0
    %560 = vmatprep.subr.bf16.mxu0 0
    %561 = vmatpush1.bf16.xpose.msra.mxu0 0
    %562 = vmatprep.subr.bf16.mxu0 0
    %563 = vmatpush1.bf16.xpose.msra.mxu0 0
    %564 = vmatprep.subr.bf16.mxu0 0
    %565 = vmatpush1.bf16.xpose.msra.mxu0 0
    %566 = vmatprep.subr.bf16.mxu0 0
    %567 = vmatpush1.bf16.xpose.msra.mxu0 0
    %568 = vmatprep.subr.bf16.mxu0 0
    %569 = vmatpush1.bf16.xpose.msra.mxu0 0
    %570 = vmatprep.subr.bf16.mxu0 0
    %571 = vmatpush1.bf16.xpose.msra.mxu0 0
    %572 = vmatprep.subr.bf16.mxu0 0
    %573 = vmatpush1.bf16.xpose.msra.mxu0 0
    %574 = vmatprep.subr.bf16.mxu0 0
    %575 = vmatpush1.bf16.xpose.msra.mxu0 0
    %576 = vmatprep.mubr.bf16.mxu0 0
    %577 = vmatmul.mubr.bf16.gmra.mrb[0].mxu0 %v539
    %v578 = vpop.f32.mrb[0].mxu0
    %v579 = vadd.f32 0.0, %v578
    %v580 = vpop.f32.mrb[0].mxu0
    %v581 = vpop.f32.mrb[0].mxu0
    %v582 = vpop.f32.mrb[0].mxu0
    %583 = vdwg.mxu0
    %v584 = vpack.c.bf16 %v273, %v273
    %v585 = vpack.c.bf16 %v289, %v289
    %586 = vxpose.xlu0.c.b16.start [1/8] %v584, 128
    %587 = vxpose.xlu0.c.b16.cont [2/8] 0, 128
    %588 = vxpose.xlu0.c.b16.cont [3/8] 0, 128
    %589 = vxpose.xlu0.c.b16.cont [4/8] 0, 128
    %590 = vxpose.xlu0.c.b16.cont [5/8] 0, 128
    %591 = vxpose.xlu0.c.b16.cont [6/8] 0, 128
    %592 = vxpose.xlu0.c.b16.cont [7/8] 0, 128
    %593 = vxpose.xlu0.c.b16.end [8/8] 0, 128
    %v594 = vpop.trf.xlu0
    %v595 = vpop.trf.xlu0
    %v596 = vpop.trf.xlu0
    %v597 = vpop.trf.xlu0
    %v598 = vpop.trf.xlu0
    %v599 = vpop.trf.xlu0
    %v600 = vpop.trf.xlu0
    %v601 = vpop.trf.xlu0
    %v603 = vsel %vm329, %v594, 0
    %v606 = vsel %vm333, %v585, 0
    %608 = vmatprep.subr.bf16.mxu0 0
    %609 = vmatpush1.bf16.msra.mxu0 %v606
    %610 = vmatprep.subr.bf16.mxu0 0
    %611 = vmatpush1.bf16.msra.mxu0 0
    %612 = vmatprep.subr.bf16.mxu0 0
    %613 = vmatpush1.bf16.msra.mxu0 0
    %614 = vmatprep.subr.bf16.mxu0 0
    %615 = vmatpush1.bf16.msra.mxu0 0
    %616 = vmatprep.subr.bf16.mxu0 0
    %617 = vmatpush1.bf16.msra.mxu0 0
    %618 = vmatprep.subr.bf16.mxu0 0
    %619 = vmatpush1.bf16.msra.mxu0 0
    %620 = vmatprep.subr.bf16.mxu0 0
    %621 = vmatpush1.bf16.msra.mxu0 0
    %622 = vmatprep.subr.bf16.mxu0 0
    %623 = vmatpush1.bf16.msra.mxu0 0
    %624 = vmatprep.subr.bf16.mxu0 0
    %625 = vmatpush1.bf16.msra.mxu0 0
    %626 = vmatprep.subr.bf16.mxu0 0
    %627 = vmatpush1.bf16.msra.mxu0 0
    %628 = vmatprep.subr.bf16.mxu0 0
    %629 = vmatpush1.bf16.msra.mxu0 0
    %630 = vmatprep.subr.bf16.mxu0 0
    %631 = vmatpush1.bf16.msra.mxu0 0
    %632 = vmatprep.subr.bf16.mxu0 0
    %633 = vmatpush1.bf16.msra.mxu0 0
    %634 = vmatprep.subr.bf16.mxu0 0
    %635 = vmatpush1.bf16.msra.mxu0 0
    %636 = vmatprep.subr.bf16.mxu0 0
    %637 = vmatpush1.bf16.msra.mxu0 0
    %638 = vmatprep.subr.bf16.mxu0 0
    %639 = vmatpush1.bf16.msra.mxu0 0
    %640 = vmatprep.mubr.bf16.mxu0 0
    %641 = vmatmul.mubr.bf16.gmra.mrb[0].mxu0 %v603
    %v642 = vpop.f32.mrb[0].mxu0
    %v643 = vadd.f32 %v32, %v642
    %v644 = vpop.f32.mrb[0].mxu0
    %v645 = vpop.f32.mrb[0].mxu0
    %v646 = vadd.f32 %v33, %v645
    %v647 = vpop.f32.mrb[0].mxu0
    %648 = vdwg.mxu0
    %v649 = vsel %vm378, %v643, -inf
    %650 = vmax.xlane.f32.xlu0 %v649
    %v651 = vpop.xlane.xlu0 %650
    %v652 = vsel %vm378, %v646, -inf
    %653 = vmax.xlane.f32.xlu0 %v652
    %v654 = vpop.xlane.xlu0 %653
    %v655 = vsub.f32 %v643, %v651
    %v656 = vsub.f32 %v646, %v654
    %v657 = vmul.f32 %v655, 1.442695
    %v658 = vpow.pop %v657
    %v659 = vmul.f32 %v656, 1.442695
    %v660 = vpow.pop %v659
    %v661 = vsel %vm378, %v658, 0.0
    %662 = vadd.xlane.f32.xlu0 %v661
    %v663 = vpop.xlane.xlu0 %662
    %v664 = vsel %vm378, %v660, 0.0
    %665 = vadd.xlane.f32.xlu0 %v664
    %v666 = vpop.xlane.xlu0 %665
    %v667 = vrcp.pop %v663
    %v668 = vrcp.pop %v666
    %v669 = vmul.f32 %v658, %v667
    %v670 = vmul.f32 %v660, %v668
    %v671 = vpack.c.bf16 %v305, %v305
    %v672 = vpack.c.bf16 %v670, %v669
    %v674 = vsel %vm378, %v671, 0
    %v677 = vsel %vm378, %v672, 0
    %679 = vmatprep.subr.bf16.mxu0 0
    %680 = vmatpush1.bf16.xpose.msra.mxu0 %v677
    %681 = vmatprep.subr.bf16.mxu0 0
    %682 = vmatpush1.bf16.xpose.msra.mxu0 0
    %683 = vmatprep.subr.bf16.mxu0 0
    %684 = vmatpush1.bf16.xpose.msra.mxu0 0
    %685 = vmatprep.subr.bf16.mxu0 0
    %686 = vmatpush1.bf16.xpose.msra.mxu0 0
    %687 = vmatprep.subr.bf16.mxu0 0
    %688 = vmatpush1.bf16.xpose.msra.mxu0 0
    %689 = vmatprep.subr.bf16.mxu0 0
    %690 = vmatpush1.bf16.xpose.msra.mxu0 0
    %691 = vmatprep.subr.bf16.mxu0 0
    %692 = vmatpush1.bf16.xpose.msra.mxu0 0
    %693 = vmatprep.subr.bf16.mxu0 0
    %694 = vmatpush1.bf16.xpose.msra.mxu0 0
    %695 = vmatprep.subr.bf16.mxu0 0
    %696 = vmatpush1.bf16.xpose.msra.mxu0 0
    %697 = vmatprep.subr.bf16.mxu0 0
    %698 = vmatpush1.bf16.xpose.msra.mxu0 0
    %699 = vmatprep.subr.bf16.mxu0 0
    %700 = vmatpush1.bf16.xpose.msra.mxu0 0
    %701 = vmatprep.subr.bf16.mxu0 0
    %702 = vmatpush1.bf16.xpose.msra.mxu0 0
    %703 = vmatprep.subr.bf16.mxu0 0
    %704 = vmatpush1.bf16.xpose.msra.mxu0 0
    %705 = vmatprep.subr.bf16.mxu0 0
    %706 = vmatpush1.bf16.xpose.msra.mxu0 0
    %707 = vmatprep.subr.bf16.mxu0 0
    %708 = vmatpush1.bf16.xpose.msra.mxu0 0
    %709 = vmatprep.subr.bf16.mxu0 0
    %710 = vmatpush1.bf16.xpose.msra.mxu0 0
    %711 = vmatprep.mubr.bf16.mxu0 0
    %712 = vmatmul.mubr.bf16.gmra.mrb[0].mxu0 %v674
    %v713 = vpop.f32.mrb[0].mxu0
    %v714 = vadd.f32 0.0, %v713
    %v715 = vpop.f32.mrb[0].mxu0
    %v716 = vpop.f32.mrb[0].mxu0
    %v717 = vpop.f32.mrb[0].mxu0
    %718 = vdwg.mxu0
    %v719 = vpack.c.bf16 %v276, %v276
    %v720 = vpack.c.bf16 %v292, %v292
    %721 = vxpose.xlu0.c.b16.start [1/8] %v719, 128
    %722 = vxpose.xlu0.c.b16.cont [2/8] 0, 128
    %723 = vxpose.xlu0.c.b16.cont [3/8] 0, 128
    %724 = vxpose.xlu0.c.b16.cont [4/8] 0, 128
    %725 = vxpose.xlu0.c.b16.cont [5/8] 0, 128
    %726 = vxpose.xlu0.c.b16.cont [6/8] 0, 128
    %727 = vxpose.xlu0.c.b16.cont [7/8] 0, 128
    %728 = vxpose.xlu0.c.b16.end [8/8] 0, 128
    %v729 = vpop.trf.xlu0
    %v730 = vpop.trf.xlu0
    %v731 = vpop.trf.xlu0
    %v732 = vpop.trf.xlu0
    %v733 = vpop.trf.xlu0
    %v734 = vpop.trf.xlu0
    %v735 = vpop.trf.xlu0
    %v736 = vpop.trf.xlu0
    %v738 = vsel %vm329, %v729, 0
    %v741 = vsel %vm333, %v720, 0
    %743 = vmatprep.subr.bf16.mxu0 0
    %744 = vmatpush1.bf16.msra.mxu0 %v741
    %745 = vmatprep.subr.bf16.mxu0 0
    %746 = vmatpush1.bf16.msra.mxu0 0
    %747 = vmatprep.subr.bf16.mxu0 0
    %748 = vmatpush1.bf16.msra.mxu0 0
    %749 = vmatprep.subr.bf16.mxu0 0
    %750 = vmatpush1.bf16.msra.mxu0 0
    %751 = vmatprep.subr.bf16.mxu0 0
    %752 = vmatpush1.bf16.msra.mxu0 0
    %753 = vmatprep.subr.bf16.mxu0 0
    %754 = vmatpush1.bf16.msra.mxu0 0
    %755 = vmatprep.subr.bf16.mxu0 0
    %756 = vmatpush1.bf16.msra.mxu0 0
    %757 = vmatprep.subr.bf16.mxu0 0
    %758 = vmatpush1.bf16.msra.mxu0 0
    %759 = vmatprep.subr.bf16.mxu0 0
    %760 = vmatpush1.bf16.msra.mxu0 0
    %761 = vmatprep.subr.bf16.mxu0 0
    %762 = vmatpush1.bf16.msra.mxu0 0
    %763 = vmatprep.subr.bf16.mxu0 0
    %764 = vmatpush1.bf16.msra.mxu0 0
    %765 = vmatprep.subr.bf16.mxu0 0
    %766 = vmatpush1.bf16.msra.mxu0 0
    %767 = vmatprep.subr.bf16.mxu0 0
    %768 = vmatpush1.bf16.msra.mxu0 0
    %769 = vmatprep.subr.bf16.mxu0 0
    %770 = vmatpush1.bf16.msra.mxu0 0
    %771 = vmatprep.subr.bf16.mxu0 0
    %772 = vmatpush1.bf16.msra.mxu0 0
    %773 = vmatprep.subr.bf16.mxu0 0
    %774 = vmatpush1.bf16.msra.mxu0 0
    %775 = vmatprep.mubr.bf16.mxu0 0
    %776 = vmatmul.mubr.bf16.gmra.mrb[0].mxu0 %v738
    %v777 = vpop.f32.mrb[0].mxu0
    %v778 = vadd.f32 %v32, %v777
    %v779 = vpop.f32.mrb[0].mxu0
    %v780 = vpop.f32.mrb[0].mxu0
    %v781 = vadd.f32 %v33, %v780
    %v782 = vpop.f32.mrb[0].mxu0
    %783 = vdwg.mxu0
    %v784 = vsel %vm378, %v778, -inf
    %785 = vmax.xlane.f32.xlu0 %v784
    %v786 = vpop.xlane.xlu0 %785
    %v787 = vsel %vm378, %v781, -inf
    %788 = vmax.xlane.f32.xlu0 %v787
    %v789 = vpop.xlane.xlu0 %788
    %v790 = vsub.f32 %v778, %v786
    %v791 = vsub.f32 %v781, %v789
    %v792 = vmul.f32 %v790, 1.442695
    %v793 = vpow.pop %v792
    %v794 = vmul.f32 %v791, 1.442695
    %v795 = vpow.pop %v794
    %v796 = vsel %vm378, %v793, 0.0
    %797 = vadd.xlane.f32.xlu0 %v796
    %v798 = vpop.xlane.xlu0 %797
    %v799 = vsel %vm378, %v795, 0.0
    %800 = vadd.xlane.f32.xlu0 %v799
    %v801 = vpop.xlane.xlu0 %800
    %v802 = vrcp.pop %v798
    %v803 = vrcp.pop %v801
    %v804 = vmul.f32 %v793, %v802
    %v805 = vmul.f32 %v795, %v803
    %v806 = vpack.c.bf16 %v308, %v308
    %v807 = vpack.c.bf16 %v805, %v804
    %v809 = vsel %vm378, %v806, 0
    %v812 = vsel %vm378, %v807, 0
    %814 = vmatprep.subr.bf16.mxu0 0
    %815 = vmatpush1.bf16.xpose.msra.mxu0 %v812
    %816 = vmatprep.subr.bf16.mxu0 0
    %817 = vmatpush1.bf16.xpose.msra.mxu0 0
    %818 = vmatprep.subr.bf16.mxu0 0
    %819 = vmatpush1.bf16.xpose.msra.mxu0 0
    %820 = vmatprep.subr.bf16.mxu0 0
    %821 = vmatpush1.bf16.xpose.msra.mxu0 0
    %822 = vmatprep.subr.bf16.mxu0 0
    %823 = vmatpush1.bf16.xpose.msra.mxu0 0
    %824 = vmatprep.subr.bf16.mxu0 0
    %825 = vmatpush1.bf16.xpose.msra.mxu0 0
    %826 = vmatprep.subr.bf16.mxu0 0
    %827 = vmatpush1.bf16.xpose.msra.mxu0 0
    %828 = vmatprep.subr.bf16.mxu0 0
    %829 = vmatpush1.bf16.xpose.msra.mxu0 0
    %830 = vmatprep.subr.bf16.mxu0 0
    %831 = vmatpush1.bf16.xpose.msra.mxu0 0
    %832 = vmatprep.subr.bf16.mxu0 0
    %833 = vmatpush1.bf16.xpose.msra.mxu0 0
    %834 = vmatprep.subr.bf16.mxu0 0
    %835 = vmatpush1.bf16.xpose.msra.mxu0 0
    %836 = vmatprep.subr.bf16.mxu0 0
    %837 = vmatpush1.bf16.xpose.msra.mxu0 0
    %838 = vmatprep.subr.bf16.mxu0 0
    %839 = vmatpush1.bf16.xpose.msra.mxu0 0
    %840 = vmatprep.subr.bf16.mxu0 0
    %841 = vmatpush1.bf16.xpose.msra.mxu0 0
    %842 = vmatprep.subr.bf16.mxu0 0
    %843 = vmatpush1.bf16.xpose.msra.mxu0 0
    %844 = vmatprep.subr.bf16.mxu0 0
    %845 = vmatpush1.bf16.xpose.msra.mxu0 0
    %846 = vmatprep.mubr.bf16.mxu0 0
    %847 = vmatmul.mubr.bf16.gmra.mrb[0].mxu0 %v809
    %v848 = vpop.f32.mrb[0].mxu0
    %v849 = vadd.f32 0.0, %v848
    %v850 = vpop.f32.mrb[0].mxu0
    %v851 = vpop.f32.mrb[0].mxu0
    %v852 = vpop.f32.mrb[0].mxu0
    %853 = vdwg.mxu0
    %v854 = vpack.c.bf16 %v579, %v444
    %v855 = vpack.c.bf16 %v849, %v714
    %v856 = vld [vmem:[#allocation2 + $0x6] sm:$0x1]
    %v857 = vlaneseq
    %v858 = vshrl.u32 %v857, 7
    %v859 = vsub.s32 0, %v858
    %v860 = vrot.slane %v856, %v859
    %861 = vxpose.xlu0.c.b16.start [1/8] %v854, 128
    %862 = vxpose.xlu0.c.b16.cont [2/8] %v855, 128
    %863 = vxpose.xlu0.c.b16.cont [3/8] 0, 128
    %864 = vxpose.xlu0.c.b16.cont [4/8] 0, 128
    %865 = vxpose.xlu0.c.b16.cont [5/8] 0, 128
    %866 = vxpose.xlu0.c.b16.cont [6/8] 0, 128
    %867 = vxpose.xlu0.c.b16.cont [7/8] 0, 128
    %868 = vxpose.xlu0.c.b16.end [8/8] 0, 128
    %v869 = vpop.trf.xlu0
    %v870 = vpop.trf.xlu0
    %v871 = vpop.trf.xlu0
    %v872 = vpop.trf.xlu0
    %v873 = vpop.trf.xlu0
    %v874 = vpop.trf.xlu0
    %v875 = vpop.trf.xlu0
    %v876 = vpop.trf.xlu0
    %v881 = vunpack.c.l.b16 %v90
    %v882 = vunpack.c.l.b16 %v91
    %v883 = vunpack.c.l.b16 %v92
    %v884 = vunpack.c.l.b16 %v93
    %v885 = vpack.c.b16 %v882, %v881
    %v886 = vpack.c.b16 %v884, %v883
    %v890 = vsel %vm38, %v869, 0
    %892 = vmatprep.subr.bf16.mxu0 0
    %893 = vmatpush1.bf16.msra.mxu0 %v885
    %894 = vmatprep.subr.bf16.mxu0 0
    %895 = vmatpush1.bf16.msra.mxu0 %v886
    %896 = vmatprep.subr.bf16.mxu0 0
    %897 = vmatpush1.bf16.msra.mxu0 0
    %898 = vmatprep.subr.bf16.mxu0 0
    %899 = vmatpush1.bf16.msra.mxu0 0
    %900 = vmatprep.subr.bf16.mxu0 0
    %901 = vmatpush1.bf16.msra.mxu0 0
    %902 = vmatprep.subr.bf16.mxu0 0
    %903 = vmatpush1.bf16.msra.mxu0 0
    %904 = vmatprep.subr.bf16.mxu0 0
    %905 = vmatpush1.bf16.msra.mxu0 0
    %906 = vmatprep.subr.bf16.mxu0 0
    %907 = vmatpush1.bf16.msra.mxu0 0
    %908 = vmatprep.subr.bf16.mxu0 0
    %909 = vmatpush1.bf16.msra.mxu0 0
    %910 = vmatprep.subr.bf16.mxu0 0
    %911 = vmatpush1.bf16.msra.mxu0 0
    %912 = vmatprep.subr.bf16.mxu0 0
    %913 = vmatpush1.bf16.msra.mxu0 0
    %914 = vmatprep.subr.bf16.mxu0 0
    %915 = vmatpush1.bf16.msra.mxu0 0
    %916 = vmatprep.subr.bf16.mxu0 0
    %917 = vmatpush1.bf16.msra.mxu0 0
    %918 = vmatprep.subr.bf16.mxu0 0
    %919 = vmatpush1.bf16.msra.mxu0 0
    %920 = vmatprep.subr.bf16.mxu0 0
    %921 = vmatpush1.bf16.msra.mxu0 0
    %922 = vmatprep.subr.bf16.mxu0 0
    %923 = vmatpush1.bf16.msra.mxu0 0
    %924 = vmatprep.mubr.bf16.mxu0 0
    %925 = vmatmul.mubr.bf16.gmra.mrb[0].mxu0 %v890
    %v926 = vpop.f32.mrb[0].mxu0
    %v927 = vadd.f32 %v860, %v926
    %v928 = vpop.f32.mrb[0].mxu0
    %v929 = vpop.f32.mrb[0].mxu0
    %v930 = vadd.f32 %v860, %v929
    %v931 = vpop.f32.mrb[0].mxu0
    %932 = vdwg.mxu0
    %v933 = vadd.f32 %v927, %v76
    %v934 = vadd.f32 %v930, %v77
    %v935 = vld [vmem:[#allocation2 + $0x2] sm:$0x1]
    %v936 = vld [vmem:[#allocation2 + $0x3] sm:$0x1]
    %v937 = vsel %vm38, %v933, 0.0
    %938 = vadd.xlane.f32.xlu0 %v937
    %v939 = vpop.xlane.xlu0 %938
    %v940 = vsel %vm38, %v934, 0.0
    %941 = vadd.xlane.f32.xlu0 %v940
    %v942 = vpop.xlane.xlu0 %941
    %v943 = vmul.f32 %v939, %v45
    %v944 = vmul.f32 %v942, %v45
    %v945 = vsub.f32 %v933, %v943
    %v946 = vsub.f32 %v934, %v944
    %v947 = vmul.f32 %v945, %v945
    %v948 = vmul.f32 %v946, %v946
    %v949 = vsel %vm38, %v947, 0.0
    %950 = vadd.xlane.f32.xlu0 %v949
    %v951 = vpop.xlane.xlu0 %950
    %v952 = vsel %vm38, %v948, 0.0
    %953 = vadd.xlane.f32.xlu0 %v952
    %v954 = vpop.xlane.xlu0 %953
    %v955 = vmul.f32 %v951, %v45
    %v956 = vmul.f32 %v954, %v45
    %v957 = vadd.f32 %v955, 1e-12
    %v958 = vadd.f32 %v956, 1e-12
    %v959 = vrsqrt.pop %v957
    %v960 = vrsqrt.pop %v958
    %v961 = vmul.f32 %v945, %v959
    %v962 = vmul.f32 %v946, %v960
    %v963 = vlaneseq
    %v964 = vshrl.u32 %v963, 7
    %v965 = vsub.s32 0, %v964
    %v966 = vrot.slane %v935, %v965
    %v967 = vmul.f32 %v961, %v966
    %v968 = vmul.f32 %v962, %v966
    %v969 = vlaneseq
    %v970 = vshrl.u32 %v969, 7
    %v971 = vsub.s32 0, %v970
    %v972 = vrot.slane %v936, %v971
    %v973 = vadd.f32 %v967, %v972
    %v974 = vadd.f32 %v968, %v972
    %v975 = vpack.c.bf16 %v974, %v973
    %v976 = vld [vmem:[#allocation2 + $0x7] sm:$0x1]
    %v977 = vlaneseq
    %v978 = vshrl.u32 %v977, 7
    %v979 = vsub.s32 0, %v978
    %v980 = vrot.slane %v976, %v979
    %v985 = vunpack.c.l.b16 %v94
    %v986 = vunpack.c.l.b16 %v95
    %v987 = vunpack.c.l.b16 %v96
    %v988 = vunpack.c.l.b16 %v97
    %v989 = vpack.c.b16 %v986, %v985
    %v990 = vpack.c.b16 %v988, %v987
    %v994 = vsel %vm38, %v975, 0
    %996 = vmatprep.subr.bf16.mxu0 0
    %997 = vmatpush1.bf16.msra.mxu0 %v989
    %998 = vmatprep.subr.bf16.mxu0 0
    %999 = vmatpush1.bf16.msra.mxu0 %v990
    %1000 = vmatprep.subr.bf16.mxu0 0
    %1001 = vmatpush1.bf16.msra.mxu0 0
    %1002 = vmatprep.subr.bf16.mxu0 0
    %1003 = vmatpush1.bf16.msra.mxu0 0
    %1004 = vmatprep.subr.bf16.mxu0 0
    %1005 = vmatpush1.bf16.msra.mxu0 0
    %1006 = vmatprep.subr.bf16.mxu0 0
    %1007 = vmatpush1.bf16.msra.mxu0 0
    %1008 = vmatprep.subr.bf16.mxu0 0
    %1009 = vmatpush1.bf16.msra.mxu0 0
    %1010 = vmatprep.subr.bf16.mxu0 0
    %1011 = vmatpush1.bf16.msra.mxu0 0
    %1012 = vmatprep.subr.bf16.mxu0 0
    %1013 = vmatpush1.bf16.msra.mxu0 0
    %1014 = vmatprep.subr.bf16.mxu0 0
    %1015 = vmatpush1.bf16.msra.mxu0 0
    %1016 = vmatprep.subr.bf16.mxu0 0
    %1017 = vmatpush1.bf16.msra.mxu0 0
    %1018 = vmatprep.subr.bf16.mxu0 0
    %1019 = vmatpush1.bf16.msra.mxu0 0
    %1020 = vmatprep.subr.bf16.mxu0 0
    %1021 = vmatpush1.bf16.msra.mxu0 0
    %1022 = vmatprep.subr.bf16.mxu0 0
    %1023 = vmatpush1.bf16.msra.mxu0 0
    %1024 = vmatprep.subr.bf16.mxu0 0
    %1025 = vmatpush1.bf16.msra.mxu0 0
    %1026 = vmatprep.subr.bf16.mxu0 0
    %1027 = vmatpush1.bf16.msra.mxu0 0
    %1028 = vmatprep.mubr.bf16.mxu0 0
    %1029 = vmatmul.mubr.bf16.gmra.mrb[0].mxu0 %v994
    %v1030 = vpop.f32.mrb[0].mxu0
    %v1031 = vadd.f32 %v980, %v1030
    %v1032 = vpop.f32.mrb[0].mxu0
    %v1033 = vpop.f32.mrb[0].mxu0
    %v1034 = vadd.f32 %v980, %v1033
    %v1035 = vpop.f32.mrb[0].mxu0
    %1036 = vdwg.mxu0
    %v1037 = vmul.f32 %v1031, 0.5
    %v1038 = vmul.f32 %v1034, 0.5
    %v1039 = vmul.f32 %v1031, 0.044715
    %v1040 = vmul.f32 %v1034, 0.044715
    %v1041 = vmul.f32 %v1039, %v1031
    %v1042 = vmul.f32 %v1040, %v1034
    %v1043 = vmul.f32 %v1041, %v1031
    %v1044 = vmul.f32 %v1042, %v1034
    %v1045 = vadd.f32 %v1031, %v1043
    %v1046 = vadd.f32 %v1034, %v1044
    %v1047 = vmul.f32 %v1045, 0.7978846
    %v1048 = vmul.f32 %v1046, 0.7978846
    %v1049 = vtanh.pop %v1047
    %v1050 = vtanh.pop %v1048
    %v1051 = vadd.f32 %v1049, 1.0
    %v1052 = vadd.f32 %v1050, 1.0
    %v1053 = vmul.f32 %v1037, %v1051
    %v1054 = vmul.f32 %v1038, %v1052
    %v1055 = vpack.c.bf16 %v1054, %v1053
    %v1056 = vld [vmem:[#allocation2 + $0x8] sm:$0x1]
    %v1057 = vlaneseq
    %v1058 = vshrl.u32 %v1057, 7
    %v1059 = vsub.s32 0, %v1058
    %v1060 = vrot.slane %v1056, %v1059
    %v1069 = vunpack.c.l.b16 %v98
    %v1070 = vunpack.c.l.b16 %v99
    %v1071 = vunpack.c.l.b16 %v100
    %v1072 = vunpack.c.l.b16 %v101
    %v1073 = vunpack.c.l.b16 %v102
    %v1074 = vunpack.c.l.b16 %v103
    %v1075 = vunpack.c.l.b16 %v104
    %v1076 = vunpack.c.l.b16 %v105
    %v1077 = vpack.c.b16 %v1070, %v1069
    %v1078 = vpack.c.b16 %v1072, %v1071
    %v1079 = vpack.c.b16 %v1074, %v1073
    %v1080 = vpack.c.b16 %v1076, %v1075
    %vm1085 = vcmask 523264
    %v1087 = vsel %vm1085, %v1055, 0
    %1089 = vmatprep.subr.bf16.mxu0 0
    %1090 = vmatpush1.bf16.msra.mxu0 %v1077
    %1091 = vmatprep.subr.bf16.mxu0 0
    %1092 = vmatpush1.bf16.msra.mxu0 %v1078
    %1093 = vmatprep.subr.bf16.mxu0 0
    %1094 = vmatpush1.bf16.msra.mxu0 %v1079
    %1095 = vmatprep.subr.bf16.mxu0 0
    %1096 = vmatpush1.bf16.msra.mxu0 %v1080
    %1097 = vmatprep.subr.bf16.mxu0 0
    %1098 = vmatpush1.bf16.msra.mxu0 0
    %1099 = vmatprep.subr.bf16.mxu0 0
    %1100 = vmatpush1.bf16.msra.mxu0 0
    %1101 = vmatprep.subr.bf16.mxu0 0
    %1102 = vmatpush1.bf16.msra.mxu0 0
    %1103 = vmatprep.subr.bf16.mxu0 0
    %1104 = vmatpush1.bf16.msra.mxu0 0
    %1105 = vmatprep.subr.bf16.mxu0 0
    %1106 = vmatpush1.bf16.msra.mxu0 0
    %1107 = vmatprep.subr.bf16.mxu0 0
    %1108 = vmatpush1.bf16.msra.mxu0 0
    %1109 = vmatprep.subr.bf16.mxu0 0
    %1110 = vmatpush1.bf16.msra.mxu0 0
    %1111 = vmatprep.subr.bf16.mxu0 0
    %1112 = vmatpush1.bf16.msra.mxu0 0
    %1113 = vmatprep.subr.bf16.mxu0 0
    %1114 = vmatpush1.bf16.msra.mxu0 0
    %1115 = vmatprep.subr.bf16.mxu0 0
    %1116 = vmatpush1.bf16.msra.mxu0 0
    %1117 = vmatprep.subr.bf16.mxu0 0
    %1118 = vmatpush1.bf16.msra.mxu0 0
    %1119 = vmatprep.subr.bf16.mxu0 0
    %1120 = vmatpush1.bf16.msra.mxu0 0
    %1121 = vmatprep.mubr.bf16.mxu0 0
    %1122 = vmatmul.mubr.bf16.gmra.mrb[0].mxu0 %v1087
    %v1123 = vpop.f32.mrb[0].mxu0
    %v1124 = vadd.f32 %v1060, %v1123
    %v1125 = vpop.f32.mrb[0].mxu0
    %v1126 = vpop.f32.mrb[0].mxu0
    %v1127 = vadd.f32 %v1060, %v1126
    %v1128 = vpop.f32.mrb[0].mxu0
    %1129 = vdwg.mxu0
    %v1130 = vadd.f32 %v1124, %v973
    %v1131 = vadd.f32 %v1127, %v974
    %v1132 = vld [vmem:[#allocation2 + $0x4] sm:$0x1]
    %v1133 = vld [vmem:[#allocation2 + $0x5] sm:$0x1]
    %v1134 = vsel %vm38, %v1130, 0.0
    %1135 = vadd.xlane.f32.xlu0 %v1134
    %v1136 = vpop.xlane.xlu0 %1135
    %v1137 = vsel %vm38, %v1131, 0.0
    %1138 = vadd.xlane.f32.xlu0 %v1137
    %v1139 = vpop.xlane.xlu0 %1138
    %v1140 = vmul.f32 %v1136, %v45
    %v1141 = vmul.f32 %v1139, %v45
    %v1142 = vsub.f32 %v1130, %v1140
    %v1143 = vsub.f32 %v1131, %v1141
    %v1144 = vmul.f32 %v1142, %v1142
    %v1145 = vmul.f32 %v1143, %v1143
    %v1146 = vsel %vm38, %v1144, 0.0
    %1147 = vadd.xlane.f32.xlu0 %v1146
    %v1148 = vpop.xlane.xlu0 %1147
    %v1149 = vsel %vm38, %v1145, 0.0
    %1150 = vadd.xlane.f32.xlu0 %v1149
    %v1151 = vpop.xlane.xlu0 %1150
    %v1152 = vmul.f32 %v1148, %v45
    %v1153 = vmul.f32 %v1151, %v45
    %v1154 = vadd.f32 %v1152, 1e-12
    %v1155 = vadd.f32 %v1153, 1e-12
    %v1156 = vrsqrt.pop %v1154
    %v1157 = vrsqrt.pop %v1155
    %v1158 = vmul.f32 %v1142, %v1156
    %v1159 = vmul.f32 %v1143, %v1157
    %v1160 = vlaneseq
    %v1161 = vshrl.u32 %v1160, 7
    %v1162 = vsub.s32 0, %v1161
    %v1163 = vrot.slane %v1132, %v1162
    %v1164 = vmul.f32 %v1158, %v1163
    %v1165 = vmul.f32 %v1159, %v1163
    %v1166 = vlaneseq
    %v1167 = vshrl.u32 %v1166, 7
    %v1168 = vsub.s32 0, %v1167
    %v1169 = vrot.slane %v1133, %v1168
    %v1170 = vadd.f32 %v1164, %v1169
    %v1171 = vadd.f32 %v1165, %v1169
    %v1172 = vld [vmem:[%s2 + $0x70] sm:$0xf]
    %v1173 = vld [vmem:[%s2 + $0x74] sm:$0xf]
    %v1174 = vld [vmem:[%s2 + $0x78] sm:$0xf]
    %v1175 = vld [vmem:[%s2 + $0x7c] sm:$0xf]
    %v1176 = vld [vmem:[%s2 + $0x80] sm:$0xf]
    %v1177 = vld [vmem:[%s2 + $0x84] sm:$0xf]
    %v1178 = vld [vmem:[%s2 + $0x88] sm:$0xf]
    %v1179 = vld [vmem:[%s2 + $0x8c] sm:$0xf]
    %v1180 = vld [vmem:[%s2 + $0x90] sm:$0xf]
    %v1181 = vld [vmem:[%s2 + $0x94] sm:$0xf]
    %v1182 = vld [vmem:[%s2 + $0x98] sm:$0xf]
    %v1183 = vld [vmem:[%s2 + $0x9c] sm:$0xf]
    %v1184 = vld [vmem:[%s2 + $0xa0] sm:$0xf]
    %v1185 = vld [vmem:[%s2 + $0xa4] sm:$0xf]
    %v1186 = vld [vmem:[%s2 + $0xa8] sm:$0xf]
    %v1187 = vld [vmem:[%s2 + $0xac] sm:$0xf]
    %v1188 = vld [vmem:[%s2 + $0xb0] sm:$0xf]
    %v1189 = vld [vmem:[%s2 + $0xb4] sm:$0xf]
    %v1190 = vld [vmem:[%s2 + $0xb8] sm:$0xf]
    %v1191 = vld [vmem:[%s2 + $0xbc] sm:$0xf]
    %v1192 = vld [vmem:[%s2 + $0xc0] sm:$0xf]
    %v1193 = vld [vmem:[%s2 + $0xc4] sm:$0xf]
    %v1194 = vld [vmem:[%s2 + $0xc8] sm:$0xf]
    %v1195 = vld [vmem:[%s2 + $0xcc] sm:$0xf]
    %v1196 = vld [vmem:[%s2 + $0xd0] sm:$0xf]
    %v1197 = vld [vmem:[%s2 + $0xd4] sm:$0xf]
    %v1198 = vld [vmem:[%s2 + $0xd8] sm:$0xf]
    %v1199 = vld [vmem:[%s2 + $0xdc] sm:$0xf]
    %v1200 = vpack.c.bf16 %v1171, %v1170
    %1201 = vset.pattern.permute.xlu0 1
    %1202 = vperm.xlu0 %1201, %v107
    %v1203 = vpop.permute.xlu0 %1202
    %1205 = vset.pattern.permute.xlu0 1
    %1206 = vperm.xlu0 %1205, %v108
    %v1207 = vpop.permute.xlu0 %1206
    %1209 = vset.pattern.permute.xlu0 1
    %1210 = vperm.xlu0 %1209, %v109
    %v1211 = vpop.permute.xlu0 %1210
    %1213 = vset.pattern.permute.xlu0 1
    %1214 = vperm.xlu0 %1213, %v110
    %v1215 = vpop.permute.xlu0 %1214
    %1217 = vset.pattern.permute.xlu0 1
    %1218 = vperm.xlu0 %1217, %v111
    %v1219 = vpop.permute.xlu0 %1218
    %1221 = vset.pattern.permute.xlu0 1
    %1222 = vperm.xlu0 %1221, %v112
    %v1223 = vpop.permute.xlu0 %1222
    %1225 = vset.pattern.permute.xlu0 1
    %1226 = vperm.xlu0 %1225, %v113
    %v1227 = vpop.permute.xlu0 %1226
    %1229 = vset.pattern.permute.xlu0 1
    %1230 = vperm.xlu0 %1229, %v114
    %v1231 = vpop.permute.xlu0 %1230
    %1233 = vset.pattern.permute.xlu0 1
    %1234 = vperm.xlu0 %1233, %v115
    %v1235 = vpop.permute.xlu0 %1234
    %1237 = vset.pattern.permute.xlu0 1
    %1238 = vperm.xlu0 %1237, %v116
    %v1239 = vpop.permute.xlu0 %1238
    %1241 = vset.pattern.permute.xlu0 1
    %1242 = vperm.xlu0 %1241, %v117
    %v1243 = vpop.permute.xlu0 %1242
    %1245 = vset.pattern.permute.xlu0 1
    %1246 = vperm.xlu0 %1245, %v118
    %v1247 = vpop.permute.xlu0 %1246
    %v1261 = vunpack.c.l.b16 %v1172
    %v1262 = vunpack.c.l.b16 %v1173
    %v1263 = vunpack.c.l.b16 %v1174
    %v1264 = vunpack.c.l.b16 %v1175
    %v1265 = vunpack.c.l.b16 %v1176
    %v1266 = vunpack.c.l.b16 %v1177
    %v1267 = vunpack.c.l.b16 %v1178
    %v1268 = vunpack.c.l.b16 %v1179
    %v1269 = vunpack.c.l.b16 %v1180
    %v1270 = vunpack.c.l.b16 %v1181
    %v1271 = vunpack.c.l.b16 %v1182
    %v1272 = vunpack.c.l.b16 %v1183
    %v1273 = vpack.c.b16 %v1262, %v1261
    %v1274 = vpack.c.b16 %v1264, %v1263
    %v1275 = vpack.c.b16 %v1266, %v1265
    %v1276 = vpack.c.b16 %v1268, %v1267
    %v1277 = vpack.c.b16 %v1270, %v1269
    %v1278 = vpack.c.b16 %v1272, %v1271
    %v1280 = vsel %vm38, %v1273, 0
    %v1283 = vsel %vm38, %v1274, 0
    %v1286 = vsel %vm38, %v1275, 0
    %v1289 = vsel %vm38, %v1276, 0
    %v1292 = vsel %vm38, %v1277, 0
    %v1295 = vsel %vm38, %v1278, 0
    %v1298 = vsel %vm38, %v1200, 0
    %1300 = vmatprep.subr.bf16.mxu0 0
    %1301 = vmatpush1.bf16.xpose.msra.mxu0 %v1298
    %1302 = vmatprep.subr.bf16.mxu0 0
    %1303 = vmatpush1.bf16.xpose.msra.mxu0 0
    %1304 = vmatprep.subr.bf16.mxu0 0
    %1305 = vmatpush1.bf16.xpose.msra.mxu0 0
    %1306 = vmatprep.subr.bf16.mxu0 0
    %1307 = vmatpush1.bf16.xpose.msra.mxu0 0
    %1308 = vmatprep.subr.bf16.mxu0 0
    %1309 = vmatpush1.bf16.xpose.msra.mxu0 0
    %1310 = vmatprep.subr.bf16.mxu0 0
    %1311 = vmatpush1.bf16.xpose.msra.mxu0 0
    %1312 = vmatprep.subr.bf16.mxu0 0
    %1313 = vmatpush1.bf16.xpose.msra.mxu0 0
    %1314 = vmatprep.subr.bf16.mxu0 0
    %1315 = vmatpush1.bf16.xpose.msra.mxu0 0
    %1316 = vmatprep.subr.bf16.mxu0 0
    %1317 = vmatpush1.bf16.xpose.msra.mxu0 0
    %1318 = vmatprep.subr.bf16.mxu0 0
    %1319 = vmatpush1.bf16.xpose.msra.mxu0 0
    %1320 = vmatprep.subr.bf16.mxu0 0
    %1321 = vmatpush1.bf16.xpose.msra.mxu0 0
    %1322 = vmatprep.subr.bf16.mxu0 0
    %1323 = vmatpush1.bf16.xpose.msra.mxu0 0
    %1324 = vmatprep.subr.bf16.mxu0 0
    %1325 = vmatpush1.bf16.xpose.msra.mxu0 0
    %1326 = vmatprep.subr.bf16.mxu0 0
    %1327 = vmatpush1.bf16.xpose.msra.mxu0 0
    %1328 = vmatprep.subr.bf16.mxu0 0
    %1329 = vmatpush1.bf16.xpose.msra.mxu0 0
    %1330 = vmatprep.subr.bf16.mxu0 0
    %1331 = vmatpush1.bf16.xpose.msra.mxu0 0
    %1332 = vmatprep.mubr.bf16.mxu0 0
    %1333 = vmatmul.mubr.bf16.gmra.mrb[0].mxu0 %v1280
    %v1334 = vpop.f32.mrb[0].mxu0
    %v1335 = vadd.f32 %v1203, %v1334
    %v1336 = vpop.f32.mrb[0].mxu0
    %v1337 = vpop.f32.mrb[0].mxu0
    %v1338 = vadd.f32 %v1207, %v1337
    %v1339 = vpop.f32.mrb[0].mxu0
    %1340 = vmatprep.mubr.bf16.mxu0 0
    %1341 = vmatmul.mubr.bf16.gmra.mrb[0].mxu0 %v1283
    %v1342 = vpop.f32.mrb[0].mxu0
    %v1343 = vadd.f32 %v1211, %v1342
    %v1344 = vpop.f32.mrb[0].mxu0
    %v1345 = vpop.f32.mrb[0].mxu0
    %v1346 = vadd.f32 %v1215, %v1345
    %v1347 = vpop.f32.mrb[0].mxu0
    %1348 = vmatprep.mubr.bf16.mxu0 0
    %1349 = vmatmul.mubr.bf16.gmra.mrb[0].mxu0 %v1286
    %v1350 = vpop.f32.mrb[0].mxu0
    %v1351 = vadd.f32 %v1219, %v1350
    %v1352 = vpop.f32.mrb[0].mxu0
    %v1353 = vpop.f32.mrb[0].mxu0
    %v1354 = vadd.f32 %v1223, %v1353
    %v1355 = vpop.f32.mrb[0].mxu0
    %1356 = vmatprep.mubr.bf16.mxu0 0
    %1357 = vmatmul.mubr.bf16.gmra.mrb[0].mxu0 %v1289
    %v1358 = vpop.f32.mrb[0].mxu0
    %v1359 = vadd.f32 %v1227, %v1358
    %v1360 = vpop.f32.mrb[0].mxu0
    %v1361 = vpop.f32.mrb[0].mxu0
    %v1362 = vadd.f32 %v1231, %v1361
    %v1363 = vpop.f32.mrb[0].mxu0
    %1364 = vmatprep.mubr.bf16.mxu0 0
    %1365 = vmatmul.mubr.bf16.gmra.mrb[0].mxu0 %v1292
    %v1366 = vpop.f32.mrb[0].mxu0
    %v1367 = vadd.f32 %v1235, %v1366
    %v1368 = vpop.f32.mrb[0].mxu0
    %v1369 = vpop.f32.mrb[0].mxu0
    %v1370 = vadd.f32 %v1239, %v1369
    %v1371 = vpop.f32.mrb[0].mxu0
    %1372 = vmatprep.mubr.bf16.mxu0 0
    %1373 = vmatmul.mubr.bf16.gmra.mrb[0].mxu0 %v1295
    %v1374 = vpop.f32.mrb[0].mxu0
    %v1375 = vadd.f32 %v1243, %v1374
    %v1376 = vpop.f32.mrb[0].mxu0
    %v1377 = vpop.f32.mrb[0].mxu0
    %v1378 = vadd.f32 %v1247, %v1377
    %v1379 = vpop.f32.mrb[0].mxu0
    %1380 = vdwg.mxu0
    %v1381 = vpack.c.bf16 %v1335, %v1335
    %v1382 = vpack.c.bf16 %v1351, %v1351
    %1383 = vxpose.xlu0.c.b16.start [1/8] %v1381, 128
    %1384 = vxpose.xlu0.c.b16.cont [2/8] 0, 128
    %1385 = vxpose.xlu0.c.b16.cont [3/8] 0, 128
    %1386 = vxpose.xlu0.c.b16.cont [4/8] 0, 128
    %1387 = vxpose.xlu0.c.b16.cont [5/8] 0, 128
    %1388 = vxpose.xlu0.c.b16.cont [6/8] 0, 128
    %1389 = vxpose.xlu0.c.b16.cont [7/8] 0, 128
    %1390 = vxpose.xlu0.c.b16.end [8/8] 0, 128
    %v1391 = vpop.trf.xlu0
    %v1392 = vpop.trf.xlu0
    %v1393 = vpop.trf.xlu0
    %v1394 = vpop.trf.xlu0
    %v1395 = vpop.trf.xlu0
    %v1396 = vpop.trf.xlu0
    %v1397 = vpop.trf.xlu0
    %v1398 = vpop.trf.xlu0
    %v1400 = vsel %vm329, %v1391, 0
    %v1403 = vsel %vm333, %v1382, 0
    %1405 = vmatprep.subr.bf16.mxu0 0
    %1406 = vmatpush1.bf16.msra.mxu0 %v1403
    %1407 = vmatprep.subr.bf16.mxu0 0
    %1408 = vmatpush1.bf16.msra.mxu0 0
    %1409 = vmatprep.subr.bf16.mxu0 0
    %1410 = vmatpush1.bf16.msra.mxu0 0
    %1411 = vmatprep.subr.bf16.mxu0 0
    %1412 = vmatpush1.bf16.msra.mxu0 0
    %1413 = vmatprep.subr.bf16.mxu0 0
    %1414 = vmatpush1.bf16.msra.mxu0 0
    %1415 = vmatprep.subr.bf16.mxu0 0
    %1416 = vmatpush1.bf16.msra.mxu0 0
    %1417 = vmatprep.subr.bf16.mxu0 0
    %1418 = vmatpush1.bf16.msra.mxu0 0
    %1419 = vmatprep.subr.bf16.mxu0 0
    %1420 = vmatpush1.bf16.msra.mxu0 0
    %1421 = vmatprep.subr.bf16.mxu0 0
    %1422 = vmatpush1.bf16.msra.mxu0 0
    %1423 = vmatprep.subr.bf16.mxu0 0
    %1424 = vmatpush1.bf16.msra.mxu0 0
    %1425 = vmatprep.subr.bf16.mxu0 0
    %1426 = vmatpush1.bf16.msra.mxu0 0
    %1427 = vmatprep.subr.bf16.mxu0 0
    %1428 = vmatpush1.bf16.msra.mxu0 0
    %1429 = vmatprep.subr.bf16.mxu0 0
    %1430 = vmatpush1.bf16.msra.mxu0 0
    %1431 = vmatprep.subr.bf16.mxu0 0
    %1432 = vmatpush1.bf16.msra.mxu0 0
    %1433 = vmatprep.subr.bf16.mxu0 0
    %1434 = vmatpush1.bf16.msra.mxu0 0
    %1435 = vmatprep.subr.bf16.mxu0 0
    %1436 = vmatpush1.bf16.msra.mxu0 0
    %1437 = vmatprep.mubr.bf16.mxu0 0
    %1438 = vmatmul.mubr.bf16.gmra.mrb[0].mxu0 %v1400
    %v1439 = vpop.f32.mrb[0].mxu0
    %v1440 = vadd.f32 %v32, %v1439
    %v1441 = vpop.f32.mrb[0].mxu0
    %v1442 = vpop.f32.mrb[0].mxu0
    %v1443 = vadd.f32 %v33, %v1442
    %v1444 = vpop.f32.mrb[0].mxu0
    %1445 = vdwg.mxu0
    %v1446 = vsel %vm378, %v1440, -inf
    %1447 = vmax.xlane.f32.xlu0 %v1446
    %v1448 = vpop.xlane.xlu0 %1447
    %v1449 = vsel %vm378, %v1443, -inf
    %1450 = vmax.xlane.f32.xlu0 %v1449
    %v1451 = vpop.xlane.xlu0 %1450
    %v1452 = vsub.f32 %v1440, %v1448
    %v1453 = vsub.f32 %v1443, %v1451
    %v1454 = vmul.f32 %v1452, 1.442695
    %v1455 = vpow.pop %v1454
    %v1456 = vmul.f32 %v1453, 1.442695
    %v1457 = vpow.pop %v1456
    %v1458 = vsel %vm378, %v1455, 0.0
    %1459 = vadd.xlane.f32.xlu0 %v1458
    %v1460 = vpop.xlane.xlu0 %1459
    %v1461 = vsel %vm378, %v1457, 0.0
    %1462 = vadd.xlane.f32.xlu0 %v1461
    %v1463 = vpop.xlane.xlu0 %1462
    %v1464 = vrcp.pop %v1460
    %v1465 = vrcp.pop %v1463
    %v1466 = vmul.f32 %v1455, %v1464
    %v1467 = vmul.f32 %v1457, %v1465
    %v1468 = vpack.c.bf16 %v1367, %v1367
    %v1469 = vpack.c.bf16 %v1467, %v1466
    %v1471 = vsel %vm378, %v1468, 0
    %v1474 = vsel %vm378, %v1469, 0
    %1476 = vmatprep.subr.bf16.mxu0 0
    %1477 = vmatpush1.bf16.xpose.msra.mxu0 %v1474
    %1478 = vmatprep.subr.bf16.mxu0 0
    %1479 = vmatpush1.bf16.xpose.msra.mxu0 0
    %1480 = vmatprep.subr.bf16.mxu0 0
    %1481 = vmatpush1.bf16.xpose.msra.mxu0 0
    %1482 = vmatprep.subr.bf16.mxu0 0
    %1483 = vmatpush1.bf16.xpose.msra.mxu0 0
    %1484 = vmatprep.subr.bf16.mxu0 0
    %1485 = vmatpush1.bf16.xpose.msra.mxu0 0
    %1486 = vmatprep.subr.bf16.mxu0 0
    %1487 = vmatpush1.bf16.xpose.msra.mxu0 0
    %1488 = vmatprep.subr.bf16.mxu0 0
    %1489 = vmatpush1.bf16.xpose.msra.mxu0 0
    %1490 = vmatprep.subr.bf16.mxu0 0
    %1491 = vmatpush1.bf16.xpose.msra.mxu0 0
    %1492 = vmatprep.subr.bf16.mxu0 0
    %1493 = vmatpush1.bf16.xpose.msra.mxu0 0
    %1494 = vmatprep.subr.bf16.mxu0 0
    %1495 = vmatpush1.bf16.xpose.msra.mxu0 0
    %1496 = vmatprep.subr.bf16.mxu0 0
    %1497 = vmatpush1.bf16.xpose.msra.mxu0 0
    %1498 = vmatprep.subr.bf16.mxu0 0
    %1499 = vmatpush1.bf16.xpose.msra.mxu0 0
    %1500 = vmatprep.subr.bf16.mxu0 0
    %1501 = vmatpush1.bf16.xpose.msra.mxu0 0
    %1502 = vmatprep.subr.bf16.mxu0 0
    %1503 = vmatpush1.bf16.xpose.msra.mxu0 0
    %1504 = vmatprep.subr.bf16.mxu0 0
    %1505 = vmatpush1.bf16.xpose.msra.mxu0 0
    %1506 = vmatprep.subr.bf16.mxu0 0
    %1507 = vmatpush1.bf16.xpose.msra.mxu0 0
    %1508 = vmatprep.mubr.bf16.mxu0 0
    %1509 = vmatmul.mubr.bf16.gmra.mrb[0].mxu0 %v1471
    %v1510 = vpop.f32.mrb[0].mxu0
    %v1511 = vadd.f32 0.0, %v1510
    %v1512 = vpop.f32.mrb[0].mxu0
    %v1513 = vpop.f32.mrb[0].mxu0
    %v1514 = vpop.f32.mrb[0].mxu0
    %1515 = vdwg.mxu0
    %v1516 = vpack.c.bf16 %v1338, %v1338
    %v1517 = vpack.c.bf16 %v1354, %v1354
    %1518 = vxpose.xlu0.c.b16.start [1/8] %v1516, 128
    %1519 = vxpose.xlu0.c.b16.cont [2/8] 0, 128
    %1520 = vxpose.xlu0.c.b16.cont [3/8] 0, 128
    %1521 = vxpose.xlu0.c.b16.cont [4/8] 0, 128
    %1522 = vxpose.xlu0.c.b16.cont [5/8] 0, 128
    %1523 = vxpose.xlu0.c.b16.cont [6/8] 0, 128
    %1524 = vxpose.xlu0.c.b16.cont [7/8] 0, 128
    %1525 = vxpose.xlu0.c.b16.end [8/8] 0, 128
    %v1526 = vpop.trf.xlu0
    %v1527 = vpop.trf.xlu0
    %v1528 = vpop.trf.xlu0
    %v1529 = vpop.trf.xlu0
    %v1530 = vpop.trf.xlu0
    %v1531 = vpop.trf.xlu0
    %v1532 = vpop.trf.xlu0
    %v1533 = vpop.trf.xlu0
    %v1535 = vsel %vm329, %v1526, 0
    %v1538 = vsel %vm333, %v1517, 0
    %1540 = vmatprep.subr.bf16.mxu0 0
    %1541 = vmatpush1.bf16.msra.mxu0 %v1538
    %1542 = vmatprep.subr.bf16.mxu0 0
    %1543 = vmatpush1.bf16.msra.mxu0 0
    %1544 = vmatprep.subr.bf16.mxu0 0
    %1545 = vmatpush1.bf16.msra.mxu0 0
    %1546 = vmatprep.subr.bf16.mxu0 0
    %1547 = vmatpush1.bf16.msra.mxu0 0
    %1548 = vmatprep.subr.bf16.mxu0 0
    %1549 = vmatpush1.bf16.msra.mxu0 0
    %1550 = vmatprep.subr.bf16.mxu0 0
    %1551 = vmatpush1.bf16.msra.mxu0 0
    %1552 = vmatprep.subr.bf16.mxu0 0
    %1553 = vmatpush1.bf16.msra.mxu0 0
    %1554 = vmatprep.subr.bf16.mxu0 0
    %1555 = vmatpush1.bf16.msra.mxu0 0
    %1556 = vmatprep.subr.bf16.mxu0 0
    %1557 = vmatpush1.bf16.msra.mxu0 0
    %1558 = vmatprep.subr.bf16.mxu0 0
    %1559 = vmatpush1.bf16.msra.mxu0 0
    %1560 = vmatprep.subr.bf16.mxu0 0
    %1561 = vmatpush1.bf16.msra.mxu0 0
    %1562 = vmatprep.subr.bf16.mxu0 0
    %1563 = vmatpush1.bf16.msra.mxu0 0
    %1564 = vmatprep.subr.bf16.mxu0 0
    %1565 = vmatpush1.bf16.msra.mxu0 0
    %1566 = vmatprep.subr.bf16.mxu0 0
    %1567 = vmatpush1.bf16.msra.mxu0 0
    %1568 = vmatprep.subr.bf16.mxu0 0
    %1569 = vmatpush1.bf16.msra.mxu0 0
    %1570 = vmatprep.subr.bf16.mxu0 0
    %1571 = vmatpush1.bf16.msra.mxu0 0
    %1572 = vmatprep.mubr.bf16.mxu0 0
    %1573 = vmatmul.mubr.bf16.gmra.mrb[0].mxu0 %v1535
    %v1574 = vpop.f32.mrb[0].mxu0
    %v1575 = vadd.f32 %v32, %v1574
    %v1576 = vpop.f32.mrb[0].mxu0
    %v1577 = vpop.f32.mrb[0].mxu0
    %v1578 = vadd.f32 %v33, %v1577
    %v1579 = vpop.f32.mrb[0].mxu0
    %1580 = vdwg.mxu0
    %v1581 = vsel %vm378, %v1575, -inf
    %1582 = vmax.xlane.f32.xlu0 %v1581
    %v1583 = vpop.xlane.xlu0 %1582
    %v1584 = vsel %vm378, %v1578, -inf
    %1585 = vmax.xlane.f32.xlu0 %v1584
    %v1586 = vpop.xlane.xlu0 %1585
    %v1587 = vsub.f32 %v1575, %v1583
    %v1588 = vsub.f32 %v1578, %v1586
    %v1589 = vmul.f32 %v1587, 1.442695
    %v1590 = vpow.pop %v1589
    %v1591 = vmul.f32 %v1588, 1.442695
    %v1592 = vpow.pop %v1591
    %v1593 = vsel %vm378, %v1590, 0.0
    %1594 = vadd.xlane.f32.xlu0 %v1593
    %v1595 = vpop.xlane.xlu0 %1594
    %v1596 = vsel %vm378, %v1592, 0.0
    %1597 = vadd.xlane.f32.xlu0 %v1596
    %v1598 = vpop.xlane.xlu0 %1597
    %v1599 = vrcp.pop %v1595
    %v1600 = vrcp.pop %v1598
    %v1601 = vmul.f32 %v1590, %v1599
    %v1602 = vmul.f32 %v1592, %v1600
    %v1603 = vpack.c.bf16 %v1370, %v1370
    %v1604 = vpack.c.bf16 %v1602, %v1601
    %v1606 = vsel %vm378, %v1603, 0
    %v1609 = vsel %vm378, %v1604, 0
    %1611 = vmatprep.subr.bf16.mxu0 0
    %1612 = vmatpush1.bf16.xpose.msra.mxu0 %v1609
    %1613 = vmatprep.subr.bf16.mxu0 0
    %1614 = vmatpush1.bf16.xpose.msra.mxu0 0
    %1615 = vmatprep.subr.bf16.mxu0 0
    %1616 = vmatpush1.bf16.xpose.msra.mxu0 0
    %1617 = vmatprep.subr.bf16.mxu0 0
    %1618 = vmatpush1.bf16.xpose.msra.mxu0 0
    %1619 = vmatprep.subr.bf16.mxu0 0
    %1620 = vmatpush1.bf16.xpose.msra.mxu0 0
    %1621 = vmatprep.subr.bf16.mxu0 0
    %1622 = vmatpush1.bf16.xpose.msra.mxu0 0
    %1623 = vmatprep.subr.bf16.mxu0 0
    %1624 = vmatpush1.bf16.xpose.msra.mxu0 0
    %1625 = vmatprep.subr.bf16.mxu0 0
    %1626 = vmatpush1.bf16.xpose.msra.mxu0 0
    %1627 = vmatprep.subr.bf16.mxu0 0
    %1628 = vmatpush1.bf16.xpose.msra.mxu0 0
    %1629 = vmatprep.subr.bf16.mxu0 0
    %1630 = vmatpush1.bf16.xpose.msra.mxu0 0
    %1631 = vmatprep.subr.bf16.mxu0 0
    %1632 = vmatpush1.bf16.xpose.msra.mxu0 0
    %1633 = vmatprep.subr.bf16.mxu0 0
    %1634 = vmatpush1.bf16.xpose.msra.mxu0 0
    %1635 = vmatprep.subr.bf16.mxu0 0
    %1636 = vmatpush1.bf16.xpose.msra.mxu0 0
    %1637 = vmatprep.subr.bf16.mxu0 0
    %1638 = vmatpush1.bf16.xpose.msra.mxu0 0
    %1639 = vmatprep.subr.bf16.mxu0 0
    %1640 = vmatpush1.bf16.xpose.msra.mxu0 0
    %1641 = vmatprep.subr.bf16.mxu0 0
    %1642 = vmatpush1.bf16.xpose.msra.mxu0 0
    %1643 = vmatprep.mubr.bf16.mxu0 0
    %1644 = vmatmul.mubr.bf16.gmra.mrb[0].mxu0 %v1606
    %v1645 = vpop.f32.mrb[0].mxu0
    %v1646 = vadd.f32 0.0, %v1645
    %v1647 = vpop.f32.mrb[0].mxu0
    %v1648 = vpop.f32.mrb[0].mxu0
    %v1649 = vpop.f32.mrb[0].mxu0
    %1650 = vdwg.mxu0
    %v1651 = vpack.c.bf16 %v1343, %v1343
    %v1652 = vpack.c.bf16 %v1359, %v1359
    %1653 = vxpose.xlu0.c.b16.start [1/8] %v1651, 128
    %1654 = vxpose.xlu0.c.b16.cont [2/8] 0, 128
    %1655 = vxpose.xlu0.c.b16.cont [3/8] 0, 128
    %1656 = vxpose.xlu0.c.b16.cont [4/8] 0, 128
    %1657 = vxpose.xlu0.c.b16.cont [5/8] 0, 128
    %1658 = vxpose.xlu0.c.b16.cont [6/8] 0, 128
    %1659 = vxpose.xlu0.c.b16.cont [7/8] 0, 128
    %1660 = vxpose.xlu0.c.b16.end [8/8] 0, 128
    %v1661 = vpop.trf.xlu0
    %v1662 = vpop.trf.xlu0
    %v1663 = vpop.trf.xlu0
    %v1664 = vpop.trf.xlu0
    %v1665 = vpop.trf.xlu0
    %v1666 = vpop.trf.xlu0
    %v1667 = vpop.trf.xlu0
    %v1668 = vpop.trf.xlu0
    %v1670 = vsel %vm329, %v1661, 0
    %v1673 = vsel %vm333, %v1652, 0
    %1675 = vmatprep.subr.bf16.mxu0 0
    %1676 = vmatpush1.bf16.msra.mxu0 %v1673
    %1677 = vmatprep.subr.bf16.mxu0 0
    %1678 = vmatpush1.bf16.msra.mxu0 0
    %1679 = vmatprep.subr.bf16.mxu0 0
    %1680 = vmatpush1.bf16.msra.mxu0 0
    %1681 = vmatprep.subr.bf16.mxu0 0
    %1682 = vmatpush1.bf16.msra.mxu0 0
    %1683 = vmatprep.subr.bf16.mxu0 0
    %1684 = vmatpush1.bf16.msra.mxu0 0
    %1685 = vmatprep.subr.bf16.mxu0 0
    %1686 = vmatpush1.bf16.msra.mxu0 0
    %1687 = vmatprep.subr.bf16.mxu0 0
    %1688 = vmatpush1.bf16.msra.mxu0 0
    %1689 = vmatprep.subr.bf16.mxu0 0
    %1690 = vmatpush1.bf16.msra.mxu0 0
    %1691 = vmatprep.subr.bf16.mxu0 0
    %1692 = vmatpush1.bf16.msra.mxu0 0
    %1693 = vmatprep.subr.bf16.mxu0 0
    %1694 = vmatpush1.bf16.msra.mxu0 0
    %1695 = vmatprep.subr.bf16.mxu0 0
    %1696 = vmatpush1.bf16.msra.mxu0 0
    %1697 = vmatprep.subr.bf16.mxu0 0
    %1698 = vmatpush1.bf16.msra.mxu0 0
    %1699 = vmatprep.subr.bf16.mxu0 0
    %1700 = vmatpush1.bf16.msra.mxu0 0
    %1701 = vmatprep.subr.bf16.mxu0 0
    %1702 = vmatpush1.bf16.msra.mxu0 0
    %1703 = vmatprep.subr.bf16.mxu0 0
    %1704 = vmatpush1.bf16.msra.mxu0 0
    %1705 = vmatprep.subr.bf16.mxu0 0
    %1706 = vmatpush1.bf16.msra.mxu0 0
    %1707 = vmatprep.mubr.bf16.mxu0 0
    %1708 = vmatmul.mubr.bf16.gmra.mrb[0].mxu0 %v1670
    %v1709 = vpop.f32.mrb[0].mxu0
    %v1710 = vadd.f32 %v32, %v1709
    %v1711 = vpop.f32.mrb[0].mxu0
    %v1712 = vpop.f32.mrb[0].mxu0
    %v1713 = vadd.f32 %v33, %v1712
    %v1714 = vpop.f32.mrb[0].mxu0
    %1715 = vdwg.mxu0
    %v1716 = vsel %vm378, %v1710, -inf
    %1717 = vmax.xlane.f32.xlu0 %v1716
    %v1718 = vpop.xlane.xlu0 %1717
    %v1719 = vsel %vm378, %v1713, -inf
    %1720 = vmax.xlane.f32.xlu0 %v1719
    %v1721 = vpop.xlane.xlu0 %1720
    %v1722 = vsub.f32 %v1710, %v1718
    %v1723 = vsub.f32 %v1713, %v1721
    %v1724 = vmul.f32 %v1722, 1.442695
    %v1725 = vpow.pop %v1724
    %v1726 = vmul.f32 %v1723, 1.442695
    %v1727 = vpow.pop %v1726
    %v1728 = vsel %vm378, %v1725, 0.0
    %1729 = vadd.xlane.f32.xlu0 %v1728
    %v1730 = vpop.xlane.xlu0 %1729
    %v1731 = vsel %vm378, %v1727, 0.0
    %1732 = vadd.xlane.f32.xlu0 %v1731
    %v1733 = vpop.xlane.xlu0 %1732
    %v1734 = vrcp.pop %v1730
    %v1735 = vrcp.pop %v1733
    %v1736 = vmul.f32 %v1725, %v1734
    %v1737 = vmul.f32 %v1727, %v1735
    %v1738 = vpack.c.bf16 %v1375, %v1375
    %v1739 = vpack.c.bf16 %v1737, %v1736
    %v1741 = vsel %vm378, %v1738, 0
    %v1744 = vsel %vm378, %v1739, 0
    %1746 = vmatprep.subr.bf16.mxu0 0
    %1747 = vmatpush1.bf16.xpose.msra.mxu0 %v1744
    %1748 = vmatprep.subr.bf16.mxu0 0
    %1749 = vmatpush1.bf16.xpose.msra.mxu0 0
    %1750 = vmatprep.subr.bf16.mxu0 0
    %1751 = vmatpush1.bf16.xpose.msra.mxu0 0
    %1752 = vmatprep.subr.bf16.mxu0 0
    %1753 = vmatpush1.bf16.xpose.msra.mxu0 0
    %1754 = vmatprep.subr.bf16.mxu0 0
    %1755 = vmatpush1.bf16.xpose.msra.mxu0 0
    %1756 = vmatprep.subr.bf16.mxu0 0
    %1757 = vmatpush1.bf16.xpose.msra.mxu0 0
    %1758 = vmatprep.subr.bf16.mxu0 0
    %1759 = vmatpush1.bf16.xpose.msra.mxu0 0
    %1760 = vmatprep.subr.bf16.mxu0 0
    %1761 = vmatpush1.bf16.xpose.msra.mxu0 0
    %1762 = vmatprep.subr.bf16.mxu0 0
    %1763 = vmatpush1.bf16.xpose.msra.mxu0 0
    %1764 = vmatprep.subr.bf16.mxu0 0
    %1765 = vmatpush1.bf16.xpose.msra.mxu0 0
    %1766 = vmatprep.subr.bf16.mxu0 0
    %1767 = vmatpush1.bf16.xpose.msra.mxu0 0
    %1768 = vmatprep.subr.bf16.mxu0 0
    %1769 = vmatpush1.bf16.xpose.msra.mxu0 0
    %1770 = vmatprep.subr.bf16.mxu0 0
    %1771 = vmatpush1.bf16.xpose.msra.mxu0 0
    %1772 = vmatprep.subr.bf16.mxu0 0
    %1773 = vmatpush1.bf16.xpose.msra.mxu0 0
    %1774 = vmatprep.subr.bf16.mxu0 0
    %1775 = vmatpush1.bf16.xpose.msra.mxu0 0
    %1776 = vmatprep.subr.bf16.mxu0 0
    %1777 = vmatpush1.bf16.xpose.msra.mxu0 0
    %1778 = vmatprep.mubr.bf16.mxu0 0
    %1779 = vmatmul.mubr.bf16.gmra.mrb[0].mxu0 %v1741
    %v1780 = vpop.f32.mrb[0].mxu0
    %v1781 = vadd.f32 0.0, %v1780
    %v1782 = vpop.f32.mrb[0].mxu0
    %v1783 = vpop.f32.mrb[0].mxu0
    %v1784 = vpop.f32.mrb[0].mxu0
    %1785 = vdwg.mxu0
    %v1786 = vpack.c.bf16 %v1346, %v1346
    %v1787 = vpack.c.bf16 %v1362, %v1362
    %1788 = vxpose.xlu0.c.b16.start [1/8] %v1786, 128
    %1789 = vxpose.xlu0.c.b16.cont [2/8] 0, 128
    %1790 = vxpose.xlu0.c.b16.cont [3/8] 0, 128
    %1791 = vxpose.xlu0.c.b16.cont [4/8] 0, 128
    %1792 = vxpose.xlu0.c.b16.cont [5/8] 0, 128
    %1793 = vxpose.xlu0.c.b16.cont [6/8] 0, 128
    %1794 = vxpose.xlu0.c.b16.cont [7/8] 0, 128
    %1795 = vxpose.xlu0.c.b16.end [8/8] 0, 128
    %v1796 = vpop.trf.xlu0
    %v1797 = vpop.trf.xlu0
    %v1798 = vpop.trf.xlu0
    %v1799 = vpop.trf.xlu0
    %v1800 = vpop.trf.xlu0
    %v1801 = vpop.trf.xlu0
    %v1802 = vpop.trf.xlu0
    %v1803 = vpop.trf.xlu0
    %v1805 = vsel %vm329, %v1796, 0
    %v1808 = vsel %vm333, %v1787, 0
    %1810 = vmatprep.subr.bf16.mxu0 0
    %1811 = vmatpush1.bf16.msra.mxu0 %v1808
    %1812 = vmatprep.subr.bf16.mxu0 0
    %1813 = vmatpush1.bf16.msra.mxu0 0
    %1814 = vmatprep.subr.bf16.mxu0 0
    %1815 = vmatpush1.bf16.msra.mxu0 0
    %1816 = vmatprep.subr.bf16.mxu0 0
    %1817 = vmatpush1.bf16.msra.mxu0 0
    %1818 = vmatprep.subr.bf16.mxu0 0
    %1819 = vmatpush1.bf16.msra.mxu0 0
    %1820 = vmatprep.subr.bf16.mxu0 0
    %1821 = vmatpush1.bf16.msra.mxu0 0
    %1822 = vmatprep.subr.bf16.mxu0 0
    %1823 = vmatpush1.bf16.msra.mxu0 0
    %1824 = vmatprep.subr.bf16.mxu0 0
    %1825 = vmatpush1.bf16.msra.mxu0 0
    %1826 = vmatprep.subr.bf16.mxu0 0
    %1827 = vmatpush1.bf16.msra.mxu0 0
    %1828 = vmatprep.subr.bf16.mxu0 0
    %1829 = vmatpush1.bf16.msra.mxu0 0
    %1830 = vmatprep.subr.bf16.mxu0 0
    %1831 = vmatpush1.bf16.msra.mxu0 0
    %1832 = vmatprep.subr.bf16.mxu0 0
    %1833 = vmatpush1.bf16.msra.mxu0 0
    %1834 = vmatprep.subr.bf16.mxu0 0
    %1835 = vmatpush1.bf16.msra.mxu0 0
    %1836 = vmatprep.subr.bf16.mxu0 0
    %1837 = vmatpush1.bf16.msra.mxu0 0
    %1838 = vmatprep.subr.bf16.mxu0 0
    %1839 = vmatpush1.bf16.msra.mxu0 0
    %1840 = vmatprep.subr.bf16.mxu0 0
    %1841 = vmatpush1.bf16.msra.mxu0 0
    %1842 = vmatprep.mubr.bf16.mxu0 0
    %1843 = vmatmul.mubr.bf16.gmra.mrb[0].mxu0 %v1805
    %v1844 = vpop.f32.mrb[0].mxu0
    %v1845 = vadd.f32 %v32, %v1844
    %v1846 = vpop.f32.mrb[0].mxu0
    %v1847 = vpop.f32.mrb[0].mxu0
    %v1848 = vadd.f32 %v33, %v1847
    %v1849 = vpop.f32.mrb[0].mxu0
    %1850 = vdwg.mxu0
    %v1851 = vsel %vm378, %v1845, -inf
    %1852 = vmax.xlane.f32.xlu0 %v1851
    %v1853 = vpop.xlane.xlu0 %1852
    %v1854 = vsel %vm378, %v1848, -inf
    %1855 = vmax.xlane.f32.xlu0 %v1854
    %v1856 = vpop.xlane.xlu0 %1855
    %v1857 = vsub.f32 %v1845, %v1853
    %v1858 = vsub.f32 %v1848, %v1856
    %v1859 = vmul.f32 %v1857, 1.442695
    %v1860 = vpow.pop %v1859
    %v1861 = vmul.f32 %v1858, 1.442695
    %v1862 = vpow.pop %v1861
    %v1863 = vsel %vm378, %v1860, 0.0
    %1864 = vadd.xlane.f32.xlu0 %v1863
    %v1865 = vpop.xlane.xlu0 %1864
    %v1866 = vsel %vm378, %v1862, 0.0
    %1867 = vadd.xlane.f32.xlu0 %v1866
    %v1868 = vpop.xlane.xlu0 %1867
    %v1869 = vrcp.pop %v1865
    %v1870 = vrcp.pop %v1868
    %v1871 = vmul.f32 %v1860, %v1869
    %v1872 = vmul.f32 %v1862, %v1870
    %v1873 = vpack.c.bf16 %v1378, %v1378
    %v1874 = vpack.c.bf16 %v1872, %v1871
    %v1876 = vsel %vm378, %v1873, 0
    %v1879 = vsel %vm378, %v1874, 0
    %1881 = vmatprep.subr.bf16.mxu0 0
    %1882 = vmatpush1.bf16.xpose.msra.mxu0 %v1879
    %1883 = vmatprep.subr.bf16.mxu0 0
    %1884 = vmatpush1.bf16.xpose.msra.mxu0 0
    %1885 = vmatprep.subr.bf16.mxu0 0
    %1886 = vmatpush1.bf16.xpose.msra.mxu0 0
    %1887 = vmatprep.subr.bf16.mxu0 0
    %1888 = vmatpush1.bf16.xpose.msra.mxu0 0
    %1889 = vmatprep.subr.bf16.mxu0 0
    %1890 = vmatpush1.bf16.xpose.msra.mxu0 0
    %1891 = vmatprep.subr.bf16.mxu0 0
    %1892 = vmatpush1.bf16.xpose.msra.mxu0 0
    %1893 = vmatprep.subr.bf16.mxu0 0
    %1894 = vmatpush1.bf16.xpose.msra.mxu0 0
    %1895 = vmatprep.subr.bf16.mxu0 0
    %1896 = vmatpush1.bf16.xpose.msra.mxu0 0
    %1897 = vmatprep.subr.bf16.mxu0 0
    %1898 = vmatpush1.bf16.xpose.msra.mxu0 0
    %1899 = vmatprep.subr.bf16.mxu0 0
    %1900 = vmatpush1.bf16.xpose.msra.mxu0 0
    %1901 = vmatprep.subr.bf16.mxu0 0
    %1902 = vmatpush1.bf16.xpose.msra.mxu0 0
    %1903 = vmatprep.subr.bf16.mxu0 0
    %1904 = vmatpush1.bf16.xpose.msra.mxu0 0
    %1905 = vmatprep.subr.bf16.mxu0 0
    %1906 = vmatpush1.bf16.xpose.msra.mxu0 0
    %1907 = vmatprep.subr.bf16.mxu0 0
    %1908 = vmatpush1.bf16.xpose.msra.mxu0 0
    %1909 = vmatprep.subr.bf16.mxu0 0
    %1910 = vmatpush1.bf16.xpose.msra.mxu0 0
    %1911 = vmatprep.subr.bf16.mxu0 0
    %1912 = vmatpush1.bf16.xpose.msra.mxu0 0
    %1913 = vmatprep.mubr.bf16.mxu0 0
    %1914 = vmatmul.mubr.bf16.gmra.mrb[0].mxu0 %v1876
    %v1915 = vpop.f32.mrb[0].mxu0
    %v1916 = vadd.f32 0.0, %v1915
    %v1917 = vpop.f32.mrb[0].mxu0
    %v1918 = vpop.f32.mrb[0].mxu0
    %v1919 = vpop.f32.mrb[0].mxu0
    %1920 = vdwg.mxu0
    %v1921 = vpack.c.bf16 %v1646, %v1511
    %v1922 = vpack.c.bf16 %v1916, %v1781
    %v1923 = vld [vmem:[#allocation2 + $0xd] sm:$0x1]
    %v1924 = vlaneseq
    %v1925 = vshrl.u32 %v1924, 7
    %v1926 = vsub.s32 0, %v1925
    %v1927 = vrot.slane %v1923, %v1926
    %1928 = vxpose.xlu0.c.b16.start [1/8] %v1921, 128
    %1929 = vxpose.xlu0.c.b16.cont [2/8] %v1922, 128
    %1930 = vxpose.xlu0.c.b16.cont [3/8] 0, 128
    %1931 = vxpose.xlu0.c.b16.cont [4/8] 0, 128
    %1932 = vxpose.xlu0.c.b16.cont [5/8] 0, 128
    %1933 = vxpose.xlu0.c.b16.cont [6/8] 0, 128
    %1934 = vxpose.xlu0.c.b16.cont [7/8] 0, 128
    %1935 = vxpose.xlu0.c.b16.end [8/8] 0, 128
    %v1936 = vpop.trf.xlu0
    %v1937 = vpop.trf.xlu0
    %v1938 = vpop.trf.xlu0
    %v1939 = vpop.trf.xlu0
    %v1940 = vpop.trf.xlu0
    %v1941 = vpop.trf.xlu0
    %v1942 = vpop.trf.xlu0
    %v1943 = vpop.trf.xlu0
    %v1948 = vunpack.c.l.b16 %v1184
    %v1949 = vunpack.c.l.b16 %v1185
    %v1950 = vunpack.c.l.b16 %v1186
    %v1951 = vunpack.c.l.b16 %v1187
    %v1952 = vpack.c.b16 %v1949, %v1948
    %v1953 = vpack.c.b16 %v1951, %v1950
    %v1957 = vsel %vm38, %v1936, 0
    %1959 = vmatprep.subr.bf16.mxu0 0
    %1960 = vmatpush1.bf16.msra.mxu0 %v1952
    %1961 = vmatprep.subr.bf16.mxu0 0
    %1962 = vmatpush1.bf16.msra.mxu0 %v1953
    %1963 = vmatprep.subr.bf16.mxu0 0
    %1964 = vmatpush1.bf16.msra.mxu0 0
    %1965 = vmatprep.subr.bf16.mxu0 0
    %1966 = vmatpush1.bf16.msra.mxu0 0
    %1967 = vmatprep.subr.bf16.mxu0 0
    %1968 = vmatpush1.bf16.msra.mxu0 0
    %1969 = vmatprep.subr.bf16.mxu0 0
    %1970 = vmatpush1.bf16.msra.mxu0 0
    %1971 = vmatprep.subr.bf16.mxu0 0
    %1972 = vmatpush1.bf16.msra.mxu0 0
    %1973 = vmatprep.subr.bf16.mxu0 0
    %1974 = vmatpush1.bf16.msra.mxu0 0
    %1975 = vmatprep.subr.bf16.mxu0 0
    %1976 = vmatpush1.bf16.msra.mxu0 0
    %1977 = vmatprep.subr.bf16.mxu0 0
    %1978 = vmatpush1.bf16.msra.mxu0 0
    %1979 = vmatprep.subr.bf16.mxu0 0
    %1980 = vmatpush1.bf16.msra.mxu0 0
    %1981 = vmatprep.subr.bf16.mxu0 0
    %1982 = vmatpush1.bf16.msra.mxu0 0
    %1983 = vmatprep.subr.bf16.mxu0 0
    %1984 = vmatpush1.bf16.msra.mxu0 0
    %1985 = vmatprep.subr.bf16.mxu0 0
    %1986 = vmatpush1.bf16.msra.mxu0 0
    %1987 = vmatprep.subr.bf16.mxu0 0
    %1988 = vmatpush1.bf16.msra.mxu0 0
    %1989 = vmatprep.subr.bf16.mxu0 0
    %1990 = vmatpush1.bf16.msra.mxu0 0
    %1991 = vmatprep.mubr.bf16.mxu0 0
    %1992 = vmatmul.mubr.bf16.gmra.mrb[0].mxu0 %v1957
    %v1993 = vpop.f32.mrb[0].mxu0
    %v1994 = vadd.f32 %v1927, %v1993
    %v1995 = vpop.f32.mrb[0].mxu0
    %v1996 = vpop.f32.mrb[0].mxu0
    %v1997 = vadd.f32 %v1927, %v1996
    %v1998 = vpop.f32.mrb[0].mxu0
    %1999 = vdwg.mxu0
    %v2000 = vadd.f32 %v1994, %v1170
    %v2001 = vadd.f32 %v1997, %v1171
    %v2002 = vld [vmem:[#allocation2 + $0x9] sm:$0x1]
    %v2003 = vld [vmem:[#allocation2 + $0xa] sm:$0x1]
    %v2004 = vsel %vm38, %v2000, 0.0
    %2005 = vadd.xlane.f32.xlu0 %v2004
    %v2006 = vpop.xlane.xlu0 %2005
    %v2007 = vsel %vm38, %v2001, 0.0
    %2008 = vadd.xlane.f32.xlu0 %v2007
    %v2009 = vpop.xlane.xlu0 %2008
    %v2010 = vmul.f32 %v2006, %v45
    %v2011 = vmul.f32 %v2009, %v45
    %v2012 = vsub.f32 %v2000, %v2010
    %v2013 = vsub.f32 %v2001, %v2011
    %v2014 = vmul.f32 %v2012, %v2012
    %v2015 = vmul.f32 %v2013, %v2013
    %v2016 = vsel %vm38, %v2014, 0.0
    %2017 = vadd.xlane.f32.xlu0 %v2016
    %v2018 = vpop.xlane.xlu0 %2017
    %v2019 = vsel %vm38, %v2015, 0.0
    %2020 = vadd.xlane.f32.xlu0 %v2019
    %v2021 = vpop.xlane.xlu0 %2020
    %v2022 = vmul.f32 %v2018, %v45
    %v2023 = vmul.f32 %v2021, %v45
    %v2024 = vadd.f32 %v2022, 1e-12
    %v2025 = vadd.f32 %v2023, 1e-12
    %v2026 = vrsqrt.pop %v2024
    %v2027 = vrsqrt.pop %v2025
    %v2028 = vmul.f32 %v2012, %v2026
    %v2029 = vmul.f32 %v2013, %v2027
    %v2030 = vlaneseq
    %v2031 = vshrl.u32 %v2030, 7
    %v2032 = vsub.s32 0, %v2031
    %v2033 = vrot.slane %v2002, %v2032
    %v2034 = vmul.f32 %v2028, %v2033
    %v2035 = vmul.f32 %v2029, %v2033
    %v2036 = vlaneseq
    %v2037 = vshrl.u32 %v2036, 7
    %v2038 = vsub.s32 0, %v2037
    %v2039 = vrot.slane %v2003, %v2038
    %v2040 = vadd.f32 %v2034, %v2039
    %v2041 = vadd.f32 %v2035, %v2039
    %v2042 = vpack.c.bf16 %v2041, %v2040
    %v2043 = vld [vmem:[#allocation2 + $0xe] sm:$0x1]
    %v2044 = vlaneseq
    %v2045 = vshrl.u32 %v2044, 7
    %v2046 = vsub.s32 0, %v2045
    %v2047 = vrot.slane %v2043, %v2046
    %v2052 = vunpack.c.l.b16 %v1188
    %v2053 = vunpack.c.l.b16 %v1189
    %v2054 = vunpack.c.l.b16 %v1190
    %v2055 = vunpack.c.l.b16 %v1191
    %v2056 = vpack.c.b16 %v2053, %v2052
    %v2057 = vpack.c.b16 %v2055, %v2054
    %v2061 = vsel %vm38, %v2042, 0
    %2063 = vmatprep.subr.bf16.mxu0 0
    %2064 = vmatpush1.bf16.msra.mxu0 %v2056
    %2065 = vmatprep.subr.bf16.mxu0 0
    %2066 = vmatpush1.bf16.msra.mxu0 %v2057
    %2067 = vmatprep.subr.bf16.mxu0 0
    %2068 = vmatpush1.bf16.msra.mxu0 0
    %2069 = vmatprep.subr.bf16.mxu0 0
    %2070 = vmatpush1.bf16.msra.mxu0 0
    %2071 = vmatprep.subr.bf16.mxu0 0
    %2072 = vmatpush1.bf16.msra.mxu0 0
    %2073 = vmatprep.subr.bf16.mxu0 0
    %2074 = vmatpush1.bf16.msra.mxu0 0
    %2075 = vmatprep.subr.bf16.mxu0 0
    %2076 = vmatpush1.bf16.msra.mxu0 0
    %2077 = vmatprep.subr.bf16.mxu0 0
    %2078 = vmatpush1.bf16.msra.mxu0 0
    %2079 = vmatprep.subr.bf16.mxu0 0
    %2080 = vmatpush1.bf16.msra.mxu0 0
    %2081 = vmatprep.subr.bf16.mxu0 0
    %2082 = vmatpush1.bf16.msra.mxu0 0
    %2083 = vmatprep.subr.bf16.mxu0 0
    %2084 = vmatpush1.bf16.msra.mxu0 0
    %2085 = vmatprep.subr.bf16.mxu0 0
    %2086 = vmatpush1.bf16.msra.mxu0 0
    %2087 = vmatprep.subr.bf16.mxu0 0
    %2088 = vmatpush1.bf16.msra.mxu0 0
    %2089 = vmatprep.subr.bf16.mxu0 0
    %2090 = vmatpush1.bf16.msra.mxu0 0
    %2091 = vmatprep.subr.bf16.mxu0 0
    %2092 = vmatpush1.bf16.msra.mxu0 0
    %2093 = vmatprep.subr.bf16.mxu0 0
    %2094 = vmatpush1.bf16.msra.mxu0 0
    %2095 = vmatprep.mubr.bf16.mxu0 0
    %2096 = vmatmul.mubr.bf16.gmra.mrb[0].mxu0 %v2061
    %v2097 = vpop.f32.mrb[0].mxu0
    %v2098 = vadd.f32 %v2047, %v2097
    %v2099 = vpop.f32.mrb[0].mxu0
    %v2100 = vpop.f32.mrb[0].mxu0
    %v2101 = vadd.f32 %v2047, %v2100
    %v2102 = vpop.f32.mrb[0].mxu0
    %2103 = vdwg.mxu0
    %v2104 = vmul.f32 %v2098, 0.5
    %v2105 = vmul.f32 %v2101, 0.5
    %v2106 = vmul.f32 %v2098, 0.044715
    %v2107 = vmul.f32 %v2101, 0.044715
    %v2108 = vmul.f32 %v2106, %v2098
    %v2109 = vmul.f32 %v2107, %v2101
    %v2110 = vmul.f32 %v2108, %v2098
    %v2111 = vmul.f32 %v2109, %v2101
    %v2112 = vadd.f32 %v2098, %v2110
    %v2113 = vadd.f32 %v2101, %v2111
    %v2114 = vmul.f32 %v2112, 0.7978846
    %v2115 = vmul.f32 %v2113, 0.7978846
    %v2116 = vtanh.pop %v2114
    %v2117 = vtanh.pop %v2115
    %v2118 = vadd.f32 %v2116, 1.0
    %v2119 = vadd.f32 %v2117, 1.0
    %v2120 = vmul.f32 %v2104, %v2118
    %v2121 = vmul.f32 %v2105, %v2119
    %v2122 = vpack.c.bf16 %v2121, %v2120
    %v2123 = vld [vmem:[#allocation2 + $0xf] sm:$0x1]
    %v2124 = vlaneseq
    %v2125 = vshrl.u32 %v2124, 7
    %v2126 = vsub.s32 0, %v2125
    %v2127 = vrot.slane %v2123, %v2126
    %v2136 = vunpack.c.l.b16 %v1192
    %v2137 = vunpack.c.l.b16 %v1193
    %v2138 = vunpack.c.l.b16 %v1194
    %v2139 = vunpack.c.l.b16 %v1195
    %v2140 = vunpack.c.l.b16 %v1196
    %v2141 = vunpack.c.l.b16 %v1197
    %v2142 = vunpack.c.l.b16 %v1198
    %v2143 = vunpack.c.l.b16 %v1199
    %v2144 = vpack.c.b16 %v2137, %v2136
    %v2145 = vpack.c.b16 %v2139, %v2138
    %v2146 = vpack.c.b16 %v2141, %v2140
    %v2147 = vpack.c.b16 %v2143, %v2142
    %v2153 = vsel %vm1085, %v2122, 0
    %2155 = vmatprep.subr.bf16.mxu0 0
    %2156 = vmatpush1.bf16.msra.mxu0 %v2144
    %2157 = vmatprep.subr.bf16.mxu0 0
    %2158 = vmatpush1.bf16.msra.mxu0 %v2145
    %2159 = vmatprep.subr.bf16.mxu0 0
    %2160 = vmatpush1.bf16.msra.mxu0 %v2146
    %2161 = vmatprep.subr.bf16.mxu0 0
    %2162 = vmatpush1.bf16.msra.mxu0 %v2147
    %2163 = vmatprep.subr.bf16.mxu0 0
    %2164 = vmatpush1.bf16.msra.mxu0 0
    %2165 = vmatprep.subr.bf16.mxu0 0
    %2166 = vmatpush1.bf16.msra.mxu0 0
    %2167 = vmatprep.subr.bf16.mxu0 0
    %2168 = vmatpush1.bf16.msra.mxu0 0
    %2169 = vmatprep.subr.bf16.mxu0 0
    %2170 = vmatpush1.bf16.msra.mxu0 0
    %2171 = vmatprep.subr.bf16.mxu0 0
    %2172 = vmatpush1.bf16.msra.mxu0 0
    %2173 = vmatprep.subr.bf16.mxu0 0
    %2174 = vmatpush1.bf16.msra.mxu0 0
    %2175 = vmatprep.subr.bf16.mxu0 0
    %2176 = vmatpush1.bf16.msra.mxu0 0
    %2177 = vmatprep.subr.bf16.mxu0 0
    %2178 = vmatpush1.bf16.msra.mxu0 0
    %2179 = vmatprep.subr.bf16.mxu0 0
    %2180 = vmatpush1.bf16.msra.mxu0 0
    %2181 = vmatprep.subr.bf16.mxu0 0
    %2182 = vmatpush1.bf16.msra.mxu0 0
    %2183 = vmatprep.subr.bf16.mxu0 0
    %2184 = vmatpush1.bf16.msra.mxu0 0
    %2185 = vmatprep.subr.bf16.mxu0 0
    %2186 = vmatpush1.bf16.msra.mxu0 0
    %2187 = vmatprep.mubr.bf16.mxu0 0
    %2188 = vmatmul.mubr.bf16.gmra.mrb[0].mxu0 %v2153
    %v2189 = vpop.f32.mrb[0].mxu0
    %v2190 = vadd.f32 %v2127, %v2189
    %v2191 = vpop.f32.mrb[0].mxu0
    %v2192 = vpop.f32.mrb[0].mxu0
    %v2193 = vadd.f32 %v2127, %v2192
    %v2194 = vpop.f32.mrb[0].mxu0
    %2195 = vdwg.mxu0
    %v2196 = vadd.f32 %v2190, %v2040
    %v2197 = vadd.f32 %v2193, %v2041
    %v2198 = vld [vmem:[#allocation2 + $0xb] sm:$0x1]
    %v2199 = vld [vmem:[#allocation2 + $0xc] sm:$0x1]
    %v2200 = vsel %vm38, %v2196, 0.0
    %2201 = vadd.xlane.f32.xlu0 %v2200
    %v2202 = vpop.xlane.xlu0 %2201
    %v2203 = vsel %vm38, %v2197, 0.0
    %2204 = vadd.xlane.f32.xlu0 %v2203
    %v2205 = vpop.xlane.xlu0 %2204
    %v2206 = vmul.f32 %v2202, %v45
    %v2207 = vmul.f32 %v2205, %v45
    %v2208 = vsub.f32 %v2196, %v2206
    %v2209 = vsub.f32 %v2197, %v2207
    %v2210 = vmul.f32 %v2208, %v2208
    %v2211 = vmul.f32 %v2209, %v2209
    %v2212 = vsel %vm38, %v2210, 0.0
    %2213 = vadd.xlane.f32.xlu0 %v2212
    %v2214 = vpop.xlane.xlu0 %2213
    %v2215 = vsel %vm38, %v2211, 0.0
    %2216 = vadd.xlane.f32.xlu0 %v2215
    %v2217 = vpop.xlane.xlu0 %2216
    %v2218 = vmul.f32 %v2214, %v45
    %v2219 = vmul.f32 %v2217, %v45
    %v2220 = vadd.f32 %v2218, 1e-12
    %v2221 = vadd.f32 %v2219, 1e-12
    %v2222 = vrsqrt.pop %v2220
    %v2223 = vrsqrt.pop %v2221
    %v2224 = vmul.f32 %v2208, %v2222
    %v2225 = vmul.f32 %v2209, %v2223
    %v2226 = vlaneseq
    %v2227 = vshrl.u32 %v2226, 7
    %v2228 = vsub.s32 0, %v2227
    %v2229 = vrot.slane %v2198, %v2228
    %v2230 = vmul.f32 %v2224, %v2229
    %v2231 = vmul.f32 %v2225, %v2229
    %v2232 = vlaneseq
    %v2233 = vshrl.u32 %v2232, 7
    %v2234 = vsub.s32 0, %v2233
    %v2235 = vrot.slane %v2199, %v2234
    %v2236 = vadd.f32 %v2230, %v2235
    %v2237 = vadd.f32 %v2231, %v2235
    %v2238 = vld [vmem:[%s2 + $0xe0] sm:$0xf]
    %v2239 = vld [vmem:[%s2 + $0xe4] sm:$0xf]
    %v2240 = vld [vmem:[%s2 + $0xe8] sm:$0xf]
    %v2241 = vld [vmem:[%s2 + $0xec] sm:$0xf]
    %v2242 = vld [vmem:[%s2 + $0xf0] sm:$0xf]
    %v2243 = vld [vmem:[%s2 + $0xf4] sm:$0xf]
    %v2244 = vld [vmem:[%s2 + $0xf8] sm:$0xf]
    %v2245 = vld [vmem:[%s2 + $0xfc] sm:$0xf]
    %v2246 = vpack.c.bf16 %v2237, %v2236
    %v2247 = vld [vmem:[#allocation2 + $0x10] sm:$0x1]
    %v2248 = vlaneseq
    %v2249 = vshrl.u32 %v2248, 7
    %v2250 = vsub.s32 0, %v2249
    %v2251 = vrot.slane %v2247, %v2250
    %v2256 = vunpack.c.l.b16 %v2238
    %v2257 = vunpack.c.l.b16 %v2239
    %v2258 = vunpack.c.l.b16 %v2240
    %v2259 = vunpack.c.l.b16 %v2241
    %v2260 = vpack.c.b16 %v2257, %v2256
    %v2261 = vpack.c.b16 %v2259, %v2258
    %v2265 = vsel %vm38, %v2246, 0
    %2267 = vmatprep.subr.bf16.mxu0 0
    %2268 = vmatpush1.bf16.msra.mxu0 %v2260
    %2269 = vmatprep.subr.bf16.mxu0 0
    %2270 = vmatpush1.bf16.msra.mxu0 %v2261
    %2271 = vmatprep.subr.bf16.mxu0 0
    %2272 = vmatpush1.bf16.msra.mxu0 0
    %2273 = vmatprep.subr.bf16.mxu0 0
    %2274 = vmatpush1.bf16.msra.mxu0 0
    %2275 = vmatprep.subr.bf16.mxu0 0
    %2276 = vmatpush1.bf16.msra.mxu0 0
    %2277 = vmatprep.subr.bf16.mxu0 0
    %2278 = vmatpush1.bf16.msra.mxu0 0
    %2279 = vmatprep.subr.bf16.mxu0 0
    %2280 = vmatpush1.bf16.msra.mxu0 0
    %2281 = vmatprep.subr.bf16.mxu0 0
    %2282 = vmatpush1.bf16.msra.mxu0 0
    %2283 = vmatprep.subr.bf16.mxu0 0
    %2284 = vmatpush1.bf16.msra.mxu0 0
    %2285 = vmatprep.subr.bf16.mxu0 0
    %2286 = vmatpush1.bf16.msra.mxu0 0
    %2287 = vmatprep.subr.bf16.mxu0 0
    %2288 = vmatpush1.bf16.msra.mxu0 0
    %2289 = vmatprep.subr.bf16.mxu0 0
    %2290 = vmatpush1.bf16.msra.mxu0 0
    %2291 = vmatprep.subr.bf16.mxu0 0
    %2292 = vmatpush1.bf16.msra.mxu0 0
    %2293 = vmatprep.subr.bf16.mxu0 0
    %2294 = vmatpush1.bf16.msra.mxu0 0
    %2295 = vmatprep.subr.bf16.mxu0 0
    %2296 = vmatpush1.bf16.msra.mxu0 0
    %2297 = vmatprep.subr.bf16.mxu0 0
    %2298 = vmatpush1.bf16.msra.mxu0 0
    %2299 = vmatprep.mubr.bf16.mxu0 0
    %2300 = vmatmul.mubr.bf16.gmra.mrb[0].mxu0 %v2265
    %v2301 = vpop.f32.mrb[0].mxu0
    %v2302 = vadd.f32 %v2251, %v2301
    %v2303 = vpop.f32.mrb[0].mxu0
    %v2304 = vpop.f32.mrb[0].mxu0
    %v2305 = vadd.f32 %v2251, %v2304
    %v2306 = vpop.f32.mrb[0].mxu0
    %2307 = vdwg.mxu0
    %v2308 = vtanh.pop %v2302
    %v2309 = vtanh.pop %v2305
    %v2310 = vpack.c.bf16 %v2309, %v2308
    %v2311 = vld [vmem:[#allocation2 + $0x11] sm:$0x1]
    %v2312 = vlaneseq
    %v2313 = vshrl.u32 %v2312, 7
    %v2314 = vsub.s32 0, %v2313
    %v2315 = vrot.slane %v2311, %v2314
    %v2320 = vunpack.c.l.b16 %v2242
    %v2321 = vunpack.c.l.b16 %v2243
    %v2322 = vunpack.c.l.b16 %v2244
    %v2323 = vunpack.c.l.b16 %v2245
    %v2324 = vpack.c.b16 %v2321, %v2320
    %v2325 = vpack.c.b16 %v2323, %v2322
    %v2329 = vsel %vm38, %v2310, 0
    %2331 = vmatprep.subr.bf16.mxu0 0
    %2332 = vmatpush1.bf16.msra.mxu0 %v2324
    %2333 = vmatprep.subr.bf16.mxu0 0
    %2334 = vmatpush1.bf16.msra.mxu0 %v2325
    %2335 = vmatprep.subr.bf16.mxu0 0
    %2336 = vmatpush1.bf16.msra.mxu0 0
    %2337 = vmatprep.subr.bf16.mxu0 0
    %2338 = vmatpush1.bf16.msra.mxu0 0
    %2339 = vmatprep.subr.bf16.mxu0 0
    %2340 = vmatpush1.bf16.msra.mxu0 0
    %2341 = vmatprep.subr.bf16.mxu0 0
    %2342 = vmatpush1.bf16.msra.mxu0 0
    %2343 = vmatprep.subr.bf16.mxu0 0
    %2344 = vmatpush1.bf16.msra.mxu0 0
    %2345 = vmatprep.subr.bf16.mxu0 0
    %2346 = vmatpush1.bf16.msra.mxu0 0
    %2347 = vmatprep.subr.bf16.mxu0 0
    %2348 = vmatpush1.bf16.msra.mxu0 0
    %2349 = vmatprep.subr.bf16.mxu0 0
    %2350 = vmatpush1.bf16.msra.mxu0 0
    %2351 = vmatprep.subr.bf16.mxu0 0
    %2352 = vmatpush1.bf16.msra.mxu0 0
    %2353 = vmatprep.subr.bf16.mxu0 0
    %2354 = vmatpush1.bf16.msra.mxu0 0
    %2355 = vmatprep.subr.bf16.mxu0 0
    %2356 = vmatpush1.bf16.msra.mxu0 0
    %2357 = vmatprep.subr.bf16.mxu0 0
    %2358 = vmatpush1.bf16.msra.mxu0 0
    %2359 = vmatprep.subr.bf16.mxu0 0
    %2360 = vmatpush1.bf16.msra.mxu0 0
    %2361 = vmatprep.subr.bf16.mxu0 0
    %2362 = vmatpush1.bf16.msra.mxu0 0
    %2363 = vmatprep.mubr.bf16.mxu0 0
    %2364 = vmatmul.mubr.bf16.gmra.mrb[0].mxu0 %v2329
    %v2365 = vpop.f32.mrb[0].mxu0
    %v2366 = vadd.f32 %v2315, %v2365
    %v2367 = vpop.f32.mrb[0].mxu0
    %v2368 = vpop.f32.mrb[0].mxu0
    %v2369 = vadd.f32 %v2315, %v2368
    %v2370 = vpop.f32.mrb[0].mxu0
    %2371 = vdwg.mxu0
    %2372 = vst [vmem:[%s4] sm:$0xff] %v2366
    %2373 = vst [vmem:[%s4 + $0x8] sm:$0xff] %v2369
    // Predicated region
    $region22: #{forward.1} parent=1 // pred_check
      _
    $region23: #{forward.1} parent=1 // pred_check_branch
      %2375 = sbr.rel (0) target = $region25
    $region24: #{forward.1} parent=1 // pred_region
      _
    $region25: #{forward.1} parent=1 // pred_fallthru
      _
    // Predicated region
    $region26: #{forward.1} parent=1 // pred_check
      _
    $region27: #{forward.1} parent=1 // pred_check_branch
      %2377 = sbr.rel (0) target = $region29
    $region28: #{forward.1} parent=1 // pred_region
      _
    $region29: #{forward.1} parent=1 // pred_fallthru
      _
    %2378 = vsyncpa [#allocation3], 1

</llo_original>
